<compile_context>
chip_gen: v5e
topology: v5e:2x2
jax: 0.10.0
libtpu: 0.0.40
codegen_flags: <defaults>
</compile_context>

<pallas_src>
import functools

import jax
import jax.numpy as jnp
from jax.experimental import pallas as pl
from jax.experimental.pallas import tpu as pltpu

LANE = 128       # feature dims padded to multiples of this
NODE_PAD = 128   # node dim padded to multiples of this (use 256 for v6e/v7x prod)


def _round_up(v, m):
    return ((v + m - 1) // m) * m


def _pad2d(a, rows, cols):
    return jnp.pad(a, ((0, rows - a.shape[0]), (0, cols - a.shape[1])))


def _pack_gconv(p, kin_p, kout_p):
    """Lane-pad W / W_loop / b; concat W|W_loop on the out dim; weights -> bf16."""
    w = _pad2d(p["w"], kin_p, kout_p)
    wl = _pad2d(p["w_loop"], kin_p, kout_p)
    wc = jnp.concatenate([w, wl], axis=1).astype(jnp.bfloat16)   # (kin_p, 2*kout_p)
    b = jnp.pad(p["b"], (0, kout_p - p["b"].shape[0])).reshape(1, kout_p)
    return wc, b.astype(jnp.float32)


# ---------------- fused kernel ----------------

def _make_gbottleneck_kernel(block_num, hid_p, out_p, apply_relu):
    def kernel(x_ref, adj_ref, w1_ref, b1_ref, bw_ref, bb_ref,
               w2_ref, b2_ref, out_ref, hid_ref):
        adj = adj_ref[...]                       # (N_p, N_p) bf16, VMEM-resident

        def gconv(h, wc, b, fo, relu):
            # one bf16 MXU matmul gives both h@W (cols :fo) and h@W_loop (cols fo:)
            s = jnp.dot(h.astype(jnp.bfloat16), wc,
                        preferred_element_type=jnp.float32)
            out = jnp.dot(adj, s[:, :fo].astype(jnp.bfloat16),   # adj @ (h W)
                          preferred_element_type=jnp.float32)
            out = out + s[:, fo:] + b            # + h W_loop + bias (f32 epilogue)
            return jnp.maximum(out, 0.0) if relu else out

        # conv1 (+ optional ReLU)
        h = gconv(x_ref[0], w1_ref[...], b1_ref[...], hid_p, apply_relu)

        # GResBlocks — fully unrolled (block_num is static); weights stay in VMEM.
        for i in range(block_num):
            t = gconv(h, bw_ref[2 * i], bb_ref[2 * i], hid_p, apply_relu)
            t = gconv(t, bw_ref[2 * i + 1], bb_ref[2 * i + 1], hid_p, apply_relu)
            h = (h + t) * 0.5                    # residual epilogue (f32)

        # lane-dense stores, single narrowing cast each
        hid_ref[0] = h.astype(hid_ref.dtype)
        out_ref[0] = gconv(h, w2_ref[...], b2_ref[...], out_p,
                           False).astype(out_ref.dtype)

    return kernel


def gbottleneck_forward(params, inputs, adj, activation=True,
                        single_buffer_invariants=True):
    """Fused GBottleneck forward. inputs: (B, N, in_dim) -> (x_out, x_hidden)."""
    B, N, in_dim = inputs.shape
    hidden_dim = params["conv1"]["w"].shape[1]
    out_dim = params["conv2"]["w"].shape[1]
    block_num = len(params["blocks"])

    N_p = _round_up(N, NODE_PAD)
    fin_p = _round_up(in_dim, LANE)
    hid_p = _round_up(hidden_dim, LANE)
    out_p = _round_up(out_dim, LANE)

    # Zero-pad nodes + features.  Padded adj rows/cols are zero, so padded
    # node rows never leak into real rows; padding is sliced off below.
    x_p = jnp.pad(inputs, ((0, 0), (0, N_p - N), (0, fin_p - in_dim)))
    adj_b = jnp.pad(adj.astype(jnp.float32),
                    ((0, N_p - N), (0, N_p - N))).astype(jnp.bfloat16)

    # Pack parameters (in production this packing would be done once, offline).
    wc1, b1 = _pack_gconv(params["conv1"], fin_p, hid_p)
    wc2, b2 = _pack_gconv(params["conv2"], hid_p, out_p)
    if block_num > 0:
        bw_l, bb_l = [], []
        for bp in params["blocks"]:
            for name in ("conv1", "conv2"):
                wc, b = _pack_gconv(bp[name], hid_p, hid_p)
                bw_l.append(wc)
                bb_l.append(b)
        bw = jnp.stack(bw_l)                     # (2*blocks, hid_p, 2*hid_p) bf16
        bb = jnp.stack(bb_l)                     # (2*blocks, 1, hid_p) f32
    else:  # dummy operands so the kernel signature stays fixed (never read)
        bw = jnp.zeros((1, hid_p, 2 * hid_p), jnp.bfloat16)
        bb = jnp.zeros((1, 1, hid_p), jnp.float32)

    kernel = _make_gbottleneck_kernel(block_num, hid_p, out_p, bool(activation))

    # Grid-invariant operands: constant index_map, optionally single-buffered
    # (fetched once; no pointless double-buffering of adj / stacked weights).
    pm = {"pipeline_mode": pl.Buffered(1)} if single_buffer_invariants else {}
    _idx = {2: (lambda i: (0, 0)), 3: (lambda i: (0, 0, 0))}

    def const_spec(shape):
        return pl.BlockSpec(shape, _idx[len(shape)], **pm)

    # Cost estimate: 2 matmuls per GConv over conv1 + 2*block_num + conv2.
    def gconv_flops(kin, kout):
        return 2 * N_p * kin * (2 * kout) + 2 * N_p * N_p * kout
    flops = B * (gconv_flops(fin_p, hid_p)
                 + 2 * block_num * gconv_flops(hid_p, hid_p)
                 + gconv_flops(hid_p, out_p))
    consts = (adj_b, wc1, b1, bw, bb, wc2, b2)
    const_bytes = sum(int(a.size) * a.dtype.itemsize for a in consts)
    io_bytes = (int(x_p.size) * x_p.dtype.itemsize
                + B * N_p * (out_p + hid_p) * inputs.dtype.itemsize)
    cost = pl.CostEstimate(flops=int(flops), transcendentals=0,
                           bytes_accessed=int(const_bytes + io_bytes))

    # Scoped-VMEM budget: resident consts + a few live f32 activation slabs,
    # with headroom.  Stays at 32 MiB for small shapes, grows for production N
    # (defaults: 16 MiB v5e, 32 MiB v6e/v7x).
    act_bytes = (6 * N_p * max(fin_p, 2 * hid_p, 2 * out_p)
                 + 2 * N_p * (hid_p + out_p)) * 4
    vmem_limit = int(min(100 * 2**20,
                         max(32 * 2**20, 2 * (const_bytes + act_bytes))))

    out_pd, hid_pd = pl.pallas_call(
        kernel,
        out_shape=(jax.ShapeDtypeStruct((B, N_p, out_p), inputs.dtype),
                   jax.ShapeDtypeStruct((B, N_p, hid_p), inputs.dtype)),
        grid_spec=pltpu.PrefetchScalarGridSpec(
            num_scalar_prefetch=0,
            grid=(B,),
            in_specs=[
                pl.BlockSpec((1, N_p, fin_p), lambda i: (i, 0, 0)),
                const_spec((N_p, N_p)),            # adj (bf16), resident
                const_spec((fin_p, 2 * hid_p)),    # conv1 [W|W_loop]
                const_spec((1, hid_p)),            # conv1 bias
                const_spec(bw.shape),              # stacked block weights
                const_spec(bb.shape),              # stacked block biases
                const_spec((hid_p, 2 * out_p)),    # conv2 [W|W_loop]
                const_spec((1, out_p)),            # conv2 bias
            ],
            out_specs=[
                pl.BlockSpec((1, N_p, out_p), lambda i: (i, 0, 0)),
                pl.BlockSpec((1, N_p, hid_p), lambda i: (i, 0, 0)),
            ],
        ),
        compiler_params=pltpu.CompilerParams(
            dimension_semantics=("parallel",),
            vmem_limit_bytes=vmem_limit),
        cost_estimate=cost,
    )(x_p, adj_b, wc1, b1, bw, bb, wc2, b2)

    # Strip node + lane padding (tiny XLA slices on the outputs).
    return out_pd[:, :N, :out_dim], hid_pd[:, :N, :hidden_dim]


# ---------------- parameter construction (deterministic) ----------------

def init_gconv_params(key, in_features, out_features):
    k1, k2, k3 = jax.random.split(key, 3)
    scale = 1.0 / jnp.sqrt(jnp.float32(in_features))
    w = jax.random.uniform(k1, (in_features, out_features), jnp.float32,
                           -scale, scale)
    w_loop = jax.random.uniform(k2, (in_features, out_features), jnp.float32,
                                -scale, scale)
    b = jax.random.uniform(k3, (out_features,), jnp.float32, -scale, scale)
    return {"w": w, "w_loop": w_loop, "b": b}


def init_gbottleneck_params(key, block_num, in_dim, hidden_dim, out_dim):
    keys = jax.random.split(key, 2 + 2 * block_num)
    params = {
        "conv1": init_gconv_params(keys[0], in_dim, hidden_dim),
        "conv2": init_gconv_params(keys[1], hidden_dim, out_dim),
        "blocks": [],
    }
    for i in range(block_num):
        params["blocks"].append({
            "conv1": init_gconv_params(keys[2 + 2 * i], hidden_dim, hidden_dim),
            "conv2": init_gconv_params(keys[3 + 2 * i], hidden_dim, hidden_dim),
        })
    return params


# ---------------- pure-JAX reference for verification ----------------

def _gconv_ref(x, adj, w, w_loop, b, apply_relu):
    out = jnp.einsum("nm,bmf->bnf", adj, x @ w) + x @ w_loop + b
    return jnp.maximum(out, 0.0) if apply_relu else out


def _gbottleneck_ref(params, inputs, adj, activation=True):
    p1, p2 = params["conv1"], params["conv2"]
    x = _gconv_ref(inputs, adj, p1["w"], p1["w_loop"], p1["b"], activation)
    for bp in params["blocks"]:
        h = _gconv_ref(x, adj, bp["conv1"]["w"], bp["conv1"]["w_loop"],
                       bp["conv1"]["b"], activation)
        h = _gconv_ref(h, adj, bp["conv2"]["w"], bp["conv2"]["w_loop"],
                       bp["conv2"]["b"], activation)
        x = (x + h) * 0.5
    x_out = _gconv_ref(x, adj, p2["w"], p2["w_loop"], p2["b"], False)
    return x_out, x


if __name__ == "__main__":
    key = jax.random.PRNGKey(0)
    k_x, k_p = jax.random.split(key)

    B, N = 2, 32          # batch, graph nodes (demo sizes; see review notes)
    in_dim, hidden_dim, out_dim = 8, 32, 16
    block_num = 2
    activation = True     # F.relu

    # deterministic inputs
    x = jax.random.normal(k_x, (B, N, in_dim), jnp.float32)

    # deterministic normalized adjacency: ring graph + self loops, row-normed
    idx = jnp.arange(N)
    adj = (jnp.eye(N)
           + jnp.eye(N)[(idx + 1) % N]
           + jnp.eye(N)[(idx - 1) % N]).astype(jnp.float32)
    adj = adj / adj.sum(axis=1, keepdims=True)

    params = init_gbottleneck_params(k_p, block_num, in_dim, hidden_dim,
                                     out_dim)

    try:
        fwd = jax.jit(functools.partial(gbottleneck_forward,
                                        activation=activation))
        x_out, x_hidden = fwd(params, x, adj)
        jax.block_until_ready((x_out, x_hidden))
    except Exception:
        # Fallback if this JAX build rejects pipeline_mode=pl.Buffered(1) on
        # the grid-invariant operands: identical kernel, default buffering.
        fwd = jax.jit(functools.partial(gbottleneck_forward,
                                        activation=activation,
                                        single_buffer_invariants=False))
        x_out, x_hidden = fwd(params, x, adj)
        jax.block_until_ready((x_out, x_hidden))

    ref_out, ref_hidden = _gbottleneck_ref(params, x, adj, activation)
    assert x_out.shape == (B, N, out_dim)
    assert x_hidden.shape == (B, N, hidden_dim)
    # bf16 MXU operands (f32 accumulation) vs. the pure-f32 reference -> the
    # tolerance is loosened relative to the all-f32 version.
    assert jnp.allclose(x_out, ref_out, atol=3e-2, rtol=3e-2)
    assert jnp.allclose(x_hidden, ref_hidden, atol=3e-2, rtol=3e-2)

    print("KERNEL_OK")
</pallas_src>

<mosaic_0001>
module attributes {stable_mosaic.version = 11 : i64} {
  func.func @kernel(%arg0: i32, %arg1: memref<1x128x128xf32, #tpu.memory_space<vmem>>, %arg2: memref<128x128xbf16, #tpu.memory_space<vmem>>, %arg3: memref<128x256xbf16, #tpu.memory_space<vmem>>, %arg4: memref<1x128xf32, #tpu.memory_space<vmem>>, %arg5: memref<4x128x256xbf16, #tpu.memory_space<vmem>>, %arg6: memref<4x1x128xf32, #tpu.memory_space<vmem>>, %arg7: memref<128x256xbf16, #tpu.memory_space<vmem>>, %arg8: memref<1x128xf32, #tpu.memory_space<vmem>>, %arg9: memref<1x128x128xf32, #tpu.memory_space<vmem>>, %arg10: memref<1x128x128xf32, #tpu.memory_space<vmem>>) attributes {dimension_semantics = [#tpu.dimension_semantics<parallel>], iteration_bounds = array<i64: 2>, scalar_prefetch = 0 : i64, scratch_operands = 0 : i64, tpu.core_type = #tpu.core_type<tc>, window_params = [{transform_indices = @transform_0, window_bounds = array<i64: 1, 128, 128>}, {pipeline_mode = #tpu.pipeline_mode<synchronous>, transform_indices = @transform_1, window_bounds = array<i64: 128, 128>}, {pipeline_mode = #tpu.pipeline_mode<synchronous>, transform_indices = @transform_2, window_bounds = array<i64: 128, 256>}, {pipeline_mode = #tpu.pipeline_mode<synchronous>, transform_indices = @transform_3, window_bounds = array<i64: 1, 128>}, {pipeline_mode = #tpu.pipeline_mode<synchronous>, transform_indices = @transform_4, window_bounds = array<i64: 4, 128, 256>}, {pipeline_mode = #tpu.pipeline_mode<synchronous>, transform_indices = @transform_5, window_bounds = array<i64: 4, 1, 128>}, {pipeline_mode = #tpu.pipeline_mode<synchronous>, transform_indices = @transform_6, window_bounds = array<i64: 128, 256>}, {pipeline_mode = #tpu.pipeline_mode<synchronous>, transform_indices = @transform_7, window_bounds = array<i64: 1, 128>}, {transform_indices = @transform_8, window_bounds = array<i64: 1, 128, 128>}, {transform_indices = @transform_9, window_bounds = array<i64: 1, 128, 128>}]} {
    %c0 = arith.constant 0 : index
    %c0_0 = arith.constant 0 : index
    %0 = vector.load %arg2[%c0, %c0_0] : memref<128x128xbf16, #tpu.memory_space<vmem>>, vector<128x128xbf16>
    %c0_1 = arith.constant 0 : index
    %c0_2 = arith.constant 0 : index
    %c0_3 = arith.constant 0 : index
    %1 = vector.load %arg1[%c0_1, %c0_2, %c0_3] : memref<1x128x128xf32, #tpu.memory_space<vmem>>, vector<1x128x128xf32>
    %2 = vector.shape_cast %1 : vector<1x128x128xf32> to vector<128x128xf32>
    %c0_4 = arith.constant 0 : index
    %c0_5 = arith.constant 0 : index
    %3 = vector.load %arg3[%c0_4, %c0_5] : memref<128x256xbf16, #tpu.memory_space<vmem>>, vector<128x256xbf16>
    %c0_6 = arith.constant 0 : index
    %c0_7 = arith.constant 0 : index
    %4 = vector.load %arg4[%c0_6, %c0_7] : memref<1x128xf32, #tpu.memory_space<vmem>>, vector<1x128xf32>
    %5 = arith.truncf %2 : vector<128x128xf32> to vector<128x128xbf16>
    %cst = arith.constant dense<0.000000e+00> : vector<128x256xf32>
    %6 = tpu.matmul %5, %3, %cst {dimension_numbers = #tpu.dot_dimension_numbers<[1], [0], [0], [1], [0, 0, 1, 1], [], []>} : vector<128x128xbf16>, vector<128x256xbf16>, vector<128x256xf32> -> vector<128x256xf32>
    %7 = vector.extract_strided_slice %6 {offsets = [0, 0], sizes = [128, 128], strides = [1, 1]} : vector<128x256xf32> to vector<128x128xf32>
    %8 = arith.truncf %7 : vector<128x128xf32> to vector<128x128xbf16>
    %cst_8 = arith.constant dense<0.000000e+00> : vector<128x128xf32>
    %9 = tpu.matmul %0, %8, %cst_8 {dimension_numbers = #tpu.dot_dimension_numbers<[1], [0], [0], [1], [0, 0, 1, 1], [], []>} : vector<128x128xbf16>, vector<128x128xbf16>, vector<128x128xf32> -> vector<128x128xf32>
    %10 = vector.extract_strided_slice %6 {offsets = [0, 128], sizes = [128, 128], strides = [1, 1]} : vector<128x256xf32> to vector<128x128xf32>
    %11 = arith.addf %9, %10 : vector<128x128xf32>
    %12 = vector.broadcast %4 : vector<1x128xf32> to vector<128x128xf32>
    %13 = arith.addf %11, %12 : vector<128x128xf32>
    %cst_9 = arith.constant 0.000000e+00 : f32
    %14 = vector.broadcast %cst_9 : f32 to vector<128x128xf32>
    %15 = arith.maximumf %13, %14 : vector<128x128xf32>
    %c0_10 = arith.constant 0 : index
    %c0_11 = arith.constant 0 : index
    %c0_12 = arith.constant 0 : index
    %16 = vector.load %arg5[%c0_10, %c0_11, %c0_12] : memref<4x128x256xbf16, #tpu.memory_space<vmem>>, vector<1x128x256xbf16>
    %17 = vector.shape_cast %16 : vector<1x128x256xbf16> to vector<128x256xbf16>
    %c0_13 = arith.constant 0 : index
    %c0_14 = arith.constant 0 : index
    %c0_15 = arith.constant 0 : index
    %18 = vector.load %arg6[%c0_13, %c0_14, %c0_15] : memref<4x1x128xf32, #tpu.memory_space<vmem>>, vector<1x1x128xf32>
    %19 = vector.shape_cast %18 : vector<1x1x128xf32> to vector<1x128xf32>
    %20 = arith.truncf %15 : vector<128x128xf32> to vector<128x128xbf16>
    %cst_16 = arith.constant dense<0.000000e+00> : vector<128x256xf32>
    %21 = tpu.matmul %20, %17, %cst_16 {dimension_numbers = #tpu.dot_dimension_numbers<[1], [0], [0], [1], [0, 0, 1, 1], [], []>} : vector<128x128xbf16>, vector<128x256xbf16>, vector<128x256xf32> -> vector<128x256xf32>
    %22 = vector.extract_strided_slice %21 {offsets = [0, 0], sizes = [128, 128], strides = [1, 1]} : vector<128x256xf32> to vector<128x128xf32>
    %23 = arith.truncf %22 : vector<128x128xf32> to vector<128x128xbf16>
    %cst_17 = arith.constant dense<0.000000e+00> : vector<128x128xf32>
    %24 = tpu.matmul %0, %23, %cst_17 {dimension_numbers = #tpu.dot_dimension_numbers<[1], [0], [0], [1], [0, 0, 1, 1], [], []>} : vector<128x128xbf16>, vector<128x128xbf16>, vector<128x128xf32> -> vector<128x128xf32>
    %25 = vector.extract_strided_slice %21 {offsets = [0, 128], sizes = [128, 128], strides = [1, 1]} : vector<128x256xf32> to vector<128x128xf32>
    %26 = arith.addf %24, %25 : vector<128x128xf32>
    %27 = vector.broadcast %19 : vector<1x128xf32> to vector<128x128xf32>
    %28 = arith.addf %26, %27 : vector<128x128xf32>
    %cst_18 = arith.constant 0.000000e+00 : f32
    %29 = vector.broadcast %cst_18 : f32 to vector<128x128xf32>
    %30 = arith.maximumf %28, %29 : vector<128x128xf32>
    %c1 = arith.constant 1 : index
    %c0_19 = arith.constant 0 : index
    %c0_20 = arith.constant 0 : index
    %31 = vector.load %arg5[%c1, %c0_19, %c0_20] : memref<4x128x256xbf16, #tpu.memory_space<vmem>>, vector<1x128x256xbf16>
    %32 = vector.shape_cast %31 : vector<1x128x256xbf16> to vector<128x256xbf16>
    %c1_21 = arith.constant 1 : index
    %c0_22 = arith.constant 0 : index
    %c0_23 = arith.constant 0 : index
    %33 = vector.load %arg6[%c1_21, %c0_22, %c0_23] : memref<4x1x128xf32, #tpu.memory_space<vmem>>, vector<1x1x128xf32>
    %34 = vector.shape_cast %33 : vector<1x1x128xf32> to vector<1x128xf32>
    %35 = arith.truncf %30 : vector<128x128xf32> to vector<128x128xbf16>
    %cst_24 = arith.constant dense<0.000000e+00> : vector<128x256xf32>
    %36 = tpu.matmul %35, %32, %cst_24 {dimension_numbers = #tpu.dot_dimension_numbers<[1], [0], [0], [1], [0, 0, 1, 1], [], []>} : vector<128x128xbf16>, vector<128x256xbf16>, vector<128x256xf32> -> vector<128x256xf32>
    %37 = vector.extract_strided_slice %36 {offsets = [0, 0], sizes = [128, 128], strides = [1, 1]} : vector<128x256xf32> to vector<128x128xf32>
    %38 = arith.truncf %37 : vector<128x128xf32> to vector<128x128xbf16>
    %cst_25 = arith.constant dense<0.000000e+00> : vector<128x128xf32>
    %39 = tpu.matmul %0, %38, %cst_25 {dimension_numbers = #tpu.dot_dimension_numbers<[1], [0], [0], [1], [0, 0, 1, 1], [], []>} : vector<128x128xbf16>, vector<128x128xbf16>, vector<128x128xf32> -> vector<128x128xf32>
    %40 = vector.extract_strided_slice %36 {offsets = [0, 128], sizes = [128, 128], strides = [1, 1]} : vector<128x256xf32> to vector<128x128xf32>
    %41 = arith.addf %39, %40 : vector<128x128xf32>
    %42 = vector.broadcast %34 : vector<1x128xf32> to vector<128x128xf32>
    %43 = arith.addf %41, %42 : vector<128x128xf32>
    %cst_26 = arith.constant 0.000000e+00 : f32
    %44 = vector.broadcast %cst_26 : f32 to vector<128x128xf32>
    %45 = arith.maximumf %43, %44 : vector<128x128xf32>
    %46 = arith.addf %15, %45 : vector<128x128xf32>
    %cst_27 = arith.constant 5.000000e-01 : f32
    %47 = vector.broadcast %cst_27 : f32 to vector<128x128xf32>
    %48 = arith.mulf %46, %47 : vector<128x128xf32>
    %c2 = arith.constant 2 : index
    %c0_28 = arith.constant 0 : index
    %c0_29 = arith.constant 0 : index
    %49 = vector.load %arg5[%c2, %c0_28, %c0_29] : memref<4x128x256xbf16, #tpu.memory_space<vmem>>, vector<1x128x256xbf16>
    %50 = vector.shape_cast %49 : vector<1x128x256xbf16> to vector<128x256xbf16>
    %c2_30 = arith.constant 2 : index
    %c0_31 = arith.constant 0 : index
    %c0_32 = arith.constant 0 : index
    %51 = vector.load %arg6[%c2_30, %c0_31, %c0_32] : memref<4x1x128xf32, #tpu.memory_space<vmem>>, vector<1x1x128xf32>
    %52 = vector.shape_cast %51 : vector<1x1x128xf32> to vector<1x128xf32>
    %53 = arith.truncf %48 : vector<128x128xf32> to vector<128x128xbf16>
    %cst_33 = arith.constant dense<0.000000e+00> : vector<128x256xf32>
    %54 = tpu.matmul %53, %50, %cst_33 {dimension_numbers = #tpu.dot_dimension_numbers<[1], [0], [0], [1], [0, 0, 1, 1], [], []>} : vector<128x128xbf16>, vector<128x256xbf16>, vector<128x256xf32> -> vector<128x256xf32>
    %55 = vector.extract_strided_slice %54 {offsets = [0, 0], sizes = [128, 128], strides = [1, 1]} : vector<128x256xf32> to vector<128x128xf32>
    %56 = arith.truncf %55 : vector<128x128xf32> to vector<128x128xbf16>
    %cst_34 = arith.constant dense<0.000000e+00> : vector<128x128xf32>
    %57 = tpu.matmul %0, %56, %cst_34 {dimension_numbers = #tpu.dot_dimension_numbers<[1], [0], [0], [1], [0, 0, 1, 1], [], []>} : vector<128x128xbf16>, vector<128x128xbf16>, vector<128x128xf32> -> vector<128x128xf32>
    %58 = vector.extract_strided_slice %54 {offsets = [0, 128], sizes = [128, 128], strides = [1, 1]} : vector<128x256xf32> to vector<128x128xf32>
    %59 = arith.addf %57, %58 : vector<128x128xf32>
    %60 = vector.broadcast %52 : vector<1x128xf32> to vector<128x128xf32>
    %61 = arith.addf %59, %60 : vector<128x128xf32>
    %cst_35 = arith.constant 0.000000e+00 : f32
    %62 = vector.broadcast %cst_35 : f32 to vector<128x128xf32>
    %63 = arith.maximumf %61, %62 : vector<128x128xf32>
    %c3 = arith.constant 3 : index
    %c0_36 = arith.constant 0 : index
    %c0_37 = arith.constant 0 : index
    %64 = vector.load %arg5[%c3, %c0_36, %c0_37] : memref<4x128x256xbf16, #tpu.memory_space<vmem>>, vector<1x128x256xbf16>
    %65 = vector.shape_cast %64 : vector<1x128x256xbf16> to vector<128x256xbf16>
    %c3_38 = arith.constant 3 : index
    %c0_39 = arith.constant 0 : index
    %c0_40 = arith.constant 0 : index
    %66 = vector.load %arg6[%c3_38, %c0_39, %c0_40] : memref<4x1x128xf32, #tpu.memory_space<vmem>>, vector<1x1x128xf32>
    %67 = vector.shape_cast %66 : vector<1x1x128xf32> to vector<1x128xf32>
    %68 = arith.truncf %63 : vector<128x128xf32> to vector<128x128xbf16>
    %cst_41 = arith.constant dense<0.000000e+00> : vector<128x256xf32>
    %69 = tpu.matmul %68, %65, %cst_41 {dimension_numbers = #tpu.dot_dimension_numbers<[1], [0], [0], [1], [0, 0, 1, 1], [], []>} : vector<128x128xbf16>, vector<128x256xbf16>, vector<128x256xf32> -> vector<128x256xf32>
    %70 = vector.extract_strided_slice %69 {offsets = [0, 0], sizes = [128, 128], strides = [1, 1]} : vector<128x256xf32> to vector<128x128xf32>
    %71 = arith.truncf %70 : vector<128x128xf32> to vector<128x128xbf16>
    %cst_42 = arith.constant dense<0.000000e+00> : vector<128x128xf32>
    %72 = tpu.matmul %0, %71, %cst_42 {dimension_numbers = #tpu.dot_dimension_numbers<[1], [0], [0], [1], [0, 0, 1, 1], [], []>} : vector<128x128xbf16>, vector<128x128xbf16>, vector<128x128xf32> -> vector<128x128xf32>
    %73 = vector.extract_strided_slice %69 {offsets = [0, 128], sizes = [128, 128], strides = [1, 1]} : vector<128x256xf32> to vector<128x128xf32>
    %74 = arith.addf %72, %73 : vector<128x128xf32>
    %75 = vector.broadcast %67 : vector<1x128xf32> to vector<128x128xf32>
    %76 = arith.addf %74, %75 : vector<128x128xf32>
    %cst_43 = arith.constant 0.000000e+00 : f32
    %77 = vector.broadcast %cst_43 : f32 to vector<128x128xf32>
    %78 = arith.maximumf %76, %77 : vector<128x128xf32>
    %79 = arith.addf %48, %78 : vector<128x128xf32>
    %cst_44 = arith.constant 5.000000e-01 : f32
    %80 = vector.broadcast %cst_44 : f32 to vector<128x128xf32>
    %81 = arith.mulf %79, %80 : vector<128x128xf32>
    %c0_45 = arith.constant 0 : index
    %c0_46 = arith.constant 0 : index
    %c0_47 = arith.constant 0 : index
    %82 = vector.load %arg10[%c0_45, %c0_46, %c0_47] : memref<1x128x128xf32, #tpu.memory_space<vmem>>, vector<1x128x128xf32>
    %83 = vector.shape_cast %82 : vector<1x128x128xf32> to vector<128x128xf32>
    %84 = vector.shape_cast %81 : vector<128x128xf32> to vector<1x128x128xf32>
    tpu.vector_store %arg10[%c0_45, %c0_46, %c0_47], %84 {strides = array<i32>} : memref<1x128x128xf32, #tpu.memory_space<vmem>>, vector<1x128x128xf32>,
    %c0_48 = arith.constant 0 : index
    %c0_49 = arith.constant 0 : index
    %85 = vector.load %arg7[%c0_48, %c0_49] : memref<128x256xbf16, #tpu.memory_space<vmem>>, vector<128x256xbf16>
    %c0_50 = arith.constant 0 : index
    %c0_51 = arith.constant 0 : index
    %86 = vector.load %arg8[%c0_50, %c0_51] : memref<1x128xf32, #tpu.memory_space<vmem>>, vector<1x128xf32>
    %87 = arith.truncf %81 : vector<128x128xf32> to vector<128x128xbf16>
    %cst_52 = arith.constant dense<0.000000e+00> : vector<128x256xf32>
    %88 = tpu.matmul %87, %85, %cst_52 {dimension_numbers = #tpu.dot_dimension_numbers<[1], [0], [0], [1], [0, 0, 1, 1], [], []>} : vector<128x128xbf16>, vector<128x256xbf16>, vector<128x256xf32> -> vector<128x256xf32>
    %89 = vector.extract_strided_slice %88 {offsets = [0, 0], sizes = [128, 128], strides = [1, 1]} : vector<128x256xf32> to vector<128x128xf32>
    %90 = arith.truncf %89 : vector<128x128xf32> to vector<128x128xbf16>
    %cst_53 = arith.constant dense<0.000000e+00> : vector<128x128xf32>
    %91 = tpu.matmul %0, %90, %cst_53 {dimension_numbers = #tpu.dot_dimension_numbers<[1], [0], [0], [1], [0, 0, 1, 1], [], []>} : vector<128x128xbf16>, vector<128x128xbf16>, vector<128x128xf32> -> vector<128x128xf32>
    %92 = vector.extract_strided_slice %88 {offsets = [0, 128], sizes = [128, 128], strides = [1, 1]} : vector<128x256xf32> to vector<128x128xf32>
    %93 = arith.addf %91, %92 : vector<128x128xf32>
    %94 = vector.broadcast %86 : vector<1x128xf32> to vector<128x128xf32>
    %95 = arith.addf %93, %94 : vector<128x128xf32>
    %c0_54 = arith.constant 0 : index
    %c0_55 = arith.constant 0 : index
    %c0_56 = arith.constant 0 : index
    %96 = vector.load %arg9[%c0_54, %c0_55, %c0_56] : memref<1x128x128xf32, #tpu.memory_space<vmem>>, vector<1x128x128xf32>
    %97 = vector.shape_cast %96 : vector<1x128x128xf32> to vector<128x128xf32>
    %98 = vector.shape_cast %95 : vector<128x128xf32> to vector<1x128x128xf32>
    tpu.vector_store %arg9[%c0_54, %c0_55, %c0_56], %98 {strides = array<i32>} : memref<1x128x128xf32, #tpu.memory_space<vmem>>, vector<1x128x128xf32>,
    return
  }
  func.func @transform_0(%arg0: i32) -> (i32, i32, i32) {
    %c0_i32 = arith.constant 0 : i32
    %c0_i32_0 = arith.constant 0 : i32
    %c0_i32_1 = arith.constant 0 : i32
    return %arg0, %c0_i32, %c0_i32_0 : i32, i32, i32
  }
  func.func @transform_1(%arg0: i32) -> (i32, i32) {
    %c0_i32 = arith.constant 0 : i32
    %c0_i32_0 = arith.constant 0 : i32
    %c0_i32_1 = arith.constant 0 : i32
    return %c0_i32, %c0_i32_0 : i32, i32
  }
  func.func @transform_2(%arg0: i32) -> (i32, i32) {
    %c0_i32 = arith.constant 0 : i32
    %c0_i32_0 = arith.constant 0 : i32
    %c0_i32_1 = arith.constant 0 : i32
    return %c0_i32, %c0_i32_0 : i32, i32
  }
  func.func @transform_3(%arg0: i32) -> (i32, i32) {
    %c0_i32 = arith.constant 0 : i32
    %c0_i32_0 = arith.constant 0 : i32
    %c0_i32_1 = arith.constant 0 : i32
    return %c0_i32, %c0_i32_0 : i32, i32
  }
  func.func @transform_4(%arg0: i32) -> (i32, i32, i32) {
    %c0_i32 = arith.constant 0 : i32
    %c0_i32_0 = arith.constant 0 : i32
    %c0_i32_1 = arith.constant 0 : i32
    %c0_i32_2 = arith.constant 0 : i32
    return %c0_i32, %c0_i32_0, %c0_i32_1 : i32, i32, i32
  }
  func.func @transform_5(%arg0: i32) -> (i32, i32, i32) {
    %c0_i32 = arith.constant 0 : i32
    %c0_i32_0 = arith.constant 0 : i32
    %c0_i32_1 = arith.constant 0 : i32
    %c0_i32_2 = arith.constant 0 : i32
    return %c0_i32, %c0_i32_0, %c0_i32_1 : i32, i32, i32
  }
  func.func @transform_6(%arg0: i32) -> (i32, i32) {
    %c0_i32 = arith.constant 0 : i32
    %c0_i32_0 = arith.constant 0 : i32
    %c0_i32_1 = arith.constant 0 : i32
    return %c0_i32, %c0_i32_0 : i32, i32
  }
  func.func @transform_7(%arg0: i32) -> (i32, i32) {
    %c0_i32 = arith.constant 0 : i32
    %c0_i32_0 = arith.constant 0 : i32
    %c0_i32_1 = arith.constant 0 : i32
    return %c0_i32, %c0_i32_0 : i32, i32
  }
  func.func @transform_8(%arg0: i32) -> (i32, i32, i32) {
    %c0_i32 = arith.constant 0 : i32
    %c0_i32_0 = arith.constant 0 : i32
    %c0_i32_1 = arith.constant 0 : i32
    return %arg0, %c0_i32, %c0_i32_0 : i32, i32, i32
  }
  func.func @transform_9(%arg0: i32) -> (i32, i32, i32) {
    %c0_i32 = arith.constant 0 : i32
    %c0_i32_0 = arith.constant 0 : i32
    %c0_i32_1 = arith.constant 0 : i32
    return %arg0, %c0_i32, %c0_i32_0 : i32, i32, i32
  }
}

module attributes {stable_mosaic.version = 11 : i64} {
  func.func @kernel(%arg0: i32, %arg1: memref<1x128x128xf32, #tpu.memory_space<vmem>>, %arg2: memref<128x128xbf16, #tpu.memory_space<vmem>>, %arg3: memref<128x256xbf16, #tpu.memory_space<vmem>>, %arg4: memref<1x128xf32, #tpu.memory_space<vmem>>, %arg5: memref<4x128x256xbf16, #tpu.memory_space<vmem>>, %arg6: memref<4x1x128xf32, #tpu.memory_space<vmem>>, %arg7: memref<128x256xbf16, #tpu.memory_space<vmem>>, %arg8: memref<1x128xf32, #tpu.memory_space<vmem>>, %arg9: memref<1x128x128xf32, #tpu.memory_space<vmem>>, %arg10: memref<1x128x128xf32, #tpu.memory_space<vmem>>) attributes {dimension_semantics = [#tpu.dimension_semantics<parallel>], iteration_bounds = array<i64: 2>, scalar_prefetch = 0 : i64, scratch_operands = 0 : i64, tpu.core_type = #tpu.core_type<tc>, window_params = [{transform_indices = @transform_0, window_bounds = array<i64: 1, 128, 128>}, {pipeline_mode = #tpu.pipeline_mode<synchronous>, transform_indices = @transform_1, window_bounds = array<i64: 128, 128>}, {pipeline_mode = #tpu.pipeline_mode<synchronous>, transform_indices = @transform_2, window_bounds = array<i64: 128, 256>}, {pipeline_mode = #tpu.pipeline_mode<synchronous>, transform_indices = @transform_3, window_bounds = array<i64: 1, 128>}, {pipeline_mode = #tpu.pipeline_mode<synchronous>, transform_indices = @transform_4, window_bounds = array<i64: 4, 128, 256>}, {pipeline_mode = #tpu.pipeline_mode<synchronous>, transform_indices = @transform_5, window_bounds = array<i64: 4, 1, 128>}, {pipeline_mode = #tpu.pipeline_mode<synchronous>, transform_indices = @transform_6, window_bounds = array<i64: 128, 256>}, {pipeline_mode = #tpu.pipeline_mode<synchronous>, transform_indices = @transform_7, window_bounds = array<i64: 1, 128>}, {transform_indices = @transform_8, window_bounds = array<i64: 1, 128, 128>}, {transform_indices = @transform_9, window_bounds = array<i64: 1, 128, 128>}]} {
    %c0 = arith.constant 0 : index
    %c0_0 = arith.constant 0 : index
    %0 = vector.load %arg2[%c0, %c0_0] : memref<128x128xbf16, #tpu.memory_space<vmem>>, vector<128x128xbf16>
    %c0_1 = arith.constant 0 : index
    %c0_2 = arith.constant 0 : index
    %c0_3 = arith.constant 0 : index
    %1 = vector.load %arg1[%c0_1, %c0_2, %c0_3] : memref<1x128x128xf32, #tpu.memory_space<vmem>>, vector<1x128x128xf32>
    %2 = vector.shape_cast %1 : vector<1x128x128xf32> to vector<128x128xf32>
    %c0_4 = arith.constant 0 : index
    %c0_5 = arith.constant 0 : index
    %3 = vector.load %arg3[%c0_4, %c0_5] : memref<128x256xbf16, #tpu.memory_space<vmem>>, vector<128x256xbf16>
    %c0_6 = arith.constant 0 : index
    %c0_7 = arith.constant 0 : index
    %4 = vector.load %arg4[%c0_6, %c0_7] : memref<1x128xf32, #tpu.memory_space<vmem>>, vector<1x128xf32>
    %5 = arith.truncf %2 : vector<128x128xf32> to vector<128x128xbf16>
    %cst = arith.constant dense<0.000000e+00> : vector<128x256xf32>
    %6 = tpu.matmul %5, %3, %cst {dimension_numbers = #tpu.dot_dimension_numbers<[1], [0], [0], [1], [0, 0, 1, 1], [], []>} : vector<128x128xbf16>, vector<128x256xbf16>, vector<128x256xf32> -> vector<128x256xf32>
    %7 = vector.extract_strided_slice %6 {offsets = [0, 0], sizes = [128, 128], strides = [1, 1]} : vector<128x256xf32> to vector<128x128xf32>
    %8 = arith.truncf %7 : vector<128x128xf32> to vector<128x128xbf16>
    %cst_8 = arith.constant dense<0.000000e+00> : vector<128x128xf32>
    %9 = tpu.matmul %0, %8, %cst_8 {dimension_numbers = #tpu.dot_dimension_numbers<[1], [0], [0], [1], [0, 0, 1, 1], [], []>} : vector<128x128xbf16>, vector<128x128xbf16>, vector<128x128xf32> -> vector<128x128xf32>
    %10 = vector.extract_strided_slice %6 {offsets = [0, 128], sizes = [128, 128], strides = [1, 1]} : vector<128x256xf32> to vector<128x128xf32>
    %11 = arith.addf %9, %10 : vector<128x128xf32>
    %12 = vector.broadcast %4 : vector<1x128xf32> to vector<128x128xf32>
    %13 = arith.addf %11, %12 : vector<128x128xf32>
    %cst_9 = arith.constant 0.000000e+00 : f32
    %14 = vector.broadcast %cst_9 : f32 to vector<128x128xf32>
    %15 = arith.maximumf %13, %14 : vector<128x128xf32>
    %c0_10 = arith.constant 0 : index
    %c0_11 = arith.constant 0 : index
    %c0_12 = arith.constant 0 : index
    %16 = vector.load %arg5[%c0_10, %c0_11, %c0_12] : memref<4x128x256xbf16, #tpu.memory_space<vmem>>, vector<1x128x256xbf16>
    %17 = vector.shape_cast %16 : vector<1x128x256xbf16> to vector<128x256xbf16>
    %c0_13 = arith.constant 0 : index
    %c0_14 = arith.constant 0 : index
    %c0_15 = arith.constant 0 : index
    %18 = vector.load %arg6[%c0_13, %c0_14, %c0_15] : memref<4x1x128xf32, #tpu.memory_space<vmem>>, vector<1x1x128xf32>
    %19 = vector.shape_cast %18 : vector<1x1x128xf32> to vector<1x128xf32>
    %20 = arith.truncf %15 : vector<128x128xf32> to vector<128x128xbf16>
    %cst_16 = arith.constant dense<0.000000e+00> : vector<128x256xf32>
    %21 = tpu.matmul %20, %17, %cst_16 {dimension_numbers = #tpu.dot_dimension_numbers<[1], [0], [0], [1], [0, 0, 1, 1], [], []>} : vector<128x128xbf16>, vector<128x256xbf16>, vector<128x256xf32> -> vector<128x256xf32>
    %22 = vector.extract_strided_slice %21 {offsets = [0, 0], sizes = [128, 128], strides = [1, 1]} : vector<128x256xf32> to vector<128x128xf32>
    %23 = arith.truncf %22 : vector<128x128xf32> to vector<128x128xbf16>
    %cst_17 = arith.constant dense<0.000000e+00> : vector<128x128xf32>
    %24 = tpu.matmul %0, %23, %cst_17 {dimension_numbers = #tpu.dot_dimension_numbers<[1], [0], [0], [1], [0, 0, 1, 1], [], []>} : vector<128x128xbf16>, vector<128x128xbf16>, vector<128x128xf32> -> vector<128x128xf32>
    %25 = vector.extract_strided_slice %21 {offsets = [0, 128], sizes = [128, 128], strides = [1, 1]} : vector<128x256xf32> to vector<128x128xf32>
    %26 = arith.addf %24, %25 : vector<128x128xf32>
    %27 = vector.broadcast %19 : vector<1x128xf32> to vector<128x128xf32>
    %28 = arith.addf %26, %27 : vector<128x128xf32>
    %cst_18 = arith.constant 0.000000e+00 : f32
    %29 = vector.broadcast %cst_18 : f32 to vector<128x128xf32>
    %30 = arith.maximumf %28, %29 : vector<128x128xf32>
    %c1 = arith.constant 1 : index
    %c0_19 = arith.constant 0 : index
    %c0_20 = arith.constant 0 : index
    %31 = vector.load %arg5[%c1, %c0_19, %c0_20] : memref<4x128x256xbf16, #tpu.memory_space<vmem>>, vector<1x128x256xbf16>
    %32 = vector.shape_cast %31 : vector<1x128x256xbf16> to vector<128x256xbf16>
    %c1_21 = arith.constant 1 : index
    %c0_22 = arith.constant 0 : index
    %c0_23 = arith.constant 0 : index
    %33 = vector.load %arg6[%c1_21, %c0_22, %c0_23] : memref<4x1x128xf32, #tpu.memory_space<vmem>>, vector<1x1x128xf32>
    %34 = vector.shape_cast %33 : vector<1x1x128xf32> to vector<1x128xf32>
    %35 = arith.truncf %30 : vector<128x128xf32> to vector<128x128xbf16>
    %cst_24 = arith.constant dense<0.000000e+00> : vector<128x256xf32>
    %36 = tpu.matmul %35, %32, %cst_24 {dimension_numbers = #tpu.dot_dimension_numbers<[1], [0], [0], [1], [0, 0, 1, 1], [], []>} : vector<128x128xbf16>, vector<128x256xbf16>, vector<128x256xf32> -> vector<128x256xf32>
    %37 = vector.extract_strided_slice %36 {offsets = [0, 0], sizes = [128, 128], strides = [1, 1]} : vector<128x256xf32> to vector<128x128xf32>
    %38 = arith.truncf %37 : vector<128x128xf32> to vector<128x128xbf16>
    %cst_25 = arith.constant dense<0.000000e+00> : vector<128x128xf32>
    %39 = tpu.matmul %0, %38, %cst_25 {dimension_numbers = #tpu.dot_dimension_numbers<[1], [0], [0], [1], [0, 0, 1, 1], [], []>} : vector<128x128xbf16>, vector<128x128xbf16>, vector<128x128xf32> -> vector<128x128xf32>
    %40 = vector.extract_strided_slice %36 {offsets = [0, 128], sizes = [128, 128], strides = [1, 1]} : vector<128x256xf32> to vector<128x128xf32>
    %41 = arith.addf %39, %40 : vector<128x128xf32>
    %42 = vector.broadcast %34 : vector<1x128xf32> to vector<128x128xf32>
    %43 = arith.addf %41, %42 : vector<128x128xf32>
    %cst_26 = arith.constant 0.000000e+00 : f32
    %44 = vector.broadcast %cst_26 : f32 to vector<128x128xf32>
    %45 = arith.maximumf %43, %44 : vector<128x128xf32>
    %46 = arith.addf %15, %45 : vector<128x128xf32>
    %cst_27 = arith.constant 5.000000e-01 : f32
    %47 = vector.broadcast %cst_27 : f32 to vector<128x128xf32>
    %48 = arith.mulf %46, %47 : vector<128x128xf32>
    %c2 = arith.constant 2 : index
    %c0_28 = arith.constant 0 : index
    %c0_29 = arith.constant 0 : index
    %49 = vector.load %arg5[%c2, %c0_28, %c0_29] : memref<4x128x256xbf16, #tpu.memory_space<vmem>>, vector<1x128x256xbf16>
    %50 = vector.shape_cast %49 : vector<1x128x256xbf16> to vector<128x256xbf16>
    %c2_30 = arith.constant 2 : index
    %c0_31 = arith.constant 0 : index
    %c0_32 = arith.constant 0 : index
    %51 = vector.load %arg6[%c2_30, %c0_31, %c0_32] : memref<4x1x128xf32, #tpu.memory_space<vmem>>, vector<1x1x128xf32>
    %52 = vector.shape_cast %51 : vector<1x1x128xf32> to vector<1x128xf32>
    %53 = arith.truncf %48 : vector<128x128xf32> to vector<128x128xbf16>
    %cst_33 = arith.constant dense<0.000000e+00> : vector<128x256xf32>
    %54 = tpu.matmul %53, %50, %cst_33 {dimension_numbers = #tpu.dot_dimension_numbers<[1], [0], [0], [1], [0, 0, 1, 1], [], []>} : vector<128x128xbf16>, vector<128x256xbf16>, vector<128x256xf32> -> vector<128x256xf32>
    %55 = vector.extract_strided_slice %54 {offsets = [0, 0], sizes = [128, 128], strides = [1, 1]} : vector<128x256xf32> to vector<128x128xf32>
    %56 = arith.truncf %55 : vector<128x128xf32> to vector<128x128xbf16>
    %cst_34 = arith.constant dense<0.000000e+00> : vector<128x128xf32>
    %57 = tpu.matmul %0, %56, %cst_34 {dimension_numbers = #tpu.dot_dimension_numbers<[1], [0], [0], [1], [0, 0, 1, 1], [], []>} : vector<128x128xbf16>, vector<128x128xbf16>, vector<128x128xf32> -> vector<128x128xf32>
    %58 = vector.extract_strided_slice %54 {offsets = [0, 128], sizes = [128, 128], strides = [1, 1]} : vector<128x256xf32> to vector<128x128xf32>
    %59 = arith.addf %57, %58 : vector<128x128xf32>
    %60 = vector.broadcast %52 : vector<1x128xf32> to vector<128x128xf32>
    %61 = arith.addf %59, %60 : vector<128x128xf32>
    %cst_35 = arith.constant 0.000000e+00 : f32
    %62 = vector.broadcast %cst_35 : f32 to vector<128x128xf32>
    %63 = arith.maximumf %61, %62 : vector<128x128xf32>
    %c3 = arith.constant 3 : index
    %c0_36 = arith.constant 0 : index
    %c0_37 = arith.constant 0 : index
    %64 = vector.load %arg5[%c3, %c0_36, %c0_37] : memref<4x128x256xbf16, #tpu.memory_space<vmem>>, vector<1x128x256xbf16>
    %65 = vector.shape_cast %64 : vector<1x128x256xbf16> to vector<128x256xbf16>
    %c3_38 = arith.constant 3 : index
    %c0_39 = arith.constant 0 : index
    %c0_40 = arith.constant 0 : index
    %66 = vector.load %arg6[%c3_38, %c0_39, %c0_40] : memref<4x1x128xf32, #tpu.memory_space<vmem>>, vector<1x1x128xf32>
    %67 = vector.shape_cast %66 : vector<1x1x128xf32> to vector<1x128xf32>
    %68 = arith.truncf %63 : vector<128x128xf32> to vector<128x128xbf16>
    %cst_41 = arith.constant dense<0.000000e+00> : vector<128x256xf32>
    %69 = tpu.matmul %68, %65, %cst_41 {dimension_numbers = #tpu.dot_dimension_numbers<[1], [0], [0], [1], [0, 0, 1, 1], [], []>} : vector<128x128xbf16>, vector<128x256xbf16>, vector<128x256xf32> -> vector<128x256xf32>
    %70 = vector.extract_strided_slice %69 {offsets = [0, 0], sizes = [128, 128], strides = [1, 1]} : vector<128x256xf32> to vector<128x128xf32>
    %71 = arith.truncf %70 : vector<128x128xf32> to vector<128x128xbf16>
    %cst_42 = arith.constant dense<0.000000e+00> : vector<128x128xf32>
    %72 = tpu.matmul %0, %71, %cst_42 {dimension_numbers = #tpu.dot_dimension_numbers<[1], [0], [0], [1], [0, 0, 1, 1], [], []>} : vector<128x128xbf16>, vector<128x128xbf16>, vector<128x128xf32> -> vector<128x128xf32>
    %73 = vector.extract_strided_slice %69 {offsets = [0, 128], sizes = [128, 128], strides = [1, 1]} : vector<128x256xf32> to vector<128x128xf32>
    %74 = arith.addf %72, %73 : vector<128x128xf32>
    %75 = vector.broadcast %67 : vector<1x128xf32> to vector<128x128xf32>
    %76 = arith.addf %74, %75 : vector<128x128xf32>
    %cst_43 = arith.constant 0.000000e+00 : f32
    %77 = vector.broadcast %cst_43 : f32 to vector<128x128xf32>
    %78 = arith.maximumf %76, %77 : vector<128x128xf32>
    %79 = arith.addf %48, %78 : vector<128x128xf32>
    %cst_44 = arith.constant 5.000000e-01 : f32
    %80 = vector.broadcast %cst_44 : f32 to vector<128x128xf32>
    %81 = arith.mulf %79, %80 : vector<128x128xf32>
    %c0_45 = arith.constant 0 : index
    %c0_46 = arith.constant 0 : index
    %c0_47 = arith.constant 0 : index
    %82 = vector.load %arg10[%c0_45, %c0_46, %c0_47] : memref<1x128x128xf32, #tpu.memory_space<vmem>>, vector<1x128x128xf32>
    %83 = vector.shape_cast %82 : vector<1x128x128xf32> to vector<128x128xf32>
    %84 = vector.shape_cast %81 : vector<128x128xf32> to vector<1x128x128xf32>
    tpu.vector_store %arg10[%c0_45, %c0_46, %c0_47], %84 {strides = array<i32>} : memref<1x128x128xf32, #tpu.memory_space<vmem>>, vector<1x128x128xf32>,
    %c0_48 = arith.constant 0 : index
    %c0_49 = arith.constant 0 : index
    %85 = vector.load %arg7[%c0_48, %c0_49] : memref<128x256xbf16, #tpu.memory_space<vmem>>, vector<128x256xbf16>
    %c0_50 = arith.constant 0 : index
    %c0_51 = arith.constant 0 : index
    %86 = vector.load %arg8[%c0_50, %c0_51] : memref<1x128xf32, #tpu.memory_space<vmem>>, vector<1x128xf32>
    %87 = arith.truncf %81 : vector<128x128xf32> to vector<128x128xbf16>
    %cst_52 = arith.constant dense<0.000000e+00> : vector<128x256xf32>
    %88 = tpu.matmul %87, %85, %cst_52 {dimension_numbers = #tpu.dot_dimension_numbers<[1], [0], [0], [1], [0, 0, 1, 1], [], []>} : vector<128x128xbf16>, vector<128x256xbf16>, vector<128x256xf32> -> vector<128x256xf32>
    %89 = vector.extract_strided_slice %88 {offsets = [0, 0], sizes = [128, 128], strides = [1, 1]} : vector<128x256xf32> to vector<128x128xf32>
    %90 = arith.truncf %89 : vector<128x128xf32> to vector<128x128xbf16>
    %cst_53 = arith.constant dense<0.000000e+00> : vector<128x128xf32>
    %91 = tpu.matmul %0, %90, %cst_53 {dimension_numbers = #tpu.dot_dimension_numbers<[1], [0], [0], [1], [0, 0, 1, 1], [], []>} : vector<128x128xbf16>, vector<128x128xbf16>, vector<128x128xf32> -> vector<128x128xf32>
    %92 = vector.extract_strided_slice %88 {offsets = [0, 128], sizes = [128, 128], strides = [1, 1]} : vector<128x256xf32> to vector<128x128xf32>
    %93 = arith.addf %91, %92 : vector<128x128xf32>
    %94 = vector.broadcast %86 : vector<1x128xf32> to vector<128x128xf32>
    %95 = arith.addf %93, %94 : vector<128x128xf32>
    %c0_54 = arith.constant 0 : index
    %c0_55 = arith.constant 0 : index
    %c0_56 = arith.constant 0 : index
    %96 = vector.load %arg9[%c0_54, %c0_55, %c0_56] : memref<1x128x128xf32, #tpu.memory_space<vmem>>, vector<1x128x128xf32>
    %97 = vector.shape_cast %96 : vector<1x128x128xf32> to vector<128x128xf32>
    %98 = vector.shape_cast %95 : vector<128x128xf32> to vector<1x128x128xf32>
    tpu.vector_store %arg9[%c0_54, %c0_55, %c0_56], %98 {strides = array<i32>} : memref<1x128x128xf32, #tpu.memory_space<vmem>>, vector<1x128x128xf32>,
    return
  }
  func.func @transform_0(%arg0: i32) -> (i32, i32, i32) {
    %c0_i32 = arith.constant 0 : i32
    %c0_i32_0 = arith.constant 0 : i32
    %c0_i32_1 = arith.constant 0 : i32
    return %arg0, %c0_i32, %c0_i32_0 : i32, i32, i32
  }
  func.func @transform_1(%arg0: i32) -> (i32, i32) {
    %c0_i32 = arith.constant 0 : i32
    %c0_i32_0 = arith.constant 0 : i32
    %c0_i32_1 = arith.constant 0 : i32
    return %c0_i32, %c0_i32_0 : i32, i32
  }
  func.func @transform_2(%arg0: i32) -> (i32, i32) {
    %c0_i32 = arith.constant 0 : i32
    %c0_i32_0 = arith.constant 0 : i32
    %c0_i32_1 = arith.constant 0 : i32
    return %c0_i32, %c0_i32_0 : i32, i32
  }
  func.func @transform_3(%arg0: i32) -> (i32, i32) {
    %c0_i32 = arith.constant 0 : i32
    %c0_i32_0 = arith.constant 0 : i32
    %c0_i32_1 = arith.constant 0 : i32
    return %c0_i32, %c0_i32_0 : i32, i32
  }
  func.func @transform_4(%arg0: i32) -> (i32, i32, i32) {
    %c0_i32 = arith.constant 0 : i32
    %c0_i32_0 = arith.constant 0 : i32
    %c0_i32_1 = arith.constant 0 : i32
    %c0_i32_2 = arith.constant 0 : i32
    return %c0_i32, %c0_i32_0, %c0_i32_1 : i32, i32, i32
  }
  func.func @transform_5(%arg0: i32) -> (i32, i32, i32) {
    %c0_i32 = arith.constant 0 : i32
    %c0_i32_0 = arith.constant 0 : i32
    %c0_i32_1 = arith.constant 0 : i32
    %c0_i32_2 = arith.constant 0 : i32
    return %c0_i32, %c0_i32_0, %c0_i32_1 : i32, i32, i32
  }
  func.func @transform_6(%arg0: i32) -> (i32, i32) {
    %c0_i32 = arith.constant 0 : i32
    %c0_i32_0 = arith.constant 0 : i32
    %c0_i32_1 = arith.constant 0 : i32
    return %c0_i32, %c0_i32_0 : i32, i32
  }
  func.func @transform_7(%arg0: i32) -> (i32, i32) {
    %c0_i32 = arith.constant 0 : i32
    %c0_i32_0 = arith.constant 0 : i32
    %c0_i32_1 = arith.constant 0 : i32
    return %c0_i32, %c0_i32_0 : i32, i32
  }
  func.func @transform_8(%arg0: i32) -> (i32, i32, i32) {
    %c0_i32 = arith.constant 0 : i32
    %c0_i32_0 = arith.constant 0 : i32
    %c0_i32_1 = arith.constant 0 : i32
    return %arg0, %c0_i32, %c0_i32_0 : i32, i32, i32
  }
  func.func @transform_9(%arg0: i32) -> (i32, i32, i32) {
    %c0_i32 = arith.constant 0 : i32
    %c0_i32_0 = arith.constant 0 : i32
    %c0_i32_1 = arith.constant 0 : i32
    return %arg0, %c0_i32, %c0_i32_0 : i32, i32, i32
  }
}

</mosaic_0001>

<llo_original>
// kernel: gbottleneck_forward.1
$region0: #{gbottleneck_forward.1}
  #allocation0 [shape = 'u32[]', space=smem, size = 0x4, offset = 0x4, fixed_abs, tag = 'smem constant byte address 0x4 - core index']
  #allocation1 [shape = 'u32[72,128]{1,0:T(1,128)}', space=vmem, size = 0x9000, scoped, tag = 'internal scratch']
  %s0 = inlined_call_operand.vmem [shape: f32[2,128,128], index: 0, kind: input, shape index: {}]
  %s1 = inlined_call_operand.vmem [shape: bf16[128,128], index: 1, kind: input, shape index: {}]
  %s2 = inlined_call_operand.vmem [shape: bf16[128,256], index: 2, kind: input, shape index: {}]
  %s3 = inlined_call_operand.vmem [shape: f32[1,128], index: 3, kind: input, shape index: {}]
  %s4 = inlined_call_operand.vmem [shape: bf16[4,128,256], index: 4, kind: input, shape index: {}]
  %s5 = inlined_call_operand.vmem [shape: f32[4,1,128], index: 5, kind: input, shape index: {}]
  %s6 = inlined_call_operand.vmem [shape: bf16[128,256], index: 6, kind: input, shape index: {}]
  %s7 = inlined_call_operand.vmem [shape: f32[1,128], index: 7, kind: input, shape index: {}]
  %s8 = inlined_call_operand.vmem [shape: f32[2,128,128], index: 8, kind: output, shape index: {0}]
  %s9 = inlined_call_operand.vmem [shape: f32[2,128,128], index: 9, kind: output, shape index: {1}]
  %10 = xla_tuple %s8, %s9
  %s11 = sld [smem:[#allocation0]]
  $region73: #{gbottleneck_forward.1} parent=0
    _
  %s13 = ssub.s32 1, %s11
  %s14 = scalar_select 0, %s13, %s11
  loop: start=0, step=1, limit=4
  $region2: #{gbottleneck_forward.1} parent=0 // loop_pre_header
    _
  $region3: #{gbottleneck_forward.1} parent=0 // loop_header
    %s16 = sphi 0, %s20
    %p17 = scmp.ge.s32.totalorder %s16, 4
    %s26 = sphi 0, %s28
    %s29 = sphi 0, %s26
    %s30 = sphi 0, %s29
    %s46 = sphi 0, %s30
    %s50 = sphi 0, %s50
    %s52 = sphi 0, %s50
    %s53 = sphi 0, %s52
    %s67 = sphi 0, %s53
    %s71 = sphi 0, %s71
    %s73 = sphi 0, %s71
    %s74 = sphi 0, %s73
    %s88 = sphi 0, %s74
    %s92 = sphi 0, %s92
    %s94 = sphi 0, %s92
    %s95 = sphi 0, %s94
    %s109 = sphi 0, %s95
    %s113 = sphi 0, %s113
    %s115 = sphi 0, %s113
    %s116 = sphi 0, %s115
    %s130 = sphi 0, %s116
    %s134 = sphi 0, %s134
    %s136 = sphi 0, %s134
    %s137 = sphi 0, %s136
    %s151 = sphi 0, %s137
    %s155 = sphi 0, %s155
    %s157 = sphi 0, %s155
    %s158 = sphi 0, %s157
    %s172 = sphi 0, %s158
    %s176 = sphi 0, %s176
    %s178 = sphi 0, %s176
    %s179 = sphi 0, %s178
    %s193 = sphi 0, %s179
    %s199 = sphi 0, %s201
    %s202 = sphi 0, %s199
    %s203 = sphi 0, %s202
    %s219 = sphi 0, %s203
    %s225 = sphi 0, %s227
    %s228 = sphi 0, %s225
    %s229 = sphi 0, %s228
    %s245 = sphi 0, %s229
  $region4: #{gbottleneck_forward.1} parent=0 // loop_header_branch
    %19 = sbr.rel (%p17) target = $region8
  $region5: #{gbottleneck_forward.1} parent=0 // loop_body
    %s21 = ssub.s32 %s16, 1
    %s22 = ssub.s32 %s16, 2
    %s23 = sadd.s32 %s16, 1
    %s24 = ssub.s32 %s16, %s23
    %p25 = scmp.eq.s32.totalorder %s24, 0
    %s27 = sadd.s32 %s26, 1
    %s28 = scalar_select %p25, %s26, %s27
    %p31 = pneg %p25
    %p32 = scmp.eq.s32.totalorder %s16, 1
    %p33 = por %p31, %p32
    %p34 = scmp.ne.s32.totalorder %s26, %s29
    %p35 = scmp.eq.s32.totalorder %s16, 0
    %p36 = por %p34, %p35
    %p37 = scmp.ne.s32.totalorder %s26, %s29
    %p38 = scmp.eq.s32.totalorder %s21, 1
    %p39 = por %p37, %p38
    %p40 = scmp.ne.s32.totalorder %s29, %s30
    %p41 = scmp.eq.s32.totalorder %s21, 0
    %p42 = por %p40, %p41
    %p43 = scmp.ne.s32.totalorder %s29, %s30
    %p44 = scmp.eq.s32.totalorder %s22, 1
    %p45 = por %p43, %p44
    %p47 = scmp.ne.s32.totalorder %s30, %s46
    %p48 = scmp.eq.s32.totalorder %s22, 0
    %p49 = por %p47, %p48
    %s51 = sadd.s32 %s50, 1
    %p54 = scmp.eq.s32.totalorder %s16, 1
    %p55 = scmp.ne.s32.totalorder %s50, %s52
    %p56 = scmp.eq.s32.totalorder %s16, 0
    %p57 = por %p55, %p56
    %p58 = scmp.ne.s32.totalorder %s50, %s52
    %p59 = scmp.eq.s32.totalorder %s21, 1
    %p60 = por %p58, %p59
    %p61 = scmp.ne.s32.totalorder %s52, %s53
    %p62 = scmp.eq.s32.totalorder %s21, 0
    %p63 = por %p61, %p62
    %p64 = scmp.ne.s32.totalorder %s52, %s53
    %p65 = scmp.eq.s32.totalorder %s22, 1
    %p66 = por %p64, %p65
    %p68 = scmp.ne.s32.totalorder %s53, %s67
    %p69 = scmp.eq.s32.totalorder %s22, 0
    %p70 = por %p68, %p69
    %s72 = sadd.s32 %s71, 1
    %p75 = scmp.eq.s32.totalorder %s16, 1
    %p76 = scmp.ne.s32.totalorder %s71, %s73
    %p77 = scmp.eq.s32.totalorder %s16, 0
    %p78 = por %p76, %p77
    %p79 = scmp.ne.s32.totalorder %s71, %s73
    %p80 = scmp.eq.s32.totalorder %s21, 1
    %p81 = por %p79, %p80
    %p82 = scmp.ne.s32.totalorder %s73, %s74
    %p83 = scmp.eq.s32.totalorder %s21, 0
    %p84 = por %p82, %p83
    %p85 = scmp.ne.s32.totalorder %s73, %s74
    %p86 = scmp.eq.s32.totalorder %s22, 1
    %p87 = por %p85, %p86
    %p89 = scmp.ne.s32.totalorder %s74, %s88
    %p90 = scmp.eq.s32.totalorder %s22, 0
    %p91 = por %p89, %p90
    %s93 = sadd.s32 %s92, 1
    %p96 = scmp.eq.s32.totalorder %s16, 1
    %p97 = scmp.ne.s32.totalorder %s92, %s94
    %p98 = scmp.eq.s32.totalorder %s16, 0
    %p99 = por %p97, %p98
    %p100 = scmp.ne.s32.totalorder %s92, %s94
    %p101 = scmp.eq.s32.totalorder %s21, 1
    %p102 = por %p100, %p101
    %p103 = scmp.ne.s32.totalorder %s94, %s95
    %p104 = scmp.eq.s32.totalorder %s21, 0
    %p105 = por %p103, %p104
    %p106 = scmp.ne.s32.totalorder %s94, %s95
    %p107 = scmp.eq.s32.totalorder %s22, 1
    %p108 = por %p106, %p107
    %p110 = scmp.ne.s32.totalorder %s95, %s109
    %p111 = scmp.eq.s32.totalorder %s22, 0
    %p112 = por %p110, %p111
    %s114 = sadd.s32 %s113, 1
    %p117 = scmp.eq.s32.totalorder %s16, 1
    %p118 = scmp.ne.s32.totalorder %s113, %s115
    %p119 = scmp.eq.s32.totalorder %s16, 0
    %p120 = por %p118, %p119
    %p121 = scmp.ne.s32.totalorder %s113, %s115
    %p122 = scmp.eq.s32.totalorder %s21, 1
    %p123 = por %p121, %p122
    %p124 = scmp.ne.s32.totalorder %s115, %s116
    %p125 = scmp.eq.s32.totalorder %s21, 0
    %p126 = por %p124, %p125
    %p127 = scmp.ne.s32.totalorder %s115, %s116
    %p128 = scmp.eq.s32.totalorder %s22, 1
    %p129 = por %p127, %p128
    %p131 = scmp.ne.s32.totalorder %s116, %s130
    %p132 = scmp.eq.s32.totalorder %s22, 0
    %p133 = por %p131, %p132
    %s135 = sadd.s32 %s134, 1
    %p138 = scmp.eq.s32.totalorder %s16, 1
    %p139 = scmp.ne.s32.totalorder %s134, %s136
    %p140 = scmp.eq.s32.totalorder %s16, 0
    %p141 = por %p139, %p140
    %p142 = scmp.ne.s32.totalorder %s134, %s136
    %p143 = scmp.eq.s32.totalorder %s21, 1
    %p144 = por %p142, %p143
    %p145 = scmp.ne.s32.totalorder %s136, %s137
    %p146 = scmp.eq.s32.totalorder %s21, 0
    %p147 = por %p145, %p146
    %p148 = scmp.ne.s32.totalorder %s136, %s137
    %p149 = scmp.eq.s32.totalorder %s22, 1
    %p150 = por %p148, %p149
    %p152 = scmp.ne.s32.totalorder %s137, %s151
    %p153 = scmp.eq.s32.totalorder %s22, 0
    %p154 = por %p152, %p153
    %s156 = sadd.s32 %s155, 1
    %p159 = scmp.eq.s32.totalorder %s16, 1
    %p160 = scmp.ne.s32.totalorder %s155, %s157
    %p161 = scmp.eq.s32.totalorder %s16, 0
    %p162 = por %p160, %p161
    %p163 = scmp.ne.s32.totalorder %s155, %s157
    %p164 = scmp.eq.s32.totalorder %s21, 1
    %p165 = por %p163, %p164
    %p166 = scmp.ne.s32.totalorder %s157, %s158
    %p167 = scmp.eq.s32.totalorder %s21, 0
    %p168 = por %p166, %p167
    %p169 = scmp.ne.s32.totalorder %s157, %s158
    %p170 = scmp.eq.s32.totalorder %s22, 1
    %p171 = por %p169, %p170
    %p173 = scmp.ne.s32.totalorder %s158, %s172
    %p174 = scmp.eq.s32.totalorder %s22, 0
    %p175 = por %p173, %p174
    %s177 = sadd.s32 %s176, 1
    %p180 = scmp.eq.s32.totalorder %s16, 1
    %p181 = scmp.ne.s32.totalorder %s176, %s178
    %p182 = scmp.eq.s32.totalorder %s16, 0
    %p183 = por %p181, %p182
    %p184 = scmp.ne.s32.totalorder %s176, %s178
    %p185 = scmp.eq.s32.totalorder %s21, 1
    %p186 = por %p184, %p185
    %p187 = scmp.ne.s32.totalorder %s178, %s179
    %p188 = scmp.eq.s32.totalorder %s21, 0
    %p189 = por %p187, %p188
    %p190 = scmp.ne.s32.totalorder %s178, %s179
    %p191 = scmp.eq.s32.totalorder %s22, 1
    %p192 = por %p190, %p191
    %p194 = scmp.ne.s32.totalorder %s179, %s193
    %p195 = scmp.eq.s32.totalorder %s22, 0
    %p196 = por %p194, %p195
    %s197 = ssub.s32 %s16, %s23
    %p198 = scmp.eq.s32.totalorder %s197, 0
    %s200 = sadd.s32 %s199, 1
    %s201 = scalar_select %p198, %s199, %s200
    %p204 = pneg %p198
    %p205 = scmp.eq.s32.totalorder %s16, 1
    %p206 = por %p204, %p205
    %p207 = scmp.ne.s32.totalorder %s199, %s202
    %p208 = scmp.eq.s32.totalorder %s16, 0
    %p209 = por %p207, %p208
    %p210 = scmp.ne.s32.totalorder %s199, %s202
    %p211 = scmp.eq.s32.totalorder %s21, 1
    %p212 = por %p210, %p211
    %p213 = scmp.ne.s32.totalorder %s202, %s203
    %p214 = scmp.eq.s32.totalorder %s21, 0
    %p215 = por %p213, %p214
    %p216 = scmp.ne.s32.totalorder %s202, %s203
    %p217 = scmp.eq.s32.totalorder %s22, 1
    %p218 = por %p216, %p217
    %p220 = scmp.ne.s32.totalorder %s203, %s219
    %p221 = scmp.eq.s32.totalorder %s22, 0
    %p222 = por %p220, %p221
    %s223 = ssub.s32 %s16, %s23
    %p224 = scmp.eq.s32.totalorder %s223, 0
    %s226 = sadd.s32 %s225, 1
    %s227 = scalar_select %p224, %s225, %s226
    %p230 = pneg %p224
    %p231 = scmp.eq.s32.totalorder %s16, 1
    %p232 = por %p230, %p231
    %p233 = scmp.ne.s32.totalorder %s225, %s228
    %p234 = scmp.eq.s32.totalorder %s16, 0
    %p235 = por %p233, %p234
    %p236 = scmp.ne.s32.totalorder %s225, %s228
    %p237 = scmp.eq.s32.totalorder %s21, 1
    %p238 = por %p236, %p237
    %p239 = scmp.ne.s32.totalorder %s228, %s229
    %p240 = scmp.eq.s32.totalorder %s21, 0
    %p241 = por %p239, %p240
    %p242 = scmp.ne.s32.totalorder %s228, %s229
    %p243 = scmp.eq.s32.totalorder %s22, 1
    %p244 = por %p242, %p243
    %p246 = scmp.ne.s32.totalorder %s229, %s245
    %p247 = scmp.eq.s32.totalorder %s22, 0
    %p248 = por %p246, %p247
    %p249 = scmp.le.s32.totalorder 1, %s16
    %p250 = scmp.lt.s32.totalorder %s16, 3
    %p251 = pnand %p249, %p250
    %p252 = pneg %p251
    // Predicated region
    $region9: #{gbottleneck_forward.1} parent=5 // pred_check
      _
    $region10: #{gbottleneck_forward.1} parent=5 // pred_check_branch
      %254 = sbr.rel (%p251) target = $region12
    $region11: #{gbottleneck_forward.1} parent=5 // pred_region
      %s255 = ssub.s32 %s16, 1
      // Predicated region
      $region13: #{gbottleneck_forward.1} parent=11 // pred_check
        %p256 = pneg %p63
      $region14: #{gbottleneck_forward.1} parent=11 // pred_check_branch
        %258 = sbr.rel (%p256) target = $region16
      $region15: #{gbottleneck_forward.1} parent=11 // pred_region
        _
      $region16: #{gbottleneck_forward.1} parent=11 // pred_fallthru
        _
      // Predicated region
      $region17: #{gbottleneck_forward.1} parent=11 // pred_check
        %p259 = pneg %p84
      $region18: #{gbottleneck_forward.1} parent=11 // pred_check_branch
        %261 = sbr.rel (%p259) target = $region20
      $region19: #{gbottleneck_forward.1} parent=11 // pred_region
        _
      $region20: #{gbottleneck_forward.1} parent=11 // pred_fallthru
        _
      // Predicated region
      $region21: #{gbottleneck_forward.1} parent=11 // pred_check
        %p262 = pneg %p105
      $region22: #{gbottleneck_forward.1} parent=11 // pred_check_branch
        %264 = sbr.rel (%p262) target = $region24
      $region23: #{gbottleneck_forward.1} parent=11 // pred_region
        _
      $region24: #{gbottleneck_forward.1} parent=11 // pred_fallthru
        _
      // Predicated region
      $region25: #{gbottleneck_forward.1} parent=11 // pred_check
        %p265 = pneg %p126
      $region26: #{gbottleneck_forward.1} parent=11 // pred_check_branch
        %267 = sbr.rel (%p265) target = $region28
      $region27: #{gbottleneck_forward.1} parent=11 // pred_region
        _
      $region28: #{gbottleneck_forward.1} parent=11 // pred_fallthru
        _
      // Predicated region
      $region29: #{gbottleneck_forward.1} parent=11 // pred_check
        %p268 = pneg %p147
      $region30: #{gbottleneck_forward.1} parent=11 // pred_check_branch
        %270 = sbr.rel (%p268) target = $region32
      $region31: #{gbottleneck_forward.1} parent=11 // pred_region
        _
      $region32: #{gbottleneck_forward.1} parent=11 // pred_fallthru
        _
      // Predicated region
      $region33: #{gbottleneck_forward.1} parent=11 // pred_check
        %p271 = pneg %p168
      $region34: #{gbottleneck_forward.1} parent=11 // pred_check_branch
        %273 = sbr.rel (%p271) target = $region36
      $region35: #{gbottleneck_forward.1} parent=11 // pred_region
        _
      $region36: #{gbottleneck_forward.1} parent=11 // pred_fallthru
        _
      // Predicated region
      $region37: #{gbottleneck_forward.1} parent=11 // pred_check
        %p274 = pneg %p189
      $region38: #{gbottleneck_forward.1} parent=11 // pred_check_branch
        %276 = sbr.rel (%p274) target = $region40
      $region39: #{gbottleneck_forward.1} parent=11 // pred_region
        _
      $region40: #{gbottleneck_forward.1} parent=11 // pred_fallthru
        _
    $region12: #{gbottleneck_forward.1} parent=5 // pred_fallthru
      _
    %p277 = scmp.lt.s32.totalorder %s16, 2
    // Predicated region
    $region41: #{gbottleneck_forward.1} parent=5 // pred_check
      %p278 = pneg %p277
    $region42: #{gbottleneck_forward.1} parent=5 // pred_check_branch
      %280 = sbr.rel (%p278) target = $region44
    $region43: #{gbottleneck_forward.1} parent=5 // pred_region
      // Predicated region
      $region45: #{gbottleneck_forward.1} parent=43 // pred_check
        %p281 = pneg %p36
      $region46: #{gbottleneck_forward.1} parent=43 // pred_check_branch
        %283 = sbr.rel (%p281) target = $region48
      $region47: #{gbottleneck_forward.1} parent=43 // pred_region
        %p284 = scmp.lt.s32.totalorder %s16, 1
        %s285 = scalar_select %p284, %s16, 1
        %s286 = smul.addr %s285, 16
        %s287 = smul.addr %s286, 8
        %s288 = scalar_lea.vmem %s0, %s287
      $region48: #{gbottleneck_forward.1} parent=43 // pred_fallthru
        _
    $region44: #{gbottleneck_forward.1} parent=5 // pred_fallthru
      _
    %p289 = scmp.le.s32.totalorder 1, %s16
    %p290 = scmp.lt.s32.totalorder %s16, 3
    %p291 = pnand %p289, %p290
    %p292 = pneg %p291
    // Predicated region
    $region49: #{gbottleneck_forward.1} parent=5 // pred_check
      _
    $region50: #{gbottleneck_forward.1} parent=5 // pred_check_branch
      %294 = sbr.rel (%p291) target = $region52
    $region51: #{gbottleneck_forward.1} parent=5 // pred_region
      %s295 = ssub.s32 %s16, 1
      %p296 = scmp.lt.s32.totalorder %s21, 1
      %s297 = scalar_select %p296, %s21, 1
      %s298 = smul.addr %s297, 16
      %s299 = smul.addr %s298, 8
      %s300 = scalar_lea.vmem %s0, %s299
      %p301 = pneg %p42
      %p302 = pneg %p39
      %p303 = pneg %p63
      %p304 = pneg %p60
      %p305 = pneg %p84
      %p306 = pneg %p81
      %p307 = pneg %p105
      %p308 = pneg %p102
      %p309 = pneg %p126
      %p310 = pneg %p123
      %p311 = pneg %p147
      %p312 = pneg %p144
      %p313 = pneg %p168
      %p314 = pneg %p165
      %p315 = pneg %p189
      %p316 = pneg %p186
      %p317 = pneg %p215
      %p318 = pneg %p212
      %p319 = scmp.lt.s32.totalorder %s21, 1
      %s320 = scalar_select %p319, %s21, 1
      %s321 = smul.addr %s320, 16
      %s322 = smul.addr %s321, 8
      %s323 = scalar_lea.vmem %s8, %s322
      %p324 = pneg %p241
      %p325 = pneg %p238
      %p326 = scmp.lt.s32.totalorder %s21, 1
      %s327 = scalar_select %p326, %s21, 1
      %s328 = smul.addr %s327, 16
      %s329 = smul.addr %s328, 8
      %s330 = scalar_lea.vmem %s9, %s329
      %p331 = scmp.lt.s32.totalorder %s21, 1
      %s332 = scalar_select %p331, %s21, 1
      %s333 = smul.addr %s332, 16
      %s334 = smul.addr %s333, 8
      %s335 = scalar_lea.vmem %s0, %s334
      %p336 = scmp.lt.s32.totalorder %s21, 1
      %s337 = scalar_select %p336, %s21, 1
      %s338 = smul.addr %s337, 16
      %s339 = smul.addr %s338, 8
      %s340 = scalar_lea.vmem %s8, %s339
      %p341 = scmp.lt.s32.totalorder %s21, 1
      %s342 = scalar_select %p341, %s21, 1
      %s343 = smul.addr %s342, 16
      %s344 = smul.addr %s343, 8
      %s345 = scalar_lea.vmem %s9, %s344
      %v346 = vld [vmem:[%s1] sm:$0xf]
      %v347 = vld [vmem:[%s1 + $0x4] sm:$0xf]
      %v348 = vld [vmem:[%s1 + $0x8] sm:$0xf]
      %v349 = vld [vmem:[%s1 + $0xc] sm:$0xf]
      %v350 = vld [vmem:[%s1 + $0x10] sm:$0xf]
      %v351 = vld [vmem:[%s1 + $0x14] sm:$0xf]
      %v352 = vld [vmem:[%s1 + $0x18] sm:$0xf]
      %v353 = vld [vmem:[%s1 + $0x1c] sm:$0xf]
      %v354 = vld [vmem:[%s1 + $0x20] sm:$0xf]
      %v355 = vld [vmem:[%s1 + $0x24] sm:$0xf]
      %v356 = vld [vmem:[%s1 + $0x28] sm:$0xf]
      %v357 = vld [vmem:[%s1 + $0x2c] sm:$0xf]
      %v358 = vld [vmem:[%s1 + $0x30] sm:$0xf]
      %v359 = vld [vmem:[%s1 + $0x34] sm:$0xf]
      %v360 = vld [vmem:[%s1 + $0x38] sm:$0xf]
      %v361 = vld [vmem:[%s1 + $0x3c] sm:$0xf]
      %v362 = vld [vmem:[%s335] sm:$0xff]
      %v363 = vld [vmem:[%s335 + $0x8] sm:$0xff]
      %v364 = vld [vmem:[%s335 + $0x10] sm:$0xff]
      %v365 = vld [vmem:[%s335 + $0x18] sm:$0xff]
      %v366 = vld [vmem:[%s335 + $0x20] sm:$0xff]
      %v367 = vld [vmem:[%s335 + $0x28] sm:$0xff]
      %v368 = vld [vmem:[%s335 + $0x30] sm:$0xff]
      %v369 = vld [vmem:[%s335 + $0x38] sm:$0xff]
      %v370 = vld [vmem:[%s335 + $0x40] sm:$0xff]
      %v371 = vld [vmem:[%s335 + $0x48] sm:$0xff]
      %v372 = vld [vmem:[%s335 + $0x50] sm:$0xff]
      %v373 = vld [vmem:[%s335 + $0x58] sm:$0xff]
      %v374 = vld [vmem:[%s335 + $0x60] sm:$0xff]
      %v375 = vld [vmem:[%s335 + $0x68] sm:$0xff]
      %v376 = vld [vmem:[%s335 + $0x70] sm:$0xff]
      %v377 = vld [vmem:[%s335 + $0x78] sm:$0xff]
      %v378 = vld [vmem:[%s2] sm:$0xff]
      %v379 = vld [vmem:[%s2 + $0x8] sm:$0xff]
      %v380 = vld [vmem:[%s2 + $0x10] sm:$0xff]
      %v381 = vld [vmem:[%s2 + $0x18] sm:$0xff]
      %v382 = vld [vmem:[%s2 + $0x20] sm:$0xff]
      %v383 = vld [vmem:[%s2 + $0x28] sm:$0xff]
      %v384 = vld [vmem:[%s2 + $0x30] sm:$0xff]
      %v385 = vld [vmem:[%s2 + $0x38] sm:$0xff]
      %v386 = vld [vmem:[%s2 + $0x40] sm:$0xff]
      %v387 = vld [vmem:[%s2 + $0x48] sm:$0xff]
      %v388 = vld [vmem:[%s2 + $0x50] sm:$0xff]
      %v389 = vld [vmem:[%s2 + $0x58] sm:$0xff]
      %v390 = vld [vmem:[%s2 + $0x60] sm:$0xff]
      %v391 = vld [vmem:[%s2 + $0x68] sm:$0xff]
      %v392 = vld [vmem:[%s2 + $0x70] sm:$0xff]
      %v393 = vld [vmem:[%s2 + $0x78] sm:$0xff]
      %v394 = vld [vmem:[%s3] sm:$0x1]
      %v395 = vpack.c.bf16 %v363, %v362
      %v396 = vpack.c.bf16 %v365, %v364
      %v397 = vpack.c.bf16 %v367, %v366
      %v398 = vpack.c.bf16 %v369, %v368
      %v399 = vpack.c.bf16 %v371, %v370
      %v400 = vpack.c.bf16 %v373, %v372
      %v401 = vpack.c.bf16 %v375, %v374
      %v402 = vpack.c.bf16 %v377, %v376
      %v419 = vunpack.c.l.b16 %v378
      %v420 = vunpack.c.h.b16 %v378
      %v421 = vunpack.c.l.b16 %v379
      %v422 = vunpack.c.h.b16 %v379
      %v423 = vunpack.c.l.b16 %v380
      %v424 = vunpack.c.h.b16 %v380
      %v425 = vunpack.c.l.b16 %v381
      %v426 = vunpack.c.h.b16 %v381
      %v427 = vunpack.c.l.b16 %v382
      %v428 = vunpack.c.h.b16 %v382
      %v429 = vunpack.c.l.b16 %v383
      %v430 = vunpack.c.h.b16 %v383
      %v431 = vunpack.c.l.b16 %v384
      %v432 = vunpack.c.h.b16 %v384
      %v433 = vunpack.c.l.b16 %v385
      %v434 = vunpack.c.h.b16 %v385
      %v435 = vunpack.c.l.b16 %v386
      %v436 = vunpack.c.h.b16 %v386
      %v437 = vunpack.c.l.b16 %v387
      %v438 = vunpack.c.h.b16 %v387
      %v439 = vunpack.c.l.b16 %v388
      %v440 = vunpack.c.h.b16 %v388
      %v441 = vunpack.c.l.b16 %v389
      %v442 = vunpack.c.h.b16 %v389
      %v443 = vunpack.c.l.b16 %v390
      %v444 = vunpack.c.h.b16 %v390
      %v445 = vunpack.c.l.b16 %v391
      %v446 = vunpack.c.h.b16 %v391
      %v447 = vunpack.c.l.b16 %v392
      %v448 = vunpack.c.h.b16 %v392
      %v449 = vunpack.c.l.b16 %v393
      %v450 = vunpack.c.h.b16 %v393
      %v451 = vpack.c.b16 %v421, %v419
      %v452 = vpack.c.b16 %v422, %v420
      %v453 = vpack.c.b16 %v425, %v423
      %v454 = vpack.c.b16 %v426, %v424
      %v455 = vpack.c.b16 %v429, %v427
      %v456 = vpack.c.b16 %v430, %v428
      %v457 = vpack.c.b16 %v433, %v431
      %v458 = vpack.c.b16 %v434, %v432
      %v459 = vpack.c.b16 %v437, %v435
      %v460 = vpack.c.b16 %v438, %v436
      %v461 = vpack.c.b16 %v441, %v439
      %v462 = vpack.c.b16 %v442, %v440
      %v463 = vpack.c.b16 %v445, %v443
      %v464 = vpack.c.b16 %v446, %v444
      %v465 = vpack.c.b16 %v449, %v447
      %v466 = vpack.c.b16 %v450, %v448
      %483 = vmatpush.bf16.msra.mxu0 %v465
      %484 = vmatpush.bf16.msra.mxu0 %v463
      %485 = vmatpush.bf16.msra.mxu0 %v461
      %486 = vmatpush.bf16.msra.mxu0 %v459
      %487 = vmatpush.bf16.msra.mxu0 %v457
      %488 = vmatpush.bf16.msra.mxu0 %v455
      %489 = vmatpush.bf16.msra.mxu0 %v453
      %490 = vmatpush.bf16.msra.mxu0 %v451
      %491 = vmatmul.bf16.gmra.mxu0 %v395
      %v492 = vpop.f32.mrf.mxu0
      %v493 = vadd.f32 0.0, %v492
      %v494 = vpop.f32.mrf.mxu0
      %v495 = vadd.f32 0.0, %v494
      %496 = vmatmul.bf16.gmra.mxu0 %v396
      %v497 = vpop.f32.mrf.mxu0
      %v498 = vadd.f32 0.0, %v497
      %v499 = vpop.f32.mrf.mxu0
      %v500 = vadd.f32 0.0, %v499
      %501 = vmatmul.bf16.gmra.mxu0 %v397
      %v502 = vpop.f32.mrf.mxu0
      %v503 = vadd.f32 0.0, %v502
      %v504 = vpop.f32.mrf.mxu0
      %v505 = vadd.f32 0.0, %v504
      %506 = vmatmul.bf16.gmra.mxu0 %v398
      %v507 = vpop.f32.mrf.mxu0
      %v508 = vadd.f32 0.0, %v507
      %v509 = vpop.f32.mrf.mxu0
      %v510 = vadd.f32 0.0, %v509
      %511 = vmatmul.bf16.gmra.mxu0 %v399
      %v512 = vpop.f32.mrf.mxu0
      %v513 = vadd.f32 0.0, %v512
      %v514 = vpop.f32.mrf.mxu0
      %v515 = vadd.f32 0.0, %v514
      %516 = vmatmul.bf16.gmra.mxu0 %v400
      %v517 = vpop.f32.mrf.mxu0
      %v518 = vadd.f32 0.0, %v517
      %v519 = vpop.f32.mrf.mxu0
      %v520 = vadd.f32 0.0, %v519
      %521 = vmatmul.bf16.gmra.mxu0 %v401
      %v522 = vpop.f32.mrf.mxu0
      %v523 = vadd.f32 0.0, %v522
      %v524 = vpop.f32.mrf.mxu0
      %v525 = vadd.f32 0.0, %v524
      %526 = vmatmul.bf16.gmra.mxu0 %v402
      %v527 = vpop.f32.mrf.mxu0
      %v528 = vadd.f32 0.0, %v527
      %v529 = vpop.f32.mrf.mxu0
      %v530 = vadd.f32 0.0, %v529
      %531 = vdwg.mxu0
      %532 = vmatpush.bf16.msra.mxu0 %v466
      %533 = vmatpush.bf16.msra.mxu0 %v464
      %534 = vmatpush.bf16.msra.mxu0 %v462
      %535 = vmatpush.bf16.msra.mxu0 %v460
      %536 = vmatpush.bf16.msra.mxu0 %v458
      %537 = vmatpush.bf16.msra.mxu0 %v456
      %538 = vmatpush.bf16.msra.mxu0 %v454
      %539 = vmatpush.bf16.msra.mxu0 %v452
      %540 = vmatmul.bf16.gmra.mxu0 %v395
      %v541 = vpop.f32.mrf.mxu0
      %v542 = vadd.f32 0.0, %v541
      %v543 = vpop.f32.mrf.mxu0
      %v544 = vadd.f32 0.0, %v543
      %545 = vmatmul.bf16.gmra.mxu0 %v396
      %v546 = vpop.f32.mrf.mxu0
      %v547 = vadd.f32 0.0, %v546
      %v548 = vpop.f32.mrf.mxu0
      %v549 = vadd.f32 0.0, %v548
      %550 = vmatmul.bf16.gmra.mxu0 %v397
      %v551 = vpop.f32.mrf.mxu0
      %v552 = vadd.f32 0.0, %v551
      %v553 = vpop.f32.mrf.mxu0
      %v554 = vadd.f32 0.0, %v553
      %555 = vmatmul.bf16.gmra.mxu0 %v398
      %v556 = vpop.f32.mrf.mxu0
      %v557 = vadd.f32 0.0, %v556
      %v558 = vpop.f32.mrf.mxu0
      %v559 = vadd.f32 0.0, %v558
      %560 = vmatmul.bf16.gmra.mxu0 %v399
      %v561 = vpop.f32.mrf.mxu0
      %v562 = vadd.f32 0.0, %v561
      %v563 = vpop.f32.mrf.mxu0
      %v564 = vadd.f32 0.0, %v563
      %565 = vmatmul.bf16.gmra.mxu0 %v400
      %v566 = vpop.f32.mrf.mxu0
      %v567 = vadd.f32 0.0, %v566
      %v568 = vpop.f32.mrf.mxu0
      %v569 = vadd.f32 0.0, %v568
      %570 = vmatmul.bf16.gmra.mxu0 %v401
      %v571 = vpop.f32.mrf.mxu0
      %v572 = vadd.f32 0.0, %v571
      %v573 = vpop.f32.mrf.mxu0
      %v574 = vadd.f32 0.0, %v573
      %575 = vmatmul.bf16.gmra.mxu0 %v402
      %v576 = vpop.f32.mrf.mxu0
      %v577 = vadd.f32 0.0, %v576
      %v578 = vpop.f32.mrf.mxu0
      %v579 = vadd.f32 0.0, %v578
      %580 = vdwg.mxu0
      %v581 = vpack.c.bf16 %v495, %v493
      %v582 = vpack.c.bf16 %v500, %v498
      %v583 = vpack.c.bf16 %v505, %v503
      %v584 = vpack.c.bf16 %v510, %v508
      %v585 = vpack.c.bf16 %v515, %v513
      %v586 = vpack.c.bf16 %v520, %v518
      %v587 = vpack.c.bf16 %v525, %v523
      %v588 = vpack.c.bf16 %v530, %v528
      %v605 = vunpack.c.l.b16 %v346
      %v606 = vunpack.c.l.b16 %v347
      %v607 = vunpack.c.l.b16 %v348
      %v608 = vunpack.c.l.b16 %v349
      %v609 = vunpack.c.l.b16 %v350
      %v610 = vunpack.c.l.b16 %v351
      %v611 = vunpack.c.l.b16 %v352
      %v612 = vunpack.c.l.b16 %v353
      %v613 = vunpack.c.l.b16 %v354
      %v614 = vunpack.c.l.b16 %v355
      %v615 = vunpack.c.l.b16 %v356
      %v616 = vunpack.c.l.b16 %v357
      %v617 = vunpack.c.l.b16 %v358
      %v618 = vunpack.c.l.b16 %v359
      %v619 = vunpack.c.l.b16 %v360
      %v620 = vunpack.c.l.b16 %v361
      %v621 = vpack.c.b16 %v606, %v605
      %v622 = vpack.c.b16 %v608, %v607
      %v623 = vpack.c.b16 %v610, %v609
      %v624 = vpack.c.b16 %v612, %v611
      %v625 = vpack.c.b16 %v614, %v613
      %v626 = vpack.c.b16 %v616, %v615
      %v627 = vpack.c.b16 %v618, %v617
      %v628 = vpack.c.b16 %v620, %v619
      %637 = vmatpush.bf16.msra.mxu0 %v588
      %638 = vmatpush.bf16.msra.mxu0 %v587
      %639 = vmatpush.bf16.msra.mxu0 %v586
      %640 = vmatpush.bf16.msra.mxu0 %v585
      %641 = vmatpush.bf16.msra.mxu0 %v584
      %642 = vmatpush.bf16.msra.mxu0 %v583
      %643 = vmatpush.bf16.msra.mxu0 %v582
      %644 = vmatpush.bf16.msra.mxu0 %v581
      %645 = vmatmul.bf16.gmra.mxu0 %v621
      %v646 = vpop.f32.mrf.mxu0
      %v647 = vadd.f32 %v542, %v646
      %v648 = vpop.f32.mrf.mxu0
      %v649 = vadd.f32 %v544, %v648
      %650 = vmatmul.bf16.gmra.mxu0 %v622
      %v651 = vpop.f32.mrf.mxu0
      %v652 = vadd.f32 %v547, %v651
      %v653 = vpop.f32.mrf.mxu0
      %v654 = vadd.f32 %v549, %v653
      %655 = vmatmul.bf16.gmra.mxu0 %v623
      %v656 = vpop.f32.mrf.mxu0
      %v657 = vadd.f32 %v552, %v656
      %v658 = vpop.f32.mrf.mxu0
      %v659 = vadd.f32 %v554, %v658
      %660 = vmatmul.bf16.gmra.mxu0 %v624
      %v661 = vpop.f32.mrf.mxu0
      %v662 = vadd.f32 %v557, %v661
      %v663 = vpop.f32.mrf.mxu0
      %v664 = vadd.f32 %v559, %v663
      %665 = vmatmul.bf16.gmra.mxu0 %v625
      %v666 = vpop.f32.mrf.mxu0
      %v667 = vadd.f32 %v562, %v666
      %v668 = vpop.f32.mrf.mxu0
      %v669 = vadd.f32 %v564, %v668
      %670 = vmatmul.bf16.gmra.mxu0 %v626
      %v671 = vpop.f32.mrf.mxu0
      %v672 = vadd.f32 %v567, %v671
      %v673 = vpop.f32.mrf.mxu0
      %v674 = vadd.f32 %v569, %v673
      %675 = vmatmul.bf16.gmra.mxu0 %v627
      %v676 = vpop.f32.mrf.mxu0
      %v677 = vadd.f32 %v572, %v676
      %v678 = vpop.f32.mrf.mxu0
      %v679 = vadd.f32 %v574, %v678
      %680 = vmatmul.bf16.gmra.mxu0 %v628
      %v681 = vpop.f32.mrf.mxu0
      %v682 = vadd.f32 %v577, %v681
      %v683 = vpop.f32.mrf.mxu0
      %v684 = vadd.f32 %v579, %v683
      %685 = vdwg.mxu0
      %v687 = vperm.slane %v394, 0
      %v689 = vadd.f32 %v647, %v687
      %v690 = vadd.f32 %v649, %v687
      %v691 = vadd.f32 %v652, %v687
      %v692 = vadd.f32 %v654, %v687
      %v693 = vadd.f32 %v657, %v687
      %v694 = vadd.f32 %v659, %v687
      %v695 = vadd.f32 %v662, %v687
      %v696 = vadd.f32 %v664, %v687
      %v697 = vadd.f32 %v667, %v687
      %v698 = vadd.f32 %v669, %v687
      %v699 = vadd.f32 %v672, %v687
      %v700 = vadd.f32 %v674, %v687
      %v701 = vadd.f32 %v677, %v687
      %v702 = vadd.f32 %v679, %v687
      %v703 = vadd.f32 %v682, %v687
      %v704 = vadd.f32 %v684, %v687
      %v705 = vmax.f32 %v689, 0.0
      %v706 = vmax.f32 %v690, 0.0
      %v707 = vmax.f32 %v691, 0.0
      %v708 = vmax.f32 %v692, 0.0
      %v709 = vmax.f32 %v693, 0.0
      %v710 = vmax.f32 %v694, 0.0
      %v711 = vmax.f32 %v695, 0.0
      %v712 = vmax.f32 %v696, 0.0
      %v713 = vmax.f32 %v697, 0.0
      %v714 = vmax.f32 %v698, 0.0
      %v715 = vmax.f32 %v699, 0.0
      %v716 = vmax.f32 %v700, 0.0
      %v717 = vmax.f32 %v701, 0.0
      %v718 = vmax.f32 %v702, 0.0
      %v719 = vmax.f32 %v703, 0.0
      %v720 = vmax.f32 %v704, 0.0
      %v721 = vld [vmem:[%s4] sm:$0xff]
      %v722 = vld [vmem:[%s4 + $0x8] sm:$0xff]
      %v723 = vld [vmem:[%s4 + $0x10] sm:$0xff]
      %v724 = vld [vmem:[%s4 + $0x18] sm:$0xff]
      %v725 = vld [vmem:[%s4 + $0x20] sm:$0xff]
      %v726 = vld [vmem:[%s4 + $0x28] sm:$0xff]
      %v727 = vld [vmem:[%s4 + $0x30] sm:$0xff]
      %v728 = vld [vmem:[%s4 + $0x38] sm:$0xff]
      %v729 = vld [vmem:[%s4 + $0x40] sm:$0xff]
      %v730 = vld [vmem:[%s4 + $0x48] sm:$0xff]
      %v731 = vld [vmem:[%s4 + $0x50] sm:$0xff]
      %v732 = vld [vmem:[%s4 + $0x58] sm:$0xff]
      %v733 = vld [vmem:[%s4 + $0x60] sm:$0xff]
      %v734 = vld [vmem:[%s4 + $0x68] sm:$0xff]
      %v735 = vld [vmem:[%s4 + $0x70] sm:$0xff]
      %v736 = vld [vmem:[%s4 + $0x78] sm:$0xff]
      %v737 = vld [vmem:[%s5] sm:$0x1]
      %v738 = vpack.c.bf16 %v706, %v705
      %v739 = vpack.c.bf16 %v708, %v707
      %v740 = vpack.c.bf16 %v710, %v709
      %v741 = vpack.c.bf16 %v712, %v711
      %v742 = vpack.c.bf16 %v714, %v713
      %v743 = vpack.c.bf16 %v716, %v715
      %v744 = vpack.c.bf16 %v718, %v717
      %v745 = vpack.c.bf16 %v720, %v719
      %v762 = vunpack.c.l.b16 %v721
      %v763 = vunpack.c.h.b16 %v721
      %v764 = vunpack.c.l.b16 %v722
      %v765 = vunpack.c.h.b16 %v722
      %v766 = vunpack.c.l.b16 %v723
      %v767 = vunpack.c.h.b16 %v723
      %v768 = vunpack.c.l.b16 %v724
      %v769 = vunpack.c.h.b16 %v724
      %v770 = vunpack.c.l.b16 %v725
      %v771 = vunpack.c.h.b16 %v725
      %v772 = vunpack.c.l.b16 %v726
      %v773 = vunpack.c.h.b16 %v726
      %v774 = vunpack.c.l.b16 %v727
      %v775 = vunpack.c.h.b16 %v727
      %v776 = vunpack.c.l.b16 %v728
      %v777 = vunpack.c.h.b16 %v728
      %v778 = vunpack.c.l.b16 %v729
      %v779 = vunpack.c.h.b16 %v729
      %v780 = vunpack.c.l.b16 %v730
      %v781 = vunpack.c.h.b16 %v730
      %v782 = vunpack.c.l.b16 %v731
      %v783 = vunpack.c.h.b16 %v731
      %v784 = vunpack.c.l.b16 %v732
      %v785 = vunpack.c.h.b16 %v732
      %v786 = vunpack.c.l.b16 %v733
      %v787 = vunpack.c.h.b16 %v733
      %v788 = vunpack.c.l.b16 %v734
      %v789 = vunpack.c.h.b16 %v734
      %v790 = vunpack.c.l.b16 %v735
      %v791 = vunpack.c.h.b16 %v735
      %v792 = vunpack.c.l.b16 %v736
      %v793 = vunpack.c.h.b16 %v736
      %v794 = vpack.c.b16 %v764, %v762
      %v795 = vpack.c.b16 %v765, %v763
      %v796 = vpack.c.b16 %v768, %v766
      %v797 = vpack.c.b16 %v769, %v767
      %v798 = vpack.c.b16 %v772, %v770
      %v799 = vpack.c.b16 %v773, %v771
      %v800 = vpack.c.b16 %v776, %v774
      %v801 = vpack.c.b16 %v777, %v775
      %v802 = vpack.c.b16 %v780, %v778
      %v803 = vpack.c.b16 %v781, %v779
      %v804 = vpack.c.b16 %v784, %v782
      %v805 = vpack.c.b16 %v785, %v783
      %v806 = vpack.c.b16 %v788, %v786
      %v807 = vpack.c.b16 %v789, %v787
      %v808 = vpack.c.b16 %v792, %v790
      %v809 = vpack.c.b16 %v793, %v791
      %826 = vmatpush.bf16.msra.mxu0 %v808
      %827 = vmatpush.bf16.msra.mxu0 %v806
      %828 = vmatpush.bf16.msra.mxu0 %v804
      %829 = vmatpush.bf16.msra.mxu0 %v802
      %830 = vmatpush.bf16.msra.mxu0 %v800
      %831 = vmatpush.bf16.msra.mxu0 %v798
      %832 = vmatpush.bf16.msra.mxu0 %v796
      %833 = vmatpush.bf16.msra.mxu0 %v794
      %834 = vmatmul.bf16.gmra.mxu0 %v738
      %v835 = vpop.f32.mrf.mxu0
      %v836 = vadd.f32 0.0, %v835
      %v837 = vpop.f32.mrf.mxu0
      %v838 = vadd.f32 0.0, %v837
      %839 = vmatmul.bf16.gmra.mxu0 %v739
      %v840 = vpop.f32.mrf.mxu0
      %v841 = vadd.f32 0.0, %v840
      %v842 = vpop.f32.mrf.mxu0
      %v843 = vadd.f32 0.0, %v842
      %844 = vmatmul.bf16.gmra.mxu0 %v740
      %v845 = vpop.f32.mrf.mxu0
      %v846 = vadd.f32 0.0, %v845
      %v847 = vpop.f32.mrf.mxu0
      %v848 = vadd.f32 0.0, %v847
      %849 = vmatmul.bf16.gmra.mxu0 %v741
      %v850 = vpop.f32.mrf.mxu0
      %v851 = vadd.f32 0.0, %v850
      %v852 = vpop.f32.mrf.mxu0
      %v853 = vadd.f32 0.0, %v852
      %854 = vmatmul.bf16.gmra.mxu0 %v742
      %v855 = vpop.f32.mrf.mxu0
      %v856 = vadd.f32 0.0, %v855
      %v857 = vpop.f32.mrf.mxu0
      %v858 = vadd.f32 0.0, %v857
      %859 = vmatmul.bf16.gmra.mxu0 %v743
      %v860 = vpop.f32.mrf.mxu0
      %v861 = vadd.f32 0.0, %v860
      %v862 = vpop.f32.mrf.mxu0
      %v863 = vadd.f32 0.0, %v862
      %864 = vmatmul.bf16.gmra.mxu0 %v744
      %v865 = vpop.f32.mrf.mxu0
      %v866 = vadd.f32 0.0, %v865
      %v867 = vpop.f32.mrf.mxu0
      %v868 = vadd.f32 0.0, %v867
      %869 = vmatmul.bf16.gmra.mxu0 %v745
      %v870 = vpop.f32.mrf.mxu0
      %v871 = vadd.f32 0.0, %v870
      %v872 = vpop.f32.mrf.mxu0
      %v873 = vadd.f32 0.0, %v872
      %874 = vdwg.mxu0
      %875 = vmatpush.bf16.msra.mxu0 %v809
      %876 = vmatpush.bf16.msra.mxu0 %v807
      %877 = vmatpush.bf16.msra.mxu0 %v805
      %878 = vmatpush.bf16.msra.mxu0 %v803
      %879 = vmatpush.bf16.msra.mxu0 %v801
      %880 = vmatpush.bf16.msra.mxu0 %v799
      %881 = vmatpush.bf16.msra.mxu0 %v797
      %882 = vmatpush.bf16.msra.mxu0 %v795
      %883 = vmatmul.bf16.gmra.mxu0 %v738
      %v884 = vpop.f32.mrf.mxu0
      %v885 = vadd.f32 0.0, %v884
      %v886 = vpop.f32.mrf.mxu0
      %v887 = vadd.f32 0.0, %v886
      %888 = vmatmul.bf16.gmra.mxu0 %v739
      %v889 = vpop.f32.mrf.mxu0
      %v890 = vadd.f32 0.0, %v889
      %v891 = vpop.f32.mrf.mxu0
      %v892 = vadd.f32 0.0, %v891
      %893 = vmatmul.bf16.gmra.mxu0 %v740
      %v894 = vpop.f32.mrf.mxu0
      %v895 = vadd.f32 0.0, %v894
      %v896 = vpop.f32.mrf.mxu0
      %v897 = vadd.f32 0.0, %v896
      %898 = vmatmul.bf16.gmra.mxu0 %v741
      %v899 = vpop.f32.mrf.mxu0
      %v900 = vadd.f32 0.0, %v899
      %v901 = vpop.f32.mrf.mxu0
      %v902 = vadd.f32 0.0, %v901
      %903 = vmatmul.bf16.gmra.mxu0 %v742
      %v904 = vpop.f32.mrf.mxu0
      %v905 = vadd.f32 0.0, %v904
      %v906 = vpop.f32.mrf.mxu0
      %v907 = vadd.f32 0.0, %v906
      %908 = vmatmul.bf16.gmra.mxu0 %v743
      %v909 = vpop.f32.mrf.mxu0
      %v910 = vadd.f32 0.0, %v909
      %v911 = vpop.f32.mrf.mxu0
      %v912 = vadd.f32 0.0, %v911
      %913 = vmatmul.bf16.gmra.mxu0 %v744
      %v914 = vpop.f32.mrf.mxu0
      %v915 = vadd.f32 0.0, %v914
      %v916 = vpop.f32.mrf.mxu0
      %v917 = vadd.f32 0.0, %v916
      %918 = vmatmul.bf16.gmra.mxu0 %v745
      %v919 = vpop.f32.mrf.mxu0
      %v920 = vadd.f32 0.0, %v919
      %v921 = vpop.f32.mrf.mxu0
      %v922 = vadd.f32 0.0, %v921
      %923 = vdwg.mxu0
      %v924 = vpack.c.bf16 %v838, %v836
      %v925 = vpack.c.bf16 %v843, %v841
      %v926 = vpack.c.bf16 %v848, %v846
      %v927 = vpack.c.bf16 %v853, %v851
      %v928 = vpack.c.bf16 %v858, %v856
      %v929 = vpack.c.bf16 %v863, %v861
      %v930 = vpack.c.bf16 %v868, %v866
      %v931 = vpack.c.bf16 %v873, %v871
      %932 = vmatpush.bf16.msra.mxu0 %v931
      %933 = vmatpush.bf16.msra.mxu0 %v930
      %934 = vmatpush.bf16.msra.mxu0 %v929
      %935 = vmatpush.bf16.msra.mxu0 %v928
      %936 = vmatpush.bf16.msra.mxu0 %v927
      %937 = vmatpush.bf16.msra.mxu0 %v926
      %938 = vmatpush.bf16.msra.mxu0 %v925
      %939 = vmatpush.bf16.msra.mxu0 %v924
      %940 = vmatmul.bf16.gmra.mxu0 %v621
      %v941 = vpop.f32.mrf.mxu0
      %v942 = vadd.f32 %v885, %v941
      %v943 = vpop.f32.mrf.mxu0
      %v944 = vadd.f32 %v887, %v943
      %945 = vmatmul.bf16.gmra.mxu0 %v622
      %v946 = vpop.f32.mrf.mxu0
      %v947 = vadd.f32 %v890, %v946
      %v948 = vpop.f32.mrf.mxu0
      %v949 = vadd.f32 %v892, %v948
      %950 = vmatmul.bf16.gmra.mxu0 %v623
      %v951 = vpop.f32.mrf.mxu0
      %v952 = vadd.f32 %v895, %v951
      %v953 = vpop.f32.mrf.mxu0
      %v954 = vadd.f32 %v897, %v953
      %955 = vmatmul.bf16.gmra.mxu0 %v624
      %v956 = vpop.f32.mrf.mxu0
      %v957 = vadd.f32 %v900, %v956
      %v958 = vpop.f32.mrf.mxu0
      %v959 = vadd.f32 %v902, %v958
      %960 = vmatmul.bf16.gmra.mxu0 %v625
      %v961 = vpop.f32.mrf.mxu0
      %v962 = vadd.f32 %v905, %v961
      %v963 = vpop.f32.mrf.mxu0
      %v964 = vadd.f32 %v907, %v963
      %965 = vmatmul.bf16.gmra.mxu0 %v626
      %v966 = vpop.f32.mrf.mxu0
      %v967 = vadd.f32 %v910, %v966
      %v968 = vpop.f32.mrf.mxu0
      %v969 = vadd.f32 %v912, %v968
      %970 = vmatmul.bf16.gmra.mxu0 %v627
      %v971 = vpop.f32.mrf.mxu0
      %v972 = vadd.f32 %v915, %v971
      %v973 = vpop.f32.mrf.mxu0
      %v974 = vadd.f32 %v917, %v973
      %975 = vmatmul.bf16.gmra.mxu0 %v628
      %v976 = vpop.f32.mrf.mxu0
      %v977 = vadd.f32 %v920, %v976
      %v978 = vpop.f32.mrf.mxu0
      %v979 = vadd.f32 %v922, %v978
      %980 = vdwg.mxu0
      %v982 = vperm.slane %v737, 0
      %v984 = vadd.f32 %v942, %v982
      %v985 = vadd.f32 %v944, %v982
      %v986 = vadd.f32 %v947, %v982
      %v987 = vadd.f32 %v949, %v982
      %v988 = vadd.f32 %v952, %v982
      %v989 = vadd.f32 %v954, %v982
      %v990 = vadd.f32 %v957, %v982
      %v991 = vadd.f32 %v959, %v982
      %v992 = vadd.f32 %v962, %v982
      %v993 = vadd.f32 %v964, %v982
      %v994 = vadd.f32 %v967, %v982
      %v995 = vadd.f32 %v969, %v982
      %v996 = vadd.f32 %v972, %v982
      %v997 = vadd.f32 %v974, %v982
      %v998 = vadd.f32 %v977, %v982
      %v999 = vadd.f32 %v979, %v982
      %v1000 = vmax.f32 %v984, 0.0
      %v1001 = vmax.f32 %v985, 0.0
      %v1002 = vmax.f32 %v986, 0.0
      %v1003 = vmax.f32 %v987, 0.0
      %v1004 = vmax.f32 %v988, 0.0
      %v1005 = vmax.f32 %v989, 0.0
      %v1006 = vmax.f32 %v990, 0.0
      %v1007 = vmax.f32 %v991, 0.0
      %v1008 = vmax.f32 %v992, 0.0
      %v1009 = vmax.f32 %v993, 0.0
      %v1010 = vmax.f32 %v994, 0.0
      %v1011 = vmax.f32 %v995, 0.0
      %v1012 = vmax.f32 %v996, 0.0
      %v1013 = vmax.f32 %v997, 0.0
      %v1014 = vmax.f32 %v998, 0.0
      %v1015 = vmax.f32 %v999, 0.0
      %s1016 = scalar_lea.vmem %s4, 128
      %v1017 = vld [vmem:[%s1016] sm:$0xff]
      %v1018 = vld [vmem:[%s1016 + $0x8] sm:$0xff]
      %v1019 = vld [vmem:[%s1016 + $0x10] sm:$0xff]
      %v1020 = vld [vmem:[%s1016 + $0x18] sm:$0xff]
      %v1021 = vld [vmem:[%s1016 + $0x20] sm:$0xff]
      %v1022 = vld [vmem:[%s1016 + $0x28] sm:$0xff]
      %v1023 = vld [vmem:[%s1016 + $0x30] sm:$0xff]
      %v1024 = vld [vmem:[%s1016 + $0x38] sm:$0xff]
      %v1025 = vld [vmem:[%s1016 + $0x40] sm:$0xff]
      %v1026 = vld [vmem:[%s1016 + $0x48] sm:$0xff]
      %v1027 = vld [vmem:[%s1016 + $0x50] sm:$0xff]
      %v1028 = vld [vmem:[%s1016 + $0x58] sm:$0xff]
      %v1029 = vld [vmem:[%s1016 + $0x60] sm:$0xff]
      %v1030 = vld [vmem:[%s1016 + $0x68] sm:$0xff]
      %v1031 = vld [vmem:[%s1016 + $0x70] sm:$0xff]
      %v1032 = vld [vmem:[%s1016 + $0x78] sm:$0xff]
      %s1033 = scalar_lea.vmem %s5, 1
      %v1034 = vld [vmem:[%s1033] sm:$0x1]
      %v1035 = vpack.c.bf16 %v1001, %v1000
      %v1036 = vpack.c.bf16 %v1003, %v1002
      %v1037 = vpack.c.bf16 %v1005, %v1004
      %v1038 = vpack.c.bf16 %v1007, %v1006
      %v1039 = vpack.c.bf16 %v1009, %v1008
      %v1040 = vpack.c.bf16 %v1011, %v1010
      %v1041 = vpack.c.bf16 %v1013, %v1012
      %v1042 = vpack.c.bf16 %v1015, %v1014
      %v1059 = vunpack.c.l.b16 %v1017
      %v1060 = vunpack.c.h.b16 %v1017
      %v1061 = vunpack.c.l.b16 %v1018
      %v1062 = vunpack.c.h.b16 %v1018
      %v1063 = vunpack.c.l.b16 %v1019
      %v1064 = vunpack.c.h.b16 %v1019
      %v1065 = vunpack.c.l.b16 %v1020
      %v1066 = vunpack.c.h.b16 %v1020
      %v1067 = vunpack.c.l.b16 %v1021
      %v1068 = vunpack.c.h.b16 %v1021
      %v1069 = vunpack.c.l.b16 %v1022
      %v1070 = vunpack.c.h.b16 %v1022
      %v1071 = vunpack.c.l.b16 %v1023
      %v1072 = vunpack.c.h.b16 %v1023
      %v1073 = vunpack.c.l.b16 %v1024
      %v1074 = vunpack.c.h.b16 %v1024
      %v1075 = vunpack.c.l.b16 %v1025
      %v1076 = vunpack.c.h.b16 %v1025
      %v1077 = vunpack.c.l.b16 %v1026
      %v1078 = vunpack.c.h.b16 %v1026
      %v1079 = vunpack.c.l.b16 %v1027
      %v1080 = vunpack.c.h.b16 %v1027
      %v1081 = vunpack.c.l.b16 %v1028
      %v1082 = vunpack.c.h.b16 %v1028
      %v1083 = vunpack.c.l.b16 %v1029
      %v1084 = vunpack.c.h.b16 %v1029
      %v1085 = vunpack.c.l.b16 %v1030
      %v1086 = vunpack.c.h.b16 %v1030
      %v1087 = vunpack.c.l.b16 %v1031
      %v1088 = vunpack.c.h.b16 %v1031
      %v1089 = vunpack.c.l.b16 %v1032
      %v1090 = vunpack.c.h.b16 %v1032
      %v1091 = vpack.c.b16 %v1061, %v1059
      %v1092 = vpack.c.b16 %v1062, %v1060
      %v1093 = vpack.c.b16 %v1065, %v1063
      %v1094 = vpack.c.b16 %v1066, %v1064
      %v1095 = vpack.c.b16 %v1069, %v1067
      %v1096 = vpack.c.b16 %v1070, %v1068
      %v1097 = vpack.c.b16 %v1073, %v1071
      %v1098 = vpack.c.b16 %v1074, %v1072
      %v1099 = vpack.c.b16 %v1077, %v1075
      %v1100 = vpack.c.b16 %v1078, %v1076
      %v1101 = vpack.c.b16 %v1081, %v1079
      %v1102 = vpack.c.b16 %v1082, %v1080
      %v1103 = vpack.c.b16 %v1085, %v1083
      %v1104 = vpack.c.b16 %v1086, %v1084
      %v1105 = vpack.c.b16 %v1089, %v1087
      %v1106 = vpack.c.b16 %v1090, %v1088
      %1123 = vmatpush.bf16.msra.mxu0 %v1105
      %1124 = vmatpush.bf16.msra.mxu0 %v1103
      %1125 = vmatpush.bf16.msra.mxu0 %v1101
      %1126 = vmatpush.bf16.msra.mxu0 %v1099
      %1127 = vmatpush.bf16.msra.mxu0 %v1097
      %1128 = vmatpush.bf16.msra.mxu0 %v1095
      %1129 = vmatpush.bf16.msra.mxu0 %v1093
      %1130 = vmatpush.bf16.msra.mxu0 %v1091
      %1131 = vmatmul.bf16.gmra.mxu0 %v1035
      %v1132 = vpop.f32.mrf.mxu0
      %v1133 = vadd.f32 0.0, %v1132
      %v1134 = vpop.f32.mrf.mxu0
      %v1135 = vadd.f32 0.0, %v1134
      %1136 = vmatmul.bf16.gmra.mxu0 %v1036
      %v1137 = vpop.f32.mrf.mxu0
      %v1138 = vadd.f32 0.0, %v1137
      %v1139 = vpop.f32.mrf.mxu0
      %v1140 = vadd.f32 0.0, %v1139
      %1141 = vmatmul.bf16.gmra.mxu0 %v1037
      %v1142 = vpop.f32.mrf.mxu0
      %v1143 = vadd.f32 0.0, %v1142
      %v1144 = vpop.f32.mrf.mxu0
      %v1145 = vadd.f32 0.0, %v1144
      %1146 = vmatmul.bf16.gmra.mxu0 %v1038
      %v1147 = vpop.f32.mrf.mxu0
      %v1148 = vadd.f32 0.0, %v1147
      %v1149 = vpop.f32.mrf.mxu0
      %v1150 = vadd.f32 0.0, %v1149
      %1151 = vmatmul.bf16.gmra.mxu0 %v1039
      %v1152 = vpop.f32.mrf.mxu0
      %v1153 = vadd.f32 0.0, %v1152
      %v1154 = vpop.f32.mrf.mxu0
      %v1155 = vadd.f32 0.0, %v1154
      %1156 = vmatmul.bf16.gmra.mxu0 %v1040
      %v1157 = vpop.f32.mrf.mxu0
      %v1158 = vadd.f32 0.0, %v1157
      %v1159 = vpop.f32.mrf.mxu0
      %v1160 = vadd.f32 0.0, %v1159
      %1161 = vmatmul.bf16.gmra.mxu0 %v1041
      %v1162 = vpop.f32.mrf.mxu0
      %v1163 = vadd.f32 0.0, %v1162
      %v1164 = vpop.f32.mrf.mxu0
      %v1165 = vadd.f32 0.0, %v1164
      %1166 = vmatmul.bf16.gmra.mxu0 %v1042
      %v1167 = vpop.f32.mrf.mxu0
      %v1168 = vadd.f32 0.0, %v1167
      %v1169 = vpop.f32.mrf.mxu0
      %v1170 = vadd.f32 0.0, %v1169
      %1171 = vdwg.mxu0
      %1172 = vmatpush.bf16.msra.mxu0 %v1106
      %1173 = vmatpush.bf16.msra.mxu0 %v1104
      %1174 = vmatpush.bf16.msra.mxu0 %v1102
      %1175 = vmatpush.bf16.msra.mxu0 %v1100
      %1176 = vmatpush.bf16.msra.mxu0 %v1098
      %1177 = vmatpush.bf16.msra.mxu0 %v1096
      %1178 = vmatpush.bf16.msra.mxu0 %v1094
      %1179 = vmatpush.bf16.msra.mxu0 %v1092
      %1180 = vmatmul.bf16.gmra.mxu0 %v1035
      %v1181 = vpop.f32.mrf.mxu0
      %v1182 = vadd.f32 0.0, %v1181
      %v1183 = vpop.f32.mrf.mxu0
      %v1184 = vadd.f32 0.0, %v1183
      %1185 = vmatmul.bf16.gmra.mxu0 %v1036
      %v1186 = vpop.f32.mrf.mxu0
      %v1187 = vadd.f32 0.0, %v1186
      %v1188 = vpop.f32.mrf.mxu0
      %v1189 = vadd.f32 0.0, %v1188
      %1190 = vmatmul.bf16.gmra.mxu0 %v1037
      %v1191 = vpop.f32.mrf.mxu0
      %v1192 = vadd.f32 0.0, %v1191
      %v1193 = vpop.f32.mrf.mxu0
      %v1194 = vadd.f32 0.0, %v1193
      %1195 = vmatmul.bf16.gmra.mxu0 %v1038
      %v1196 = vpop.f32.mrf.mxu0
      %v1197 = vadd.f32 0.0, %v1196
      %v1198 = vpop.f32.mrf.mxu0
      %v1199 = vadd.f32 0.0, %v1198
      %1200 = vmatmul.bf16.gmra.mxu0 %v1039
      %v1201 = vpop.f32.mrf.mxu0
      %v1202 = vadd.f32 0.0, %v1201
      %v1203 = vpop.f32.mrf.mxu0
      %v1204 = vadd.f32 0.0, %v1203
      %1205 = vmatmul.bf16.gmra.mxu0 %v1040
      %v1206 = vpop.f32.mrf.mxu0
      %v1207 = vadd.f32 0.0, %v1206
      %v1208 = vpop.f32.mrf.mxu0
      %v1209 = vadd.f32 0.0, %v1208
      %1210 = vmatmul.bf16.gmra.mxu0 %v1041
      %v1211 = vpop.f32.mrf.mxu0
      %v1212 = vadd.f32 0.0, %v1211
      %v1213 = vpop.f32.mrf.mxu0
      %v1214 = vadd.f32 0.0, %v1213
      %1215 = vmatmul.bf16.gmra.mxu0 %v1042
      %v1216 = vpop.f32.mrf.mxu0
      %v1217 = vadd.f32 0.0, %v1216
      %v1218 = vpop.f32.mrf.mxu0
      %v1219 = vadd.f32 0.0, %v1218
      %1220 = vdwg.mxu0
      %v1221 = vpack.c.bf16 %v1135, %v1133
      %v1222 = vpack.c.bf16 %v1140, %v1138
      %v1223 = vpack.c.bf16 %v1145, %v1143
      %v1224 = vpack.c.bf16 %v1150, %v1148
      %v1225 = vpack.c.bf16 %v1155, %v1153
      %v1226 = vpack.c.bf16 %v1160, %v1158
      %v1227 = vpack.c.bf16 %v1165, %v1163
      %v1228 = vpack.c.bf16 %v1170, %v1168
      %1229 = vmatpush.bf16.msra.mxu0 %v1228
      %1230 = vmatpush.bf16.msra.mxu0 %v1227
      %1231 = vmatpush.bf16.msra.mxu0 %v1226
      %1232 = vmatpush.bf16.msra.mxu0 %v1225
      %1233 = vmatpush.bf16.msra.mxu0 %v1224
      %1234 = vmatpush.bf16.msra.mxu0 %v1223
      %1235 = vmatpush.bf16.msra.mxu0 %v1222
      %1236 = vmatpush.bf16.msra.mxu0 %v1221
      %1237 = vmatmul.bf16.gmra.mxu0 %v621
      %v1238 = vpop.f32.mrf.mxu0
      %v1239 = vadd.f32 %v1182, %v1238
      %v1240 = vpop.f32.mrf.mxu0
      %v1241 = vadd.f32 %v1184, %v1240
      %1242 = vmatmul.bf16.gmra.mxu0 %v622
      %v1243 = vpop.f32.mrf.mxu0
      %v1244 = vadd.f32 %v1187, %v1243
      %v1245 = vpop.f32.mrf.mxu0
      %v1246 = vadd.f32 %v1189, %v1245
      %1247 = vmatmul.bf16.gmra.mxu0 %v623
      %v1248 = vpop.f32.mrf.mxu0
      %v1249 = vadd.f32 %v1192, %v1248
      %v1250 = vpop.f32.mrf.mxu0
      %v1251 = vadd.f32 %v1194, %v1250
      %1252 = vmatmul.bf16.gmra.mxu0 %v624
      %v1253 = vpop.f32.mrf.mxu0
      %v1254 = vadd.f32 %v1197, %v1253
      %v1255 = vpop.f32.mrf.mxu0
      %v1256 = vadd.f32 %v1199, %v1255
      %1257 = vmatmul.bf16.gmra.mxu0 %v625
      %v1258 = vpop.f32.mrf.mxu0
      %v1259 = vadd.f32 %v1202, %v1258
      %v1260 = vpop.f32.mrf.mxu0
      %v1261 = vadd.f32 %v1204, %v1260
      %1262 = vmatmul.bf16.gmra.mxu0 %v626
      %v1263 = vpop.f32.mrf.mxu0
      %v1264 = vadd.f32 %v1207, %v1263
      %v1265 = vpop.f32.mrf.mxu0
      %v1266 = vadd.f32 %v1209, %v1265
      %1267 = vmatmul.bf16.gmra.mxu0 %v627
      %v1268 = vpop.f32.mrf.mxu0
      %v1269 = vadd.f32 %v1212, %v1268
      %v1270 = vpop.f32.mrf.mxu0
      %v1271 = vadd.f32 %v1214, %v1270
      %1272 = vmatmul.bf16.gmra.mxu0 %v628
      %v1273 = vpop.f32.mrf.mxu0
      %v1274 = vadd.f32 %v1217, %v1273
      %v1275 = vpop.f32.mrf.mxu0
      %v1276 = vadd.f32 %v1219, %v1275
      %1277 = vdwg.mxu0
      %v1279 = vperm.slane %v1034, 0
      %v1281 = vadd.f32 %v1239, %v1279
      %v1282 = vadd.f32 %v1241, %v1279
      %v1283 = vadd.f32 %v1244, %v1279
      %v1284 = vadd.f32 %v1246, %v1279
      %v1285 = vadd.f32 %v1249, %v1279
      %v1286 = vadd.f32 %v1251, %v1279
      %v1287 = vadd.f32 %v1254, %v1279
      %v1288 = vadd.f32 %v1256, %v1279
      %v1289 = vadd.f32 %v1259, %v1279
      %v1290 = vadd.f32 %v1261, %v1279
      %v1291 = vadd.f32 %v1264, %v1279
      %v1292 = vadd.f32 %v1266, %v1279
      %v1293 = vadd.f32 %v1269, %v1279
      %v1294 = vadd.f32 %v1271, %v1279
      %v1295 = vadd.f32 %v1274, %v1279
      %v1296 = vadd.f32 %v1276, %v1279
      %v1297 = vmax.f32 %v1281, 0.0
      %v1298 = vmax.f32 %v1282, 0.0
      %v1299 = vmax.f32 %v1283, 0.0
      %v1300 = vmax.f32 %v1284, 0.0
      %v1301 = vmax.f32 %v1285, 0.0
      %v1302 = vmax.f32 %v1286, 0.0
      %v1303 = vmax.f32 %v1287, 0.0
      %v1304 = vmax.f32 %v1288, 0.0
      %v1305 = vmax.f32 %v1289, 0.0
      %v1306 = vmax.f32 %v1290, 0.0
      %v1307 = vmax.f32 %v1291, 0.0
      %v1308 = vmax.f32 %v1292, 0.0
      %v1309 = vmax.f32 %v1293, 0.0
      %v1310 = vmax.f32 %v1294, 0.0
      %v1311 = vmax.f32 %v1295, 0.0
      %v1312 = vmax.f32 %v1296, 0.0
      %v1313 = vadd.f32 %v705, %v1297
      %v1314 = vadd.f32 %v706, %v1298
      %v1315 = vadd.f32 %v707, %v1299
      %v1316 = vadd.f32 %v708, %v1300
      %v1317 = vadd.f32 %v709, %v1301
      %v1318 = vadd.f32 %v710, %v1302
      %v1319 = vadd.f32 %v711, %v1303
      %v1320 = vadd.f32 %v712, %v1304
      %v1321 = vadd.f32 %v713, %v1305
      %v1322 = vadd.f32 %v714, %v1306
      %v1323 = vadd.f32 %v715, %v1307
      %v1324 = vadd.f32 %v716, %v1308
      %v1325 = vadd.f32 %v717, %v1309
      %v1326 = vadd.f32 %v718, %v1310
      %v1327 = vadd.f32 %v719, %v1311
      %v1328 = vadd.f32 %v720, %v1312
      %v1329 = vmul.f32 %v1313, 0.5
      %v1330 = vmul.f32 %v1314, 0.5
      %v1331 = vmul.f32 %v1315, 0.5
      %v1332 = vmul.f32 %v1316, 0.5
      %v1333 = vmul.f32 %v1317, 0.5
      %v1334 = vmul.f32 %v1318, 0.5
      %v1335 = vmul.f32 %v1319, 0.5
      %v1336 = vmul.f32 %v1320, 0.5
      %v1337 = vmul.f32 %v1321, 0.5
      %v1338 = vmul.f32 %v1322, 0.5
      %v1339 = vmul.f32 %v1323, 0.5
      %v1340 = vmul.f32 %v1324, 0.5
      %v1341 = vmul.f32 %v1325, 0.5
      %v1342 = vmul.f32 %v1326, 0.5
      %v1343 = vmul.f32 %v1327, 0.5
      %v1344 = vmul.f32 %v1328, 0.5
      %s1345 = scalar_lea.vmem %s4, 256
      %v1346 = vld [vmem:[%s1345] sm:$0xff]
      %v1347 = vld [vmem:[%s1345 + $0x8] sm:$0xff]
      %v1348 = vld [vmem:[%s1345 + $0x10] sm:$0xff]
      %v1349 = vld [vmem:[%s1345 + $0x18] sm:$0xff]
      %v1350 = vld [vmem:[%s1345 + $0x20] sm:$0xff]
      %v1351 = vld [vmem:[%s1345 + $0x28] sm:$0xff]
      %v1352 = vld [vmem:[%s1345 + $0x30] sm:$0xff]
      %v1353 = vld [vmem:[%s1345 + $0x38] sm:$0xff]
      %v1354 = vld [vmem:[%s1345 + $0x40] sm:$0xff]
      %v1355 = vld [vmem:[%s1345 + $0x48] sm:$0xff]
      %v1356 = vld [vmem:[%s1345 + $0x50] sm:$0xff]
      %v1357 = vld [vmem:[%s1345 + $0x58] sm:$0xff]
      %v1358 = vld [vmem:[%s1345 + $0x60] sm:$0xff]
      %v1359 = vld [vmem:[%s1345 + $0x68] sm:$0xff]
      %v1360 = vld [vmem:[%s1345 + $0x70] sm:$0xff]
      %v1361 = vld [vmem:[%s1345 + $0x78] sm:$0xff]
      %s1362 = scalar_lea.vmem %s5, 2
      %v1363 = vld [vmem:[%s1362] sm:$0x1]
      %v1364 = vpack.c.bf16 %v1330, %v1329
      %v1365 = vpack.c.bf16 %v1332, %v1331
      %v1366 = vpack.c.bf16 %v1334, %v1333
      %v1367 = vpack.c.bf16 %v1336, %v1335
      %v1368 = vpack.c.bf16 %v1338, %v1337
      %v1369 = vpack.c.bf16 %v1340, %v1339
      %v1370 = vpack.c.bf16 %v1342, %v1341
      %v1371 = vpack.c.bf16 %v1344, %v1343
      %v1388 = vunpack.c.l.b16 %v1346
      %v1389 = vunpack.c.h.b16 %v1346
      %v1390 = vunpack.c.l.b16 %v1347
      %v1391 = vunpack.c.h.b16 %v1347
      %v1392 = vunpack.c.l.b16 %v1348
      %v1393 = vunpack.c.h.b16 %v1348
      %v1394 = vunpack.c.l.b16 %v1349
      %v1395 = vunpack.c.h.b16 %v1349
      %v1396 = vunpack.c.l.b16 %v1350
      %v1397 = vunpack.c.h.b16 %v1350
      %v1398 = vunpack.c.l.b16 %v1351
      %v1399 = vunpack.c.h.b16 %v1351
      %v1400 = vunpack.c.l.b16 %v1352
      %v1401 = vunpack.c.h.b16 %v1352
      %v1402 = vunpack.c.l.b16 %v1353
      %v1403 = vunpack.c.h.b16 %v1353
      %v1404 = vunpack.c.l.b16 %v1354
      %v1405 = vunpack.c.h.b16 %v1354
      %v1406 = vunpack.c.l.b16 %v1355
      %v1407 = vunpack.c.h.b16 %v1355
      %v1408 = vunpack.c.l.b16 %v1356
      %v1409 = vunpack.c.h.b16 %v1356
      %v1410 = vunpack.c.l.b16 %v1357
      %v1411 = vunpack.c.h.b16 %v1357
      %v1412 = vunpack.c.l.b16 %v1358
      %v1413 = vunpack.c.h.b16 %v1358
      %v1414 = vunpack.c.l.b16 %v1359
      %v1415 = vunpack.c.h.b16 %v1359
      %v1416 = vunpack.c.l.b16 %v1360
      %v1417 = vunpack.c.h.b16 %v1360
      %v1418 = vunpack.c.l.b16 %v1361
      %v1419 = vunpack.c.h.b16 %v1361
      %v1420 = vpack.c.b16 %v1390, %v1388
      %v1421 = vpack.c.b16 %v1391, %v1389
      %v1422 = vpack.c.b16 %v1394, %v1392
      %v1423 = vpack.c.b16 %v1395, %v1393
      %v1424 = vpack.c.b16 %v1398, %v1396
      %v1425 = vpack.c.b16 %v1399, %v1397
      %v1426 = vpack.c.b16 %v1402, %v1400
      %v1427 = vpack.c.b16 %v1403, %v1401
      %v1428 = vpack.c.b16 %v1406, %v1404
      %v1429 = vpack.c.b16 %v1407, %v1405
      %v1430 = vpack.c.b16 %v1410, %v1408
      %v1431 = vpack.c.b16 %v1411, %v1409
      %v1432 = vpack.c.b16 %v1414, %v1412
      %v1433 = vpack.c.b16 %v1415, %v1413
      %v1434 = vpack.c.b16 %v1418, %v1416
      %v1435 = vpack.c.b16 %v1419, %v1417
      %1452 = vmatpush.bf16.msra.mxu0 %v1434
      %1453 = vmatpush.bf16.msra.mxu0 %v1432
      %1454 = vmatpush.bf16.msra.mxu0 %v1430
      %1455 = vmatpush.bf16.msra.mxu0 %v1428
      %1456 = vmatpush.bf16.msra.mxu0 %v1426
      %1457 = vmatpush.bf16.msra.mxu0 %v1424
      %1458 = vmatpush.bf16.msra.mxu0 %v1422
      %1459 = vmatpush.bf16.msra.mxu0 %v1420
      %1460 = vmatmul.bf16.gmra.mxu0 %v1364
      %v1461 = vpop.f32.mrf.mxu0
      %v1462 = vadd.f32 0.0, %v1461
      %v1463 = vpop.f32.mrf.mxu0
      %v1464 = vadd.f32 0.0, %v1463
      %1465 = vmatmul.bf16.gmra.mxu0 %v1365
      %v1466 = vpop.f32.mrf.mxu0
      %v1467 = vadd.f32 0.0, %v1466
      %v1468 = vpop.f32.mrf.mxu0
      %v1469 = vadd.f32 0.0, %v1468
      %1470 = vmatmul.bf16.gmra.mxu0 %v1366
      %v1471 = vpop.f32.mrf.mxu0
      %v1472 = vadd.f32 0.0, %v1471
      %v1473 = vpop.f32.mrf.mxu0
      %v1474 = vadd.f32 0.0, %v1473
      %1475 = vmatmul.bf16.gmra.mxu0 %v1367
      %v1476 = vpop.f32.mrf.mxu0
      %v1477 = vadd.f32 0.0, %v1476
      %v1478 = vpop.f32.mrf.mxu0
      %v1479 = vadd.f32 0.0, %v1478
      %1480 = vmatmul.bf16.gmra.mxu0 %v1368
      %v1481 = vpop.f32.mrf.mxu0
      %v1482 = vadd.f32 0.0, %v1481
      %v1483 = vpop.f32.mrf.mxu0
      %v1484 = vadd.f32 0.0, %v1483
      %1485 = vmatmul.bf16.gmra.mxu0 %v1369
      %v1486 = vpop.f32.mrf.mxu0
      %v1487 = vadd.f32 0.0, %v1486
      %v1488 = vpop.f32.mrf.mxu0
      %v1489 = vadd.f32 0.0, %v1488
      %1490 = vmatmul.bf16.gmra.mxu0 %v1370
      %v1491 = vpop.f32.mrf.mxu0
      %v1492 = vadd.f32 0.0, %v1491
      %v1493 = vpop.f32.mrf.mxu0
      %v1494 = vadd.f32 0.0, %v1493
      %1495 = vmatmul.bf16.gmra.mxu0 %v1371
      %v1496 = vpop.f32.mrf.mxu0
      %v1497 = vadd.f32 0.0, %v1496
      %v1498 = vpop.f32.mrf.mxu0
      %v1499 = vadd.f32 0.0, %v1498
      %1500 = vdwg.mxu0
      %1501 = vmatpush.bf16.msra.mxu0 %v1435
      %1502 = vmatpush.bf16.msra.mxu0 %v1433
      %1503 = vmatpush.bf16.msra.mxu0 %v1431
      %1504 = vmatpush.bf16.msra.mxu0 %v1429
      %1505 = vmatpush.bf16.msra.mxu0 %v1427
      %1506 = vmatpush.bf16.msra.mxu0 %v1425
      %1507 = vmatpush.bf16.msra.mxu0 %v1423
      %1508 = vmatpush.bf16.msra.mxu0 %v1421
      %1509 = vmatmul.bf16.gmra.mxu0 %v1364
      %v1510 = vpop.f32.mrf.mxu0
      %v1511 = vadd.f32 0.0, %v1510
      %v1512 = vpop.f32.mrf.mxu0
      %v1513 = vadd.f32 0.0, %v1512
      %1514 = vmatmul.bf16.gmra.mxu0 %v1365
      %v1515 = vpop.f32.mrf.mxu0
      %v1516 = vadd.f32 0.0, %v1515
      %v1517 = vpop.f32.mrf.mxu0
      %v1518 = vadd.f32 0.0, %v1517
      %1519 = vmatmul.bf16.gmra.mxu0 %v1366
      %v1520 = vpop.f32.mrf.mxu0
      %v1521 = vadd.f32 0.0, %v1520
      %v1522 = vpop.f32.mrf.mxu0
      %v1523 = vadd.f32 0.0, %v1522
      %1524 = vmatmul.bf16.gmra.mxu0 %v1367
      %v1525 = vpop.f32.mrf.mxu0
      %v1526 = vadd.f32 0.0, %v1525
      %v1527 = vpop.f32.mrf.mxu0
      %v1528 = vadd.f32 0.0, %v1527
      %1529 = vmatmul.bf16.gmra.mxu0 %v1368
      %v1530 = vpop.f32.mrf.mxu0
      %v1531 = vadd.f32 0.0, %v1530
      %v1532 = vpop.f32.mrf.mxu0
      %v1533 = vadd.f32 0.0, %v1532
      %1534 = vmatmul.bf16.gmra.mxu0 %v1369
      %v1535 = vpop.f32.mrf.mxu0
      %v1536 = vadd.f32 0.0, %v1535
      %v1537 = vpop.f32.mrf.mxu0
      %v1538 = vadd.f32 0.0, %v1537
      %1539 = vmatmul.bf16.gmra.mxu0 %v1370
      %v1540 = vpop.f32.mrf.mxu0
      %v1541 = vadd.f32 0.0, %v1540
      %v1542 = vpop.f32.mrf.mxu0
      %v1543 = vadd.f32 0.0, %v1542
      %1544 = vmatmul.bf16.gmra.mxu0 %v1371
      %v1545 = vpop.f32.mrf.mxu0
      %v1546 = vadd.f32 0.0, %v1545
      %v1547 = vpop.f32.mrf.mxu0
      %v1548 = vadd.f32 0.0, %v1547
      %1549 = vdwg.mxu0
      %v1550 = vpack.c.bf16 %v1464, %v1462
      %v1551 = vpack.c.bf16 %v1469, %v1467
      %v1552 = vpack.c.bf16 %v1474, %v1472
      %v1553 = vpack.c.bf16 %v1479, %v1477
      %v1554 = vpack.c.bf16 %v1484, %v1482
      %v1555 = vpack.c.bf16 %v1489, %v1487
      %v1556 = vpack.c.bf16 %v1494, %v1492
      %v1557 = vpack.c.bf16 %v1499, %v1497
      %1558 = vmatpush.bf16.msra.mxu0 %v1557
      %1559 = vmatpush.bf16.msra.mxu0 %v1556
      %1560 = vmatpush.bf16.msra.mxu0 %v1555
      %1561 = vmatpush.bf16.msra.mxu0 %v1554
      %1562 = vmatpush.bf16.msra.mxu0 %v1553
      %1563 = vmatpush.bf16.msra.mxu0 %v1552
      %1564 = vmatpush.bf16.msra.mxu0 %v1551
      %1565 = vmatpush.bf16.msra.mxu0 %v1550
      %1566 = vmatmul.bf16.gmra.mxu0 %v621
      %v1567 = vpop.f32.mrf.mxu0
      %v1568 = vadd.f32 %v1511, %v1567
      %v1569 = vpop.f32.mrf.mxu0
      %v1570 = vadd.f32 %v1513, %v1569
      %1571 = vmatmul.bf16.gmra.mxu0 %v622
      %v1572 = vpop.f32.mrf.mxu0
      %v1573 = vadd.f32 %v1516, %v1572
      %v1574 = vpop.f32.mrf.mxu0
      %v1575 = vadd.f32 %v1518, %v1574
      %1576 = vmatmul.bf16.gmra.mxu0 %v623
      %v1577 = vpop.f32.mrf.mxu0
      %v1578 = vadd.f32 %v1521, %v1577
      %v1579 = vpop.f32.mrf.mxu0
      %v1580 = vadd.f32 %v1523, %v1579
      %1581 = vmatmul.bf16.gmra.mxu0 %v624
      %v1582 = vpop.f32.mrf.mxu0
      %v1583 = vadd.f32 %v1526, %v1582
      %v1584 = vpop.f32.mrf.mxu0
      %v1585 = vadd.f32 %v1528, %v1584
      %1586 = vmatmul.bf16.gmra.mxu0 %v625
      %v1587 = vpop.f32.mrf.mxu0
      %v1588 = vadd.f32 %v1531, %v1587
      %v1589 = vpop.f32.mrf.mxu0
      %v1590 = vadd.f32 %v1533, %v1589
      %1591 = vmatmul.bf16.gmra.mxu0 %v626
      %v1592 = vpop.f32.mrf.mxu0
      %v1593 = vadd.f32 %v1536, %v1592
      %v1594 = vpop.f32.mrf.mxu0
      %v1595 = vadd.f32 %v1538, %v1594
      %1596 = vmatmul.bf16.gmra.mxu0 %v627
      %v1597 = vpop.f32.mrf.mxu0
      %v1598 = vadd.f32 %v1541, %v1597
      %v1599 = vpop.f32.mrf.mxu0
      %v1600 = vadd.f32 %v1543, %v1599
      %1601 = vmatmul.bf16.gmra.mxu0 %v628
      %v1602 = vpop.f32.mrf.mxu0
      %v1603 = vadd.f32 %v1546, %v1602
      %v1604 = vpop.f32.mrf.mxu0
      %v1605 = vadd.f32 %v1548, %v1604
      %1606 = vdwg.mxu0
      %v1608 = vperm.slane %v1363, 0
      %v1610 = vadd.f32 %v1568, %v1608
      %v1611 = vadd.f32 %v1570, %v1608
      %v1612 = vadd.f32 %v1573, %v1608
      %v1613 = vadd.f32 %v1575, %v1608
      %v1614 = vadd.f32 %v1578, %v1608
      %v1615 = vadd.f32 %v1580, %v1608
      %v1616 = vadd.f32 %v1583, %v1608
      %v1617 = vadd.f32 %v1585, %v1608
      %v1618 = vadd.f32 %v1588, %v1608
      %v1619 = vadd.f32 %v1590, %v1608
      %v1620 = vadd.f32 %v1593, %v1608
      %v1621 = vadd.f32 %v1595, %v1608
      %v1622 = vadd.f32 %v1598, %v1608
      %v1623 = vadd.f32 %v1600, %v1608
      %v1624 = vadd.f32 %v1603, %v1608
      %v1625 = vadd.f32 %v1605, %v1608
      %v1626 = vmax.f32 %v1610, 0.0
      %v1627 = vmax.f32 %v1611, 0.0
      %v1628 = vmax.f32 %v1612, 0.0
      %v1629 = vmax.f32 %v1613, 0.0
      %v1630 = vmax.f32 %v1614, 0.0
      %v1631 = vmax.f32 %v1615, 0.0
      %v1632 = vmax.f32 %v1616, 0.0
      %v1633 = vmax.f32 %v1617, 0.0
      %v1634 = vmax.f32 %v1618, 0.0
      %v1635 = vmax.f32 %v1619, 0.0
      %v1636 = vmax.f32 %v1620, 0.0
      %v1637 = vmax.f32 %v1621, 0.0
      %v1638 = vmax.f32 %v1622, 0.0
      %v1639 = vmax.f32 %v1623, 0.0
      %v1640 = vmax.f32 %v1624, 0.0
      %v1641 = vmax.f32 %v1625, 0.0
      %s1642 = scalar_lea.vmem %s4, 384
      %v1643 = vld [vmem:[%s1642] sm:$0xff]
      %v1644 = vld [vmem:[%s1642 + $0x8] sm:$0xff]
      %v1645 = vld [vmem:[%s1642 + $0x10] sm:$0xff]
      %v1646 = vld [vmem:[%s1642 + $0x18] sm:$0xff]
      %v1647 = vld [vmem:[%s1642 + $0x20] sm:$0xff]
      %v1648 = vld [vmem:[%s1642 + $0x28] sm:$0xff]
      %v1649 = vld [vmem:[%s1642 + $0x30] sm:$0xff]
      %v1650 = vld [vmem:[%s1642 + $0x38] sm:$0xff]
      %v1651 = vld [vmem:[%s1642 + $0x40] sm:$0xff]
      %v1652 = vld [vmem:[%s1642 + $0x48] sm:$0xff]
      %v1653 = vld [vmem:[%s1642 + $0x50] sm:$0xff]
      %v1654 = vld [vmem:[%s1642 + $0x58] sm:$0xff]
      %v1655 = vld [vmem:[%s1642 + $0x60] sm:$0xff]
      %v1656 = vld [vmem:[%s1642 + $0x68] sm:$0xff]
      %v1657 = vld [vmem:[%s1642 + $0x70] sm:$0xff]
      %v1658 = vld [vmem:[%s1642 + $0x78] sm:$0xff]
      %s1659 = scalar_lea.vmem %s5, 3
      %v1660 = vld [vmem:[%s1659] sm:$0x1]
      %v1661 = vpack.c.bf16 %v1627, %v1626
      %v1662 = vpack.c.bf16 %v1629, %v1628
      %v1663 = vpack.c.bf16 %v1631, %v1630
      %v1664 = vpack.c.bf16 %v1633, %v1632
      %v1665 = vpack.c.bf16 %v1635, %v1634
      %v1666 = vpack.c.bf16 %v1637, %v1636
      %v1667 = vpack.c.bf16 %v1639, %v1638
      %v1668 = vpack.c.bf16 %v1641, %v1640
      %v1685 = vunpack.c.l.b16 %v1643
      %v1686 = vunpack.c.h.b16 %v1643
      %v1687 = vunpack.c.l.b16 %v1644
      %v1688 = vunpack.c.h.b16 %v1644
      %v1689 = vunpack.c.l.b16 %v1645
      %v1690 = vunpack.c.h.b16 %v1645
      %v1691 = vunpack.c.l.b16 %v1646
      %v1692 = vunpack.c.h.b16 %v1646
      %v1693 = vunpack.c.l.b16 %v1647
      %v1694 = vunpack.c.h.b16 %v1647
      %v1695 = vunpack.c.l.b16 %v1648
      %v1696 = vunpack.c.h.b16 %v1648
      %v1697 = vunpack.c.l.b16 %v1649
      %v1698 = vunpack.c.h.b16 %v1649
      %v1699 = vunpack.c.l.b16 %v1650
      %v1700 = vunpack.c.h.b16 %v1650
      %v1701 = vunpack.c.l.b16 %v1651
      %v1702 = vunpack.c.h.b16 %v1651
      %v1703 = vunpack.c.l.b16 %v1652
      %v1704 = vunpack.c.h.b16 %v1652
      %v1705 = vunpack.c.l.b16 %v1653
      %v1706 = vunpack.c.h.b16 %v1653
      %v1707 = vunpack.c.l.b16 %v1654
      %v1708 = vunpack.c.h.b16 %v1654
      %v1709 = vunpack.c.l.b16 %v1655
      %v1710 = vunpack.c.h.b16 %v1655
      %v1711 = vunpack.c.l.b16 %v1656
      %v1712 = vunpack.c.h.b16 %v1656
      %v1713 = vunpack.c.l.b16 %v1657
      %v1714 = vunpack.c.h.b16 %v1657
      %v1715 = vunpack.c.l.b16 %v1658
      %v1716 = vunpack.c.h.b16 %v1658
      %v1717 = vpack.c.b16 %v1687, %v1685
      %v1718 = vpack.c.b16 %v1688, %v1686
      %v1719 = vpack.c.b16 %v1691, %v1689
      %v1720 = vpack.c.b16 %v1692, %v1690
      %v1721 = vpack.c.b16 %v1695, %v1693
      %v1722 = vpack.c.b16 %v1696, %v1694
      %v1723 = vpack.c.b16 %v1699, %v1697
      %v1724 = vpack.c.b16 %v1700, %v1698
      %v1725 = vpack.c.b16 %v1703, %v1701
      %v1726 = vpack.c.b16 %v1704, %v1702
      %v1727 = vpack.c.b16 %v1707, %v1705
      %v1728 = vpack.c.b16 %v1708, %v1706
      %v1729 = vpack.c.b16 %v1711, %v1709
      %v1730 = vpack.c.b16 %v1712, %v1710
      %v1731 = vpack.c.b16 %v1715, %v1713
      %v1732 = vpack.c.b16 %v1716, %v1714
      %1749 = vmatpush.bf16.msra.mxu0 %v1731
      %1750 = vmatpush.bf16.msra.mxu0 %v1729
      %1751 = vmatpush.bf16.msra.mxu0 %v1727
      %1752 = vmatpush.bf16.msra.mxu0 %v1725
      %1753 = vmatpush.bf16.msra.mxu0 %v1723
      %1754 = vmatpush.bf16.msra.mxu0 %v1721
      %1755 = vmatpush.bf16.msra.mxu0 %v1719
      %1756 = vmatpush.bf16.msra.mxu0 %v1717
      %1757 = vmatmul.bf16.gmra.mxu0 %v1661
      %v1758 = vpop.f32.mrf.mxu0
      %v1759 = vadd.f32 0.0, %v1758
      %v1760 = vpop.f32.mrf.mxu0
      %v1761 = vadd.f32 0.0, %v1760
      %1762 = vmatmul.bf16.gmra.mxu0 %v1662
      %v1763 = vpop.f32.mrf.mxu0
      %v1764 = vadd.f32 0.0, %v1763
      %v1765 = vpop.f32.mrf.mxu0
      %v1766 = vadd.f32 0.0, %v1765
      %1767 = vmatmul.bf16.gmra.mxu0 %v1663
      %v1768 = vpop.f32.mrf.mxu0
      %v1769 = vadd.f32 0.0, %v1768
      %v1770 = vpop.f32.mrf.mxu0
      %v1771 = vadd.f32 0.0, %v1770
      %1772 = vmatmul.bf16.gmra.mxu0 %v1664
      %v1773 = vpop.f32.mrf.mxu0
      %v1774 = vadd.f32 0.0, %v1773
      %v1775 = vpop.f32.mrf.mxu0
      %v1776 = vadd.f32 0.0, %v1775
      %1777 = vmatmul.bf16.gmra.mxu0 %v1665
      %v1778 = vpop.f32.mrf.mxu0
      %v1779 = vadd.f32 0.0, %v1778
      %v1780 = vpop.f32.mrf.mxu0
      %v1781 = vadd.f32 0.0, %v1780
      %1782 = vmatmul.bf16.gmra.mxu0 %v1666
      %v1783 = vpop.f32.mrf.mxu0
      %v1784 = vadd.f32 0.0, %v1783
      %v1785 = vpop.f32.mrf.mxu0
      %v1786 = vadd.f32 0.0, %v1785
      %1787 = vmatmul.bf16.gmra.mxu0 %v1667
      %v1788 = vpop.f32.mrf.mxu0
      %v1789 = vadd.f32 0.0, %v1788
      %v1790 = vpop.f32.mrf.mxu0
      %v1791 = vadd.f32 0.0, %v1790
      %1792 = vmatmul.bf16.gmra.mxu0 %v1668
      %v1793 = vpop.f32.mrf.mxu0
      %v1794 = vadd.f32 0.0, %v1793
      %v1795 = vpop.f32.mrf.mxu0
      %v1796 = vadd.f32 0.0, %v1795
      %1797 = vdwg.mxu0
      %1798 = vmatpush.bf16.msra.mxu0 %v1732
      %1799 = vmatpush.bf16.msra.mxu0 %v1730
      %1800 = vmatpush.bf16.msra.mxu0 %v1728
      %1801 = vmatpush.bf16.msra.mxu0 %v1726
      %1802 = vmatpush.bf16.msra.mxu0 %v1724
      %1803 = vmatpush.bf16.msra.mxu0 %v1722
      %1804 = vmatpush.bf16.msra.mxu0 %v1720
      %1805 = vmatpush.bf16.msra.mxu0 %v1718
      %1806 = vmatmul.bf16.gmra.mxu0 %v1661
      %v1807 = vpop.f32.mrf.mxu0
      %v1808 = vadd.f32 0.0, %v1807
      %v1809 = vpop.f32.mrf.mxu0
      %v1810 = vadd.f32 0.0, %v1809
      %1811 = vmatmul.bf16.gmra.mxu0 %v1662
      %v1812 = vpop.f32.mrf.mxu0
      %v1813 = vadd.f32 0.0, %v1812
      %v1814 = vpop.f32.mrf.mxu0
      %v1815 = vadd.f32 0.0, %v1814
      %1816 = vmatmul.bf16.gmra.mxu0 %v1663
      %v1817 = vpop.f32.mrf.mxu0
      %v1818 = vadd.f32 0.0, %v1817
      %v1819 = vpop.f32.mrf.mxu0
      %v1820 = vadd.f32 0.0, %v1819
      %1821 = vmatmul.bf16.gmra.mxu0 %v1664
      %v1822 = vpop.f32.mrf.mxu0
      %v1823 = vadd.f32 0.0, %v1822
      %v1824 = vpop.f32.mrf.mxu0
      %v1825 = vadd.f32 0.0, %v1824
      %1826 = vmatmul.bf16.gmra.mxu0 %v1665
      %v1827 = vpop.f32.mrf.mxu0
      %v1828 = vadd.f32 0.0, %v1827
      %v1829 = vpop.f32.mrf.mxu0
      %v1830 = vadd.f32 0.0, %v1829
      %1831 = vmatmul.bf16.gmra.mxu0 %v1666
      %v1832 = vpop.f32.mrf.mxu0
      %v1833 = vadd.f32 0.0, %v1832
      %v1834 = vpop.f32.mrf.mxu0
      %v1835 = vadd.f32 0.0, %v1834
      %1836 = vmatmul.bf16.gmra.mxu0 %v1667
      %v1837 = vpop.f32.mrf.mxu0
      %v1838 = vadd.f32 0.0, %v1837
      %v1839 = vpop.f32.mrf.mxu0
      %v1840 = vadd.f32 0.0, %v1839
      %1841 = vmatmul.bf16.gmra.mxu0 %v1668
      %v1842 = vpop.f32.mrf.mxu0
      %v1843 = vadd.f32 0.0, %v1842
      %v1844 = vpop.f32.mrf.mxu0
      %v1845 = vadd.f32 0.0, %v1844
      %1846 = vdwg.mxu0
      %v1847 = vpack.c.bf16 %v1761, %v1759
      %v1848 = vpack.c.bf16 %v1766, %v1764
      %v1849 = vpack.c.bf16 %v1771, %v1769
      %v1850 = vpack.c.bf16 %v1776, %v1774
      %v1851 = vpack.c.bf16 %v1781, %v1779
      %v1852 = vpack.c.bf16 %v1786, %v1784
      %v1853 = vpack.c.bf16 %v1791, %v1789
      %v1854 = vpack.c.bf16 %v1796, %v1794
      %1855 = vmatpush.bf16.msra.mxu0 %v1854
      %1856 = vmatpush.bf16.msra.mxu0 %v1853
      %1857 = vmatpush.bf16.msra.mxu0 %v1852
      %1858 = vmatpush.bf16.msra.mxu0 %v1851
      %1859 = vmatpush.bf16.msra.mxu0 %v1850
      %1860 = vmatpush.bf16.msra.mxu0 %v1849
      %1861 = vmatpush.bf16.msra.mxu0 %v1848
      %1862 = vmatpush.bf16.msra.mxu0 %v1847
      %1863 = vmatmul.bf16.gmra.mxu0 %v621
      %v1864 = vpop.f32.mrf.mxu0
      %v1865 = vadd.f32 %v1808, %v1864
      %v1866 = vpop.f32.mrf.mxu0
      %v1867 = vadd.f32 %v1810, %v1866
      %1868 = vmatmul.bf16.gmra.mxu0 %v622
      %v1869 = vpop.f32.mrf.mxu0
      %v1870 = vadd.f32 %v1813, %v1869
      %v1871 = vpop.f32.mrf.mxu0
      %v1872 = vadd.f32 %v1815, %v1871
      %1873 = vmatmul.bf16.gmra.mxu0 %v623
      %v1874 = vpop.f32.mrf.mxu0
      %v1875 = vadd.f32 %v1818, %v1874
      %v1876 = vpop.f32.mrf.mxu0
      %v1877 = vadd.f32 %v1820, %v1876
      %1878 = vmatmul.bf16.gmra.mxu0 %v624
      %v1879 = vpop.f32.mrf.mxu0
      %v1880 = vadd.f32 %v1823, %v1879
      %v1881 = vpop.f32.mrf.mxu0
      %v1882 = vadd.f32 %v1825, %v1881
      %1883 = vmatmul.bf16.gmra.mxu0 %v625
      %v1884 = vpop.f32.mrf.mxu0
      %v1885 = vadd.f32 %v1828, %v1884
      %v1886 = vpop.f32.mrf.mxu0
      %v1887 = vadd.f32 %v1830, %v1886
      %1888 = vmatmul.bf16.gmra.mxu0 %v626
      %v1889 = vpop.f32.mrf.mxu0
      %v1890 = vadd.f32 %v1833, %v1889
      %v1891 = vpop.f32.mrf.mxu0
      %v1892 = vadd.f32 %v1835, %v1891
      %1893 = vmatmul.bf16.gmra.mxu0 %v627
      %v1894 = vpop.f32.mrf.mxu0
      %v1895 = vadd.f32 %v1838, %v1894
      %v1896 = vpop.f32.mrf.mxu0
      %v1897 = vadd.f32 %v1840, %v1896
      %1898 = vmatmul.bf16.gmra.mxu0 %v628
      %v1899 = vpop.f32.mrf.mxu0
      %v1900 = vadd.f32 %v1843, %v1899
      %v1901 = vpop.f32.mrf.mxu0
      %v1902 = vadd.f32 %v1845, %v1901
      %1903 = vdwg.mxu0
      %v1905 = vperm.slane %v1660, 0
      %v1907 = vadd.f32 %v1865, %v1905
      %v1908 = vadd.f32 %v1867, %v1905
      %v1909 = vadd.f32 %v1870, %v1905
      %v1910 = vadd.f32 %v1872, %v1905
      %v1911 = vadd.f32 %v1875, %v1905
      %v1912 = vadd.f32 %v1877, %v1905
      %v1913 = vadd.f32 %v1880, %v1905
      %v1914 = vadd.f32 %v1882, %v1905
      %v1915 = vadd.f32 %v1885, %v1905
      %v1916 = vadd.f32 %v1887, %v1905
      %v1917 = vadd.f32 %v1890, %v1905
      %v1918 = vadd.f32 %v1892, %v1905
      %v1919 = vadd.f32 %v1895, %v1905
      %v1920 = vadd.f32 %v1897, %v1905
      %v1921 = vadd.f32 %v1900, %v1905
      %v1922 = vadd.f32 %v1902, %v1905
      %v1923 = vmax.f32 %v1907, 0.0
      %v1924 = vmax.f32 %v1908, 0.0
      %v1925 = vmax.f32 %v1909, 0.0
      %v1926 = vmax.f32 %v1910, 0.0
      %v1927 = vmax.f32 %v1911, 0.0
      %v1928 = vmax.f32 %v1912, 0.0
      %v1929 = vmax.f32 %v1913, 0.0
      %v1930 = vmax.f32 %v1914, 0.0
      %v1931 = vmax.f32 %v1915, 0.0
      %v1932 = vmax.f32 %v1916, 0.0
      %v1933 = vmax.f32 %v1917, 0.0
      %v1934 = vmax.f32 %v1918, 0.0
      %v1935 = vmax.f32 %v1919, 0.0
      %v1936 = vmax.f32 %v1920, 0.0
      %v1937 = vmax.f32 %v1921, 0.0
      %v1938 = vmax.f32 %v1922, 0.0
      %v1939 = vadd.f32 %v1329, %v1923
      %v1940 = vadd.f32 %v1330, %v1924
      %v1941 = vadd.f32 %v1331, %v1925
      %v1942 = vadd.f32 %v1332, %v1926
      %v1943 = vadd.f32 %v1333, %v1927
      %v1944 = vadd.f32 %v1334, %v1928
      %v1945 = vadd.f32 %v1335, %v1929
      %v1946 = vadd.f32 %v1336, %v1930
      %v1947 = vadd.f32 %v1337, %v1931
      %v1948 = vadd.f32 %v1338, %v1932
      %v1949 = vadd.f32 %v1339, %v1933
      %v1950 = vadd.f32 %v1340, %v1934
      %v1951 = vadd.f32 %v1341, %v1935
      %v1952 = vadd.f32 %v1342, %v1936
      %v1953 = vadd.f32 %v1343, %v1937
      %v1954 = vadd.f32 %v1344, %v1938
      %v1955 = vmul.f32 %v1939, 0.5
      %v1956 = vmul.f32 %v1940, 0.5
      %v1957 = vmul.f32 %v1941, 0.5
      %v1958 = vmul.f32 %v1942, 0.5
      %v1959 = vmul.f32 %v1943, 0.5
      %v1960 = vmul.f32 %v1944, 0.5
      %v1961 = vmul.f32 %v1945, 0.5
      %v1962 = vmul.f32 %v1946, 0.5
      %v1963 = vmul.f32 %v1947, 0.5
      %v1964 = vmul.f32 %v1948, 0.5
      %v1965 = vmul.f32 %v1949, 0.5
      %v1966 = vmul.f32 %v1950, 0.5
      %v1967 = vmul.f32 %v1951, 0.5
      %v1968 = vmul.f32 %v1952, 0.5
      %v1969 = vmul.f32 %v1953, 0.5
      %v1970 = vmul.f32 %v1954, 0.5
      %1971 = vst [vmem:[%s345] sm:$0xff] %v1955
      %1972 = vst [vmem:[%s345 + $0x8] sm:$0xff] %v1956
      %1973 = vst [vmem:[%s345 + $0x10] sm:$0xff] %v1957
      %1974 = vst [vmem:[%s345 + $0x18] sm:$0xff] %v1958
      %1975 = vst [vmem:[%s345 + $0x20] sm:$0xff] %v1959
      %1976 = vst [vmem:[%s345 + $0x28] sm:$0xff] %v1960
      %1977 = vst [vmem:[%s345 + $0x30] sm:$0xff] %v1961
      %1978 = vst [vmem:[%s345 + $0x38] sm:$0xff] %v1962
      %1979 = vst [vmem:[%s345 + $0x40] sm:$0xff] %v1963
      %1980 = vst [vmem:[%s345 + $0x48] sm:$0xff] %v1964
      %1981 = vst [vmem:[%s345 + $0x50] sm:$0xff] %v1965
      %1982 = vst [vmem:[%s345 + $0x58] sm:$0xff] %v1966
      %1983 = vst [vmem:[%s345 + $0x60] sm:$0xff] %v1967
      %1984 = vst [vmem:[%s345 + $0x68] sm:$0xff] %v1968
      %1985 = vst [vmem:[%s345 + $0x70] sm:$0xff] %v1969
      %1986 = vst [vmem:[%s345 + $0x78] sm:$0xff] %v1970
      %v1987 = vld [vmem:[%s6] sm:$0xff]
      %v1988 = vld [vmem:[%s6 + $0x8] sm:$0xff]
      %v1989 = vld [vmem:[%s6 + $0x10] sm:$0xff]
      %v1990 = vld [vmem:[%s6 + $0x18] sm:$0xff]
      %v1991 = vld [vmem:[%s6 + $0x20] sm:$0xff]
      %v1992 = vld [vmem:[%s6 + $0x28] sm:$0xff]
      %v1993 = vld [vmem:[%s6 + $0x30] sm:$0xff]
      %v1994 = vld [vmem:[%s6 + $0x38] sm:$0xff]
      %v1995 = vld [vmem:[%s6 + $0x40] sm:$0xff]
      %v1996 = vld [vmem:[%s6 + $0x48] sm:$0xff]
      %v1997 = vld [vmem:[%s6 + $0x50] sm:$0xff]
      %v1998 = vld [vmem:[%s6 + $0x58] sm:$0xff]
      %v1999 = vld [vmem:[%s6 + $0x60] sm:$0xff]
      %v2000 = vld [vmem:[%s6 + $0x68] sm:$0xff]
      %v2001 = vld [vmem:[%s6 + $0x70] sm:$0xff]
      %v2002 = vld [vmem:[%s6 + $0x78] sm:$0xff]
      %v2003 = vld [vmem:[%s7] sm:$0x1]
      %v2004 = vpack.c.bf16 %v1956, %v1955
      %v2005 = vpack.c.bf16 %v1958, %v1957
      %v2006 = vpack.c.bf16 %v1960, %v1959
      %v2007 = vpack.c.bf16 %v1962, %v1961
      %v2008 = vpack.c.bf16 %v1964, %v1963
      %v2009 = vpack.c.bf16 %v1966, %v1965
      %v2010 = vpack.c.bf16 %v1968, %v1967
      %v2011 = vpack.c.bf16 %v1970, %v1969
      %v2028 = vunpack.c.l.b16 %v1987
      %v2029 = vunpack.c.h.b16 %v1987
      %v2030 = vunpack.c.l.b16 %v1988
      %v2031 = vunpack.c.h.b16 %v1988
      %v2032 = vunpack.c.l.b16 %v1989
      %v2033 = vunpack.c.h.b16 %v1989
      %v2034 = vunpack.c.l.b16 %v1990
      %v2035 = vunpack.c.h.b16 %v1990
      %v2036 = vunpack.c.l.b16 %v1991
      %v2037 = vunpack.c.h.b16 %v1991
      %v2038 = vunpack.c.l.b16 %v1992
      %v2039 = vunpack.c.h.b16 %v1992
      %v2040 = vunpack.c.l.b16 %v1993
      %v2041 = vunpack.c.h.b16 %v1993
      %v2042 = vunpack.c.l.b16 %v1994
      %v2043 = vunpack.c.h.b16 %v1994
      %v2044 = vunpack.c.l.b16 %v1995
      %v2045 = vunpack.c.h.b16 %v1995
      %v2046 = vunpack.c.l.b16 %v1996
      %v2047 = vunpack.c.h.b16 %v1996
      %v2048 = vunpack.c.l.b16 %v1997
      %v2049 = vunpack.c.h.b16 %v1997
      %v2050 = vunpack.c.l.b16 %v1998
      %v2051 = vunpack.c.h.b16 %v1998
      %v2052 = vunpack.c.l.b16 %v1999
      %v2053 = vunpack.c.h.b16 %v1999
      %v2054 = vunpack.c.l.b16 %v2000
      %v2055 = vunpack.c.h.b16 %v2000
      %v2056 = vunpack.c.l.b16 %v2001
      %v2057 = vunpack.c.h.b16 %v2001
      %v2058 = vunpack.c.l.b16 %v2002
      %v2059 = vunpack.c.h.b16 %v2002
      %v2060 = vpack.c.b16 %v2030, %v2028
      %v2061 = vpack.c.b16 %v2031, %v2029
      %v2062 = vpack.c.b16 %v2034, %v2032
      %v2063 = vpack.c.b16 %v2035, %v2033
      %v2064 = vpack.c.b16 %v2038, %v2036
      %v2065 = vpack.c.b16 %v2039, %v2037
      %v2066 = vpack.c.b16 %v2042, %v2040
      %v2067 = vpack.c.b16 %v2043, %v2041
      %v2068 = vpack.c.b16 %v2046, %v2044
      %v2069 = vpack.c.b16 %v2047, %v2045
      %v2070 = vpack.c.b16 %v2050, %v2048
      %v2071 = vpack.c.b16 %v2051, %v2049
      %v2072 = vpack.c.b16 %v2054, %v2052
      %v2073 = vpack.c.b16 %v2055, %v2053
      %v2074 = vpack.c.b16 %v2058, %v2056
      %v2075 = vpack.c.b16 %v2059, %v2057
      %2092 = vmatpush.bf16.msra.mxu0 %v2074
      %2093 = vmatpush.bf16.msra.mxu0 %v2072
      %2094 = vmatpush.bf16.msra.mxu0 %v2070
      %2095 = vmatpush.bf16.msra.mxu0 %v2068
      %2096 = vmatpush.bf16.msra.mxu0 %v2066
      %2097 = vmatpush.bf16.msra.mxu0 %v2064
      %2098 = vmatpush.bf16.msra.mxu0 %v2062
      %2099 = vmatpush.bf16.msra.mxu0 %v2060
      %2100 = vmatmul.bf16.gmra.mxu0 %v2004
      %v2101 = vpop.f32.mrf.mxu0
      %v2102 = vadd.f32 0.0, %v2101
      %v2103 = vpop.f32.mrf.mxu0
      %v2104 = vadd.f32 0.0, %v2103
      %2105 = vmatmul.bf16.gmra.mxu0 %v2005
      %v2106 = vpop.f32.mrf.mxu0
      %v2107 = vadd.f32 0.0, %v2106
      %v2108 = vpop.f32.mrf.mxu0
      %v2109 = vadd.f32 0.0, %v2108
      %2110 = vmatmul.bf16.gmra.mxu0 %v2006
      %v2111 = vpop.f32.mrf.mxu0
      %v2112 = vadd.f32 0.0, %v2111
      %v2113 = vpop.f32.mrf.mxu0
      %v2114 = vadd.f32 0.0, %v2113
      %2115 = vmatmul.bf16.gmra.mxu0 %v2007
      %v2116 = vpop.f32.mrf.mxu0
      %v2117 = vadd.f32 0.0, %v2116
      %v2118 = vpop.f32.mrf.mxu0
      %v2119 = vadd.f32 0.0, %v2118
      %2120 = vmatmul.bf16.gmra.mxu0 %v2008
      %v2121 = vpop.f32.mrf.mxu0
      %v2122 = vadd.f32 0.0, %v2121
      %v2123 = vpop.f32.mrf.mxu0
      %v2124 = vadd.f32 0.0, %v2123
      %2125 = vmatmul.bf16.gmra.mxu0 %v2009
      %v2126 = vpop.f32.mrf.mxu0
      %v2127 = vadd.f32 0.0, %v2126
      %v2128 = vpop.f32.mrf.mxu0
      %v2129 = vadd.f32 0.0, %v2128
      %2130 = vmatmul.bf16.gmra.mxu0 %v2010
      %v2131 = vpop.f32.mrf.mxu0
      %v2132 = vadd.f32 0.0, %v2131
      %v2133 = vpop.f32.mrf.mxu0
      %v2134 = vadd.f32 0.0, %v2133
      %2135 = vmatmul.bf16.gmra.mxu0 %v2011
      %v2136 = vpop.f32.mrf.mxu0
      %v2137 = vadd.f32 0.0, %v2136
      %v2138 = vpop.f32.mrf.mxu0
      %v2139 = vadd.f32 0.0, %v2138
      %2140 = vdwg.mxu0
      %2141 = vmatpush.bf16.msra.mxu0 %v2075
      %2142 = vmatpush.bf16.msra.mxu0 %v2073
      %2143 = vmatpush.bf16.msra.mxu0 %v2071
      %2144 = vmatpush.bf16.msra.mxu0 %v2069
      %2145 = vmatpush.bf16.msra.mxu0 %v2067
      %2146 = vmatpush.bf16.msra.mxu0 %v2065
      %2147 = vmatpush.bf16.msra.mxu0 %v2063
      %2148 = vmatpush.bf16.msra.mxu0 %v2061
      %2149 = vmatmul.bf16.gmra.mxu0 %v2004
      %v2150 = vpop.f32.mrf.mxu0
      %v2151 = vadd.f32 0.0, %v2150
      %v2152 = vpop.f32.mrf.mxu0
      %v2153 = vadd.f32 0.0, %v2152
      %2154 = vmatmul.bf16.gmra.mxu0 %v2005
      %v2155 = vpop.f32.mrf.mxu0
      %v2156 = vadd.f32 0.0, %v2155
      %v2157 = vpop.f32.mrf.mxu0
      %v2158 = vadd.f32 0.0, %v2157
      %2159 = vmatmul.bf16.gmra.mxu0 %v2006
      %v2160 = vpop.f32.mrf.mxu0
      %v2161 = vadd.f32 0.0, %v2160
      %v2162 = vpop.f32.mrf.mxu0
      %v2163 = vadd.f32 0.0, %v2162
      %2164 = vmatmul.bf16.gmra.mxu0 %v2007
      %v2165 = vpop.f32.mrf.mxu0
      %v2166 = vadd.f32 0.0, %v2165
      %v2167 = vpop.f32.mrf.mxu0
      %v2168 = vadd.f32 0.0, %v2167
      %2169 = vmatmul.bf16.gmra.mxu0 %v2008
      %v2170 = vpop.f32.mrf.mxu0
      %v2171 = vadd.f32 0.0, %v2170
      %v2172 = vpop.f32.mrf.mxu0
      %v2173 = vadd.f32 0.0, %v2172
      %2174 = vmatmul.bf16.gmra.mxu0 %v2009
      %v2175 = vpop.f32.mrf.mxu0
      %v2176 = vadd.f32 0.0, %v2175
      %v2177 = vpop.f32.mrf.mxu0
      %v2178 = vadd.f32 0.0, %v2177
      %2179 = vmatmul.bf16.gmra.mxu0 %v2010
      %v2180 = vpop.f32.mrf.mxu0
      %v2181 = vadd.f32 0.0, %v2180
      %v2182 = vpop.f32.mrf.mxu0
      %v2183 = vadd.f32 0.0, %v2182
      %2184 = vmatmul.bf16.gmra.mxu0 %v2011
      %v2185 = vpop.f32.mrf.mxu0
      %v2186 = vadd.f32 0.0, %v2185
      %v2187 = vpop.f32.mrf.mxu0
      %v2188 = vadd.f32 0.0, %v2187
      %2189 = vdwg.mxu0
      %v2190 = vpack.c.bf16 %v2104, %v2102
      %v2191 = vpack.c.bf16 %v2109, %v2107
      %v2192 = vpack.c.bf16 %v2114, %v2112
      %v2193 = vpack.c.bf16 %v2119, %v2117
      %v2194 = vpack.c.bf16 %v2124, %v2122
      %v2195 = vpack.c.bf16 %v2129, %v2127
      %v2196 = vpack.c.bf16 %v2134, %v2132
      %v2197 = vpack.c.bf16 %v2139, %v2137
      %2198 = vmatpush.bf16.msra.mxu0 %v2197
      %2199 = vmatpush.bf16.msra.mxu0 %v2196
      %2200 = vmatpush.bf16.msra.mxu0 %v2195
      %2201 = vmatpush.bf16.msra.mxu0 %v2194
      %2202 = vmatpush.bf16.msra.mxu0 %v2193
      %2203 = vmatpush.bf16.msra.mxu0 %v2192
      %2204 = vmatpush.bf16.msra.mxu0 %v2191
      %2205 = vmatpush.bf16.msra.mxu0 %v2190
      %2206 = vmatmul.bf16.gmra.mxu0 %v621
      %v2207 = vpop.f32.mrf.mxu0
      %v2208 = vadd.f32 %v2151, %v2207
      %v2209 = vpop.f32.mrf.mxu0
      %v2210 = vadd.f32 %v2153, %v2209
      %2211 = vmatmul.bf16.gmra.mxu0 %v622
      %v2212 = vpop.f32.mrf.mxu0
      %v2213 = vadd.f32 %v2156, %v2212
      %v2214 = vpop.f32.mrf.mxu0
      %v2215 = vadd.f32 %v2158, %v2214
      %2216 = vmatmul.bf16.gmra.mxu0 %v623
      %v2217 = vpop.f32.mrf.mxu0
      %v2218 = vadd.f32 %v2161, %v2217
      %v2219 = vpop.f32.mrf.mxu0
      %v2220 = vadd.f32 %v2163, %v2219
      %2221 = vmatmul.bf16.gmra.mxu0 %v624
      %v2222 = vpop.f32.mrf.mxu0
      %v2223 = vadd.f32 %v2166, %v2222
      %v2224 = vpop.f32.mrf.mxu0
      %v2225 = vadd.f32 %v2168, %v2224
      %2226 = vmatmul.bf16.gmra.mxu0 %v625
      %v2227 = vpop.f32.mrf.mxu0
      %v2228 = vadd.f32 %v2171, %v2227
      %v2229 = vpop.f32.mrf.mxu0
      %v2230 = vadd.f32 %v2173, %v2229
      %2231 = vmatmul.bf16.gmra.mxu0 %v626
      %v2232 = vpop.f32.mrf.mxu0
      %v2233 = vadd.f32 %v2176, %v2232
      %v2234 = vpop.f32.mrf.mxu0
      %v2235 = vadd.f32 %v2178, %v2234
      %2236 = vmatmul.bf16.gmra.mxu0 %v627
      %v2237 = vpop.f32.mrf.mxu0
      %v2238 = vadd.f32 %v2181, %v2237
      %v2239 = vpop.f32.mrf.mxu0
      %v2240 = vadd.f32 %v2183, %v2239
      %2241 = vmatmul.bf16.gmra.mxu0 %v628
      %v2242 = vpop.f32.mrf.mxu0
      %v2243 = vadd.f32 %v2186, %v2242
      %v2244 = vpop.f32.mrf.mxu0
      %v2245 = vadd.f32 %v2188, %v2244
      %2246 = vdwg.mxu0
      %v2248 = vperm.slane %v2003, 0
      %v2250 = vadd.f32 %v2208, %v2248
      %v2251 = vadd.f32 %v2210, %v2248
      %v2252 = vadd.f32 %v2213, %v2248
      %v2253 = vadd.f32 %v2215, %v2248
      %v2254 = vadd.f32 %v2218, %v2248
      %v2255 = vadd.f32 %v2220, %v2248
      %v2256 = vadd.f32 %v2223, %v2248
      %v2257 = vadd.f32 %v2225, %v2248
      %v2258 = vadd.f32 %v2228, %v2248
      %v2259 = vadd.f32 %v2230, %v2248
      %v2260 = vadd.f32 %v2233, %v2248
      %v2261 = vadd.f32 %v2235, %v2248
      %v2262 = vadd.f32 %v2238, %v2248
      %v2263 = vadd.f32 %v2240, %v2248
      %v2264 = vadd.f32 %v2243, %v2248
      %v2265 = vadd.f32 %v2245, %v2248
      %2266 = vst [vmem:[%s340] sm:$0xff] %v2250
      %2267 = vst [vmem:[%s340 + $0x8] sm:$0xff] %v2251
      %2268 = vst [vmem:[%s340 + $0x10] sm:$0xff] %v2252
      %2269 = vst [vmem:[%s340 + $0x18] sm:$0xff] %v2253
      %2270 = vst [vmem:[%s340 + $0x20] sm:$0xff] %v2254
      %2271 = vst [vmem:[%s340 + $0x28] sm:$0xff] %v2255
      %2272 = vst [vmem:[%s340 + $0x30] sm:$0xff] %v2256
      %2273 = vst [vmem:[%s340 + $0x38] sm:$0xff] %v2257
      %2274 = vst [vmem:[%s340 + $0x40] sm:$0xff] %v2258
      %2275 = vst [vmem:[%s340 + $0x48] sm:$0xff] %v2259
      %2276 = vst [vmem:[%s340 + $0x50] sm:$0xff] %v2260
      %2277 = vst [vmem:[%s340 + $0x58] sm:$0xff] %v2261
      %2278 = vst [vmem:[%s340 + $0x60] sm:$0xff] %v2262
      %2279 = vst [vmem:[%s340 + $0x68] sm:$0xff] %v2263
      %2280 = vst [vmem:[%s340 + $0x70] sm:$0xff] %v2264
      %2281 = vst [vmem:[%s340 + $0x78] sm:$0xff] %v2265
      %p2282 = scmp.lt.s32.totalorder %s21, 1
      %s2283 = scalar_select %p2282, %s21, 1
      %s2284 = smul.addr %s2283, 16
      %s2285 = smul.addr %s2284, 8
      %s2286 = scalar_lea.vmem %s8, %s2285
      %p2287 = scmp.lt.s32.totalorder %s21, 1
      %s2288 = scalar_select %p2287, %s21, 1
      %s2289 = smul.addr %s2288, 16
      %s2290 = smul.addr %s2289, 8
      %s2291 = scalar_lea.vmem %s9, %s2290
      // Predicated region
      $region53: #{gbottleneck_forward.1} parent=51 // pred_check
        %p2292 = pneg %p212
      $region54: #{gbottleneck_forward.1} parent=51 // pred_check_branch
        %2294 = sbr.rel (%p2292) target = $region56
      $region55: #{gbottleneck_forward.1} parent=51 // pred_region
        _
      $region56: #{gbottleneck_forward.1} parent=51 // pred_fallthru
        _
      // Predicated region
      $region57: #{gbottleneck_forward.1} parent=51 // pred_check
        %p2295 = pneg %p238
      $region58: #{gbottleneck_forward.1} parent=51 // pred_check_branch
        %2297 = sbr.rel (%p2295) target = $region60
      $region59: #{gbottleneck_forward.1} parent=51 // pred_region
        _
      $region60: #{gbottleneck_forward.1} parent=51 // pred_fallthru
        _
    $region52: #{gbottleneck_forward.1} parent=5 // pred_fallthru
      _
    %p2298 = scmp.le.s32.totalorder 2, %s16
    // Predicated region
    $region61: #{gbottleneck_forward.1} parent=5 // pred_check
      %p2299 = pneg %p2298
    $region62: #{gbottleneck_forward.1} parent=5 // pred_check_branch
      %2301 = sbr.rel (%p2299) target = $region64
    $region63: #{gbottleneck_forward.1} parent=5 // pred_region
      %s2302 = ssub.s32 %s16, 2
      // Predicated region
      $region65: #{gbottleneck_forward.1} parent=63 // pred_check
        %p2303 = pneg %p218
      $region66: #{gbottleneck_forward.1} parent=63 // pred_check_branch
        %2305 = sbr.rel (%p2303) target = $region68
      $region67: #{gbottleneck_forward.1} parent=63 // pred_region
        %p2306 = scmp.lt.s32.totalorder %s22, 1
        %s2307 = scalar_select %p2306, %s22, 1
        %s2308 = smul.addr %s2307, 16
        %s2309 = smul.addr %s2308, 8
        %s2310 = scalar_lea.vmem %s8, %s2309
      $region68: #{gbottleneck_forward.1} parent=63 // pred_fallthru
        _
      // Predicated region
      $region69: #{gbottleneck_forward.1} parent=63 // pred_check
        %p2311 = pneg %p244
      $region70: #{gbottleneck_forward.1} parent=63 // pred_check_branch
        %2313 = sbr.rel (%p2311) target = $region72
      $region71: #{gbottleneck_forward.1} parent=63 // pred_region
        %p2314 = scmp.lt.s32.totalorder %s22, 1
        %s2315 = scalar_select %p2314, %s22, 1
        %s2316 = smul.addr %s2315, 16
        %s2317 = smul.addr %s2316, 8
        %s2318 = scalar_lea.vmem %s9, %s2317
      $region72: #{gbottleneck_forward.1} parent=63 // pred_fallthru
        _
    $region64: #{gbottleneck_forward.1} parent=5 // pred_fallthru
      _
  $region6: #{gbottleneck_forward.1} parent=0 // loop_footer
    %s20 = sadd.s32 1, %s16
  $region7: #{gbottleneck_forward.1} parent=0 // loop_footer_branch
    %15 = sbr.rel target = $region3
  $region8: #{gbottleneck_forward.1} parent=0 // loop_exit
    _

// kernel: gbottleneck_forward.1
$region0: #{gbottleneck_forward.1}
  #allocation0 [shape = 'u32[]', space=smem, size = 0x4, offset = 0x4, fixed_abs, tag = 'smem constant byte address 0x4 - core index']
  #allocation1 [shape = 'u32[72,128]{1,0:T(1,128)}', space=vmem, size = 0x9000, scoped, tag = 'internal scratch']
  %s0 = inlined_call_operand.vmem [shape: f32[2,128,128], index: 0, kind: input, shape index: {}]
  %s1 = inlined_call_operand.vmem [shape: bf16[128,128], index: 1, kind: input, shape index: {}]
  %s2 = inlined_call_operand.vmem [shape: bf16[128,256], index: 2, kind: input, shape index: {}]
  %s3 = inlined_call_operand.vmem [shape: f32[1,128], index: 3, kind: input, shape index: {}]
  %s4 = inlined_call_operand.vmem [shape: bf16[4,128,256], index: 4, kind: input, shape index: {}]
  %s5 = inlined_call_operand.vmem [shape: f32[4,1,128], index: 5, kind: input, shape index: {}]
  %s6 = inlined_call_operand.vmem [shape: bf16[128,256], index: 6, kind: input, shape index: {}]
  %s7 = inlined_call_operand.vmem [shape: f32[1,128], index: 7, kind: input, shape index: {}]
  %s8 = inlined_call_operand.vmem [shape: f32[2,128,128], index: 8, kind: output, shape index: {0}]
  %s9 = inlined_call_operand.vmem [shape: f32[2,128,128], index: 9, kind: output, shape index: {1}]
  %10 = xla_tuple %s8, %s9
  %s11 = sld [smem:[#allocation0]]
  $region73: #{gbottleneck_forward.1} parent=0
    _
  %s13 = ssub.s32 1, %s11
  %s14 = scalar_select 0, %s13, %s11
  loop: start=0, step=1, limit=4
  $region2: #{gbottleneck_forward.1} parent=0 // loop_pre_header
    _
  $region3: #{gbottleneck_forward.1} parent=0 // loop_header
    %s16 = sphi 0, %s20
    %p17 = scmp.ge.s32.totalorder %s16, 4
    %s26 = sphi 0, %s28
    %s29 = sphi 0, %s26
    %s30 = sphi 0, %s29
    %s46 = sphi 0, %s30
    %s50 = sphi 0, %s50
    %s52 = sphi 0, %s50
    %s53 = sphi 0, %s52
    %s67 = sphi 0, %s53
    %s71 = sphi 0, %s71
    %s73 = sphi 0, %s71
    %s74 = sphi 0, %s73
    %s88 = sphi 0, %s74
    %s92 = sphi 0, %s92
    %s94 = sphi 0, %s92
    %s95 = sphi 0, %s94
    %s109 = sphi 0, %s95
    %s113 = sphi 0, %s113
    %s115 = sphi 0, %s113
    %s116 = sphi 0, %s115
    %s130 = sphi 0, %s116
    %s134 = sphi 0, %s134
    %s136 = sphi 0, %s134
    %s137 = sphi 0, %s136
    %s151 = sphi 0, %s137
    %s155 = sphi 0, %s155
    %s157 = sphi 0, %s155
    %s158 = sphi 0, %s157
    %s172 = sphi 0, %s158
    %s176 = sphi 0, %s176
    %s178 = sphi 0, %s176
    %s179 = sphi 0, %s178
    %s193 = sphi 0, %s179
    %s199 = sphi 0, %s201
    %s202 = sphi 0, %s199
    %s203 = sphi 0, %s202
    %s219 = sphi 0, %s203
    %s225 = sphi 0, %s227
    %s228 = sphi 0, %s225
    %s229 = sphi 0, %s228
    %s245 = sphi 0, %s229
  $region4: #{gbottleneck_forward.1} parent=0 // loop_header_branch
    %19 = sbr.rel (%p17) target = $region8
  $region5: #{gbottleneck_forward.1} parent=0 // loop_body
    %s21 = ssub.s32 %s16, 1
    %s22 = ssub.s32 %s16, 2
    %s23 = sadd.s32 %s16, 1
    %s24 = ssub.s32 %s16, %s23
    %p25 = scmp.eq.s32.totalorder %s24, 0
    %s27 = sadd.s32 %s26, 1
    %s28 = scalar_select %p25, %s26, %s27
    %p31 = pneg %p25
    %p32 = scmp.eq.s32.totalorder %s16, 1
    %p33 = por %p31, %p32
    %p34 = scmp.ne.s32.totalorder %s26, %s29
    %p35 = scmp.eq.s32.totalorder %s16, 0
    %p36 = por %p34, %p35
    %p37 = scmp.ne.s32.totalorder %s26, %s29
    %p38 = scmp.eq.s32.totalorder %s21, 1
    %p39 = por %p37, %p38
    %p40 = scmp.ne.s32.totalorder %s29, %s30
    %p41 = scmp.eq.s32.totalorder %s21, 0
    %p42 = por %p40, %p41
    %p43 = scmp.ne.s32.totalorder %s29, %s30
    %p44 = scmp.eq.s32.totalorder %s22, 1
    %p45 = por %p43, %p44
    %p47 = scmp.ne.s32.totalorder %s30, %s46
    %p48 = scmp.eq.s32.totalorder %s22, 0
    %p49 = por %p47, %p48
    %s51 = sadd.s32 %s50, 1
    %p54 = scmp.eq.s32.totalorder %s16, 1
    %p55 = scmp.ne.s32.totalorder %s50, %s52
    %p56 = scmp.eq.s32.totalorder %s16, 0
    %p57 = por %p55, %p56
    %p58 = scmp.ne.s32.totalorder %s50, %s52
    %p59 = scmp.eq.s32.totalorder %s21, 1
    %p60 = por %p58, %p59
    %p61 = scmp.ne.s32.totalorder %s52, %s53
    %p62 = scmp.eq.s32.totalorder %s21, 0
    %p63 = por %p61, %p62
    %p64 = scmp.ne.s32.totalorder %s52, %s53
    %p65 = scmp.eq.s32.totalorder %s22, 1
    %p66 = por %p64, %p65
    %p68 = scmp.ne.s32.totalorder %s53, %s67
    %p69 = scmp.eq.s32.totalorder %s22, 0
    %p70 = por %p68, %p69
    %s72 = sadd.s32 %s71, 1
    %p75 = scmp.eq.s32.totalorder %s16, 1
    %p76 = scmp.ne.s32.totalorder %s71, %s73
    %p77 = scmp.eq.s32.totalorder %s16, 0
    %p78 = por %p76, %p77
    %p79 = scmp.ne.s32.totalorder %s71, %s73
    %p80 = scmp.eq.s32.totalorder %s21, 1
    %p81 = por %p79, %p80
    %p82 = scmp.ne.s32.totalorder %s73, %s74
    %p83 = scmp.eq.s32.totalorder %s21, 0
    %p84 = por %p82, %p83
    %p85 = scmp.ne.s32.totalorder %s73, %s74
    %p86 = scmp.eq.s32.totalorder %s22, 1
    %p87 = por %p85, %p86
    %p89 = scmp.ne.s32.totalorder %s74, %s88
    %p90 = scmp.eq.s32.totalorder %s22, 0
    %p91 = por %p89, %p90
    %s93 = sadd.s32 %s92, 1
    %p96 = scmp.eq.s32.totalorder %s16, 1
    %p97 = scmp.ne.s32.totalorder %s92, %s94
    %p98 = scmp.eq.s32.totalorder %s16, 0
    %p99 = por %p97, %p98
    %p100 = scmp.ne.s32.totalorder %s92, %s94
    %p101 = scmp.eq.s32.totalorder %s21, 1
    %p102 = por %p100, %p101
    %p103 = scmp.ne.s32.totalorder %s94, %s95
    %p104 = scmp.eq.s32.totalorder %s21, 0
    %p105 = por %p103, %p104
    %p106 = scmp.ne.s32.totalorder %s94, %s95
    %p107 = scmp.eq.s32.totalorder %s22, 1
    %p108 = por %p106, %p107
    %p110 = scmp.ne.s32.totalorder %s95, %s109
    %p111 = scmp.eq.s32.totalorder %s22, 0
    %p112 = por %p110, %p111
    %s114 = sadd.s32 %s113, 1
    %p117 = scmp.eq.s32.totalorder %s16, 1
    %p118 = scmp.ne.s32.totalorder %s113, %s115
    %p119 = scmp.eq.s32.totalorder %s16, 0
    %p120 = por %p118, %p119
    %p121 = scmp.ne.s32.totalorder %s113, %s115
    %p122 = scmp.eq.s32.totalorder %s21, 1
    %p123 = por %p121, %p122
    %p124 = scmp.ne.s32.totalorder %s115, %s116
    %p125 = scmp.eq.s32.totalorder %s21, 0
    %p126 = por %p124, %p125
    %p127 = scmp.ne.s32.totalorder %s115, %s116
    %p128 = scmp.eq.s32.totalorder %s22, 1
    %p129 = por %p127, %p128
    %p131 = scmp.ne.s32.totalorder %s116, %s130
    %p132 = scmp.eq.s32.totalorder %s22, 0
    %p133 = por %p131, %p132
    %s135 = sadd.s32 %s134, 1
    %p138 = scmp.eq.s32.totalorder %s16, 1
    %p139 = scmp.ne.s32.totalorder %s134, %s136
    %p140 = scmp.eq.s32.totalorder %s16, 0
    %p141 = por %p139, %p140
    %p142 = scmp.ne.s32.totalorder %s134, %s136
    %p143 = scmp.eq.s32.totalorder %s21, 1
    %p144 = por %p142, %p143
    %p145 = scmp.ne.s32.totalorder %s136, %s137
    %p146 = scmp.eq.s32.totalorder %s21, 0
    %p147 = por %p145, %p146
    %p148 = scmp.ne.s32.totalorder %s136, %s137
    %p149 = scmp.eq.s32.totalorder %s22, 1
    %p150 = por %p148, %p149
    %p152 = scmp.ne.s32.totalorder %s137, %s151
    %p153 = scmp.eq.s32.totalorder %s22, 0
    %p154 = por %p152, %p153
    %s156 = sadd.s32 %s155, 1
    %p159 = scmp.eq.s32.totalorder %s16, 1
    %p160 = scmp.ne.s32.totalorder %s155, %s157
    %p161 = scmp.eq.s32.totalorder %s16, 0
    %p162 = por %p160, %p161
    %p163 = scmp.ne.s32.totalorder %s155, %s157
    %p164 = scmp.eq.s32.totalorder %s21, 1
    %p165 = por %p163, %p164
    %p166 = scmp.ne.s32.totalorder %s157, %s158
    %p167 = scmp.eq.s32.totalorder %s21, 0
    %p168 = por %p166, %p167
    %p169 = scmp.ne.s32.totalorder %s157, %s158
    %p170 = scmp.eq.s32.totalorder %s22, 1
    %p171 = por %p169, %p170
    %p173 = scmp.ne.s32.totalorder %s158, %s172
    %p174 = scmp.eq.s32.totalorder %s22, 0
    %p175 = por %p173, %p174
    %s177 = sadd.s32 %s176, 1
    %p180 = scmp.eq.s32.totalorder %s16, 1
    %p181 = scmp.ne.s32.totalorder %s176, %s178
    %p182 = scmp.eq.s32.totalorder %s16, 0
    %p183 = por %p181, %p182
    %p184 = scmp.ne.s32.totalorder %s176, %s178
    %p185 = scmp.eq.s32.totalorder %s21, 1
    %p186 = por %p184, %p185
    %p187 = scmp.ne.s32.totalorder %s178, %s179
    %p188 = scmp.eq.s32.totalorder %s21, 0
    %p189 = por %p187, %p188
    %p190 = scmp.ne.s32.totalorder %s178, %s179
    %p191 = scmp.eq.s32.totalorder %s22, 1
    %p192 = por %p190, %p191
    %p194 = scmp.ne.s32.totalorder %s179, %s193
    %p195 = scmp.eq.s32.totalorder %s22, 0
    %p196 = por %p194, %p195
    %s197 = ssub.s32 %s16, %s23
    %p198 = scmp.eq.s32.totalorder %s197, 0
    %s200 = sadd.s32 %s199, 1
    %s201 = scalar_select %p198, %s199, %s200
    %p204 = pneg %p198
    %p205 = scmp.eq.s32.totalorder %s16, 1
    %p206 = por %p204, %p205
    %p207 = scmp.ne.s32.totalorder %s199, %s202
    %p208 = scmp.eq.s32.totalorder %s16, 0
    %p209 = por %p207, %p208
    %p210 = scmp.ne.s32.totalorder %s199, %s202
    %p211 = scmp.eq.s32.totalorder %s21, 1
    %p212 = por %p210, %p211
    %p213 = scmp.ne.s32.totalorder %s202, %s203
    %p214 = scmp.eq.s32.totalorder %s21, 0
    %p215 = por %p213, %p214
    %p216 = scmp.ne.s32.totalorder %s202, %s203
    %p217 = scmp.eq.s32.totalorder %s22, 1
    %p218 = por %p216, %p217
    %p220 = scmp.ne.s32.totalorder %s203, %s219
    %p221 = scmp.eq.s32.totalorder %s22, 0
    %p222 = por %p220, %p221
    %s223 = ssub.s32 %s16, %s23
    %p224 = scmp.eq.s32.totalorder %s223, 0
    %s226 = sadd.s32 %s225, 1
    %s227 = scalar_select %p224, %s225, %s226
    %p230 = pneg %p224
    %p231 = scmp.eq.s32.totalorder %s16, 1
    %p232 = por %p230, %p231
    %p233 = scmp.ne.s32.totalorder %s225, %s228
    %p234 = scmp.eq.s32.totalorder %s16, 0
    %p235 = por %p233, %p234
    %p236 = scmp.ne.s32.totalorder %s225, %s228
    %p237 = scmp.eq.s32.totalorder %s21, 1
    %p238 = por %p236, %p237
    %p239 = scmp.ne.s32.totalorder %s228, %s229
    %p240 = scmp.eq.s32.totalorder %s21, 0
    %p241 = por %p239, %p240
    %p242 = scmp.ne.s32.totalorder %s228, %s229
    %p243 = scmp.eq.s32.totalorder %s22, 1
    %p244 = por %p242, %p243
    %p246 = scmp.ne.s32.totalorder %s229, %s245
    %p247 = scmp.eq.s32.totalorder %s22, 0
    %p248 = por %p246, %p247
    %p249 = scmp.le.s32.totalorder 1, %s16
    %p250 = scmp.lt.s32.totalorder %s16, 3
    %p251 = pnand %p249, %p250
    %p252 = pneg %p251
    // Predicated region
    $region9: #{gbottleneck_forward.1} parent=5 // pred_check
      _
    $region10: #{gbottleneck_forward.1} parent=5 // pred_check_branch
      %254 = sbr.rel (%p251) target = $region12
    $region11: #{gbottleneck_forward.1} parent=5 // pred_region
      %s255 = ssub.s32 %s16, 1
      // Predicated region
      $region13: #{gbottleneck_forward.1} parent=11 // pred_check
        %p256 = pneg %p63
      $region14: #{gbottleneck_forward.1} parent=11 // pred_check_branch
        %258 = sbr.rel (%p256) target = $region16
      $region15: #{gbottleneck_forward.1} parent=11 // pred_region
        _
      $region16: #{gbottleneck_forward.1} parent=11 // pred_fallthru
        _
      // Predicated region
      $region17: #{gbottleneck_forward.1} parent=11 // pred_check
        %p259 = pneg %p84
      $region18: #{gbottleneck_forward.1} parent=11 // pred_check_branch
        %261 = sbr.rel (%p259) target = $region20
      $region19: #{gbottleneck_forward.1} parent=11 // pred_region
        _
      $region20: #{gbottleneck_forward.1} parent=11 // pred_fallthru
        _
      // Predicated region
      $region21: #{gbottleneck_forward.1} parent=11 // pred_check
        %p262 = pneg %p105
      $region22: #{gbottleneck_forward.1} parent=11 // pred_check_branch
        %264 = sbr.rel (%p262) target = $region24
      $region23: #{gbottleneck_forward.1} parent=11 // pred_region
        _
      $region24: #{gbottleneck_forward.1} parent=11 // pred_fallthru
        _
      // Predicated region
      $region25: #{gbottleneck_forward.1} parent=11 // pred_check
        %p265 = pneg %p126
      $region26: #{gbottleneck_forward.1} parent=11 // pred_check_branch
        %267 = sbr.rel (%p265) target = $region28
      $region27: #{gbottleneck_forward.1} parent=11 // pred_region
        _
      $region28: #{gbottleneck_forward.1} parent=11 // pred_fallthru
        _
      // Predicated region
      $region29: #{gbottleneck_forward.1} parent=11 // pred_check
        %p268 = pneg %p147
      $region30: #{gbottleneck_forward.1} parent=11 // pred_check_branch
        %270 = sbr.rel (%p268) target = $region32
      $region31: #{gbottleneck_forward.1} parent=11 // pred_region
        _
      $region32: #{gbottleneck_forward.1} parent=11 // pred_fallthru
        _
      // Predicated region
      $region33: #{gbottleneck_forward.1} parent=11 // pred_check
        %p271 = pneg %p168
      $region34: #{gbottleneck_forward.1} parent=11 // pred_check_branch
        %273 = sbr.rel (%p271) target = $region36
      $region35: #{gbottleneck_forward.1} parent=11 // pred_region
        _
      $region36: #{gbottleneck_forward.1} parent=11 // pred_fallthru
        _
      // Predicated region
      $region37: #{gbottleneck_forward.1} parent=11 // pred_check
        %p274 = pneg %p189
      $region38: #{gbottleneck_forward.1} parent=11 // pred_check_branch
        %276 = sbr.rel (%p274) target = $region40
      $region39: #{gbottleneck_forward.1} parent=11 // pred_region
        _
      $region40: #{gbottleneck_forward.1} parent=11 // pred_fallthru
        _
    $region12: #{gbottleneck_forward.1} parent=5 // pred_fallthru
      _
    %p277 = scmp.lt.s32.totalorder %s16, 2
    // Predicated region
    $region41: #{gbottleneck_forward.1} parent=5 // pred_check
      %p278 = pneg %p277
    $region42: #{gbottleneck_forward.1} parent=5 // pred_check_branch
      %280 = sbr.rel (%p278) target = $region44
    $region43: #{gbottleneck_forward.1} parent=5 // pred_region
      // Predicated region
      $region45: #{gbottleneck_forward.1} parent=43 // pred_check
        %p281 = pneg %p36
      $region46: #{gbottleneck_forward.1} parent=43 // pred_check_branch
        %283 = sbr.rel (%p281) target = $region48
      $region47: #{gbottleneck_forward.1} parent=43 // pred_region
        %p284 = scmp.lt.s32.totalorder %s16, 1
        %s285 = scalar_select %p284, %s16, 1
        %s286 = smul.addr %s285, 16
        %s287 = smul.addr %s286, 8
        %s288 = scalar_lea.vmem %s0, %s287
      $region48: #{gbottleneck_forward.1} parent=43 // pred_fallthru
        _
    $region44: #{gbottleneck_forward.1} parent=5 // pred_fallthru
      _
    %p289 = scmp.le.s32.totalorder 1, %s16
    %p290 = scmp.lt.s32.totalorder %s16, 3
    %p291 = pnand %p289, %p290
    %p292 = pneg %p291
    // Predicated region
    $region49: #{gbottleneck_forward.1} parent=5 // pred_check
      _
    $region50: #{gbottleneck_forward.1} parent=5 // pred_check_branch
      %294 = sbr.rel (%p291) target = $region52
    $region51: #{gbottleneck_forward.1} parent=5 // pred_region
      %s295 = ssub.s32 %s16, 1
      %p296 = scmp.lt.s32.totalorder %s21, 1
      %s297 = scalar_select %p296, %s21, 1
      %s298 = smul.addr %s297, 16
      %s299 = smul.addr %s298, 8
      %s300 = scalar_lea.vmem %s0, %s299
      %p301 = pneg %p42
      %p302 = pneg %p39
      %p303 = pneg %p63
      %p304 = pneg %p60
      %p305 = pneg %p84
      %p306 = pneg %p81
      %p307 = pneg %p105
      %p308 = pneg %p102
      %p309 = pneg %p126
      %p310 = pneg %p123
      %p311 = pneg %p147
      %p312 = pneg %p144
      %p313 = pneg %p168
      %p314 = pneg %p165
      %p315 = pneg %p189
      %p316 = pneg %p186
      %p317 = pneg %p215
      %p318 = pneg %p212
      %p319 = scmp.lt.s32.totalorder %s21, 1
      %s320 = scalar_select %p319, %s21, 1
      %s321 = smul.addr %s320, 16
      %s322 = smul.addr %s321, 8
      %s323 = scalar_lea.vmem %s8, %s322
      %p324 = pneg %p241
      %p325 = pneg %p238
      %p326 = scmp.lt.s32.totalorder %s21, 1
      %s327 = scalar_select %p326, %s21, 1
      %s328 = smul.addr %s327, 16
      %s329 = smul.addr %s328, 8
      %s330 = scalar_lea.vmem %s9, %s329
      %p331 = scmp.lt.s32.totalorder %s21, 1
      %s332 = scalar_select %p331, %s21, 1
      %s333 = smul.addr %s332, 16
      %s334 = smul.addr %s333, 8
      %s335 = scalar_lea.vmem %s0, %s334
      %p336 = scmp.lt.s32.totalorder %s21, 1
      %s337 = scalar_select %p336, %s21, 1
      %s338 = smul.addr %s337, 16
      %s339 = smul.addr %s338, 8
      %s340 = scalar_lea.vmem %s8, %s339
      %p341 = scmp.lt.s32.totalorder %s21, 1
      %s342 = scalar_select %p341, %s21, 1
      %s343 = smul.addr %s342, 16
      %s344 = smul.addr %s343, 8
      %s345 = scalar_lea.vmem %s9, %s344
      %v346 = vld [vmem:[%s1] sm:$0xf]
      %v347 = vld [vmem:[%s1 + $0x4] sm:$0xf]
      %v348 = vld [vmem:[%s1 + $0x8] sm:$0xf]
      %v349 = vld [vmem:[%s1 + $0xc] sm:$0xf]
      %v350 = vld [vmem:[%s1 + $0x10] sm:$0xf]
      %v351 = vld [vmem:[%s1 + $0x14] sm:$0xf]
      %v352 = vld [vmem:[%s1 + $0x18] sm:$0xf]
      %v353 = vld [vmem:[%s1 + $0x1c] sm:$0xf]
      %v354 = vld [vmem:[%s1 + $0x20] sm:$0xf]
      %v355 = vld [vmem:[%s1 + $0x24] sm:$0xf]
      %v356 = vld [vmem:[%s1 + $0x28] sm:$0xf]
      %v357 = vld [vmem:[%s1 + $0x2c] sm:$0xf]
      %v358 = vld [vmem:[%s1 + $0x30] sm:$0xf]
      %v359 = vld [vmem:[%s1 + $0x34] sm:$0xf]
      %v360 = vld [vmem:[%s1 + $0x38] sm:$0xf]
      %v361 = vld [vmem:[%s1 + $0x3c] sm:$0xf]
      %v362 = vld [vmem:[%s335] sm:$0xff]
      %v363 = vld [vmem:[%s335 + $0x8] sm:$0xff]
      %v364 = vld [vmem:[%s335 + $0x10] sm:$0xff]
      %v365 = vld [vmem:[%s335 + $0x18] sm:$0xff]
      %v366 = vld [vmem:[%s335 + $0x20] sm:$0xff]
      %v367 = vld [vmem:[%s335 + $0x28] sm:$0xff]
      %v368 = vld [vmem:[%s335 + $0x30] sm:$0xff]
      %v369 = vld [vmem:[%s335 + $0x38] sm:$0xff]
      %v370 = vld [vmem:[%s335 + $0x40] sm:$0xff]
      %v371 = vld [vmem:[%s335 + $0x48] sm:$0xff]
      %v372 = vld [vmem:[%s335 + $0x50] sm:$0xff]
      %v373 = vld [vmem:[%s335 + $0x58] sm:$0xff]
      %v374 = vld [vmem:[%s335 + $0x60] sm:$0xff]
      %v375 = vld [vmem:[%s335 + $0x68] sm:$0xff]
      %v376 = vld [vmem:[%s335 + $0x70] sm:$0xff]
      %v377 = vld [vmem:[%s335 + $0x78] sm:$0xff]
      %v378 = vld [vmem:[%s2] sm:$0xff]
      %v379 = vld [vmem:[%s2 + $0x8] sm:$0xff]
      %v380 = vld [vmem:[%s2 + $0x10] sm:$0xff]
      %v381 = vld [vmem:[%s2 + $0x18] sm:$0xff]
      %v382 = vld [vmem:[%s2 + $0x20] sm:$0xff]
      %v383 = vld [vmem:[%s2 + $0x28] sm:$0xff]
      %v384 = vld [vmem:[%s2 + $0x30] sm:$0xff]
      %v385 = vld [vmem:[%s2 + $0x38] sm:$0xff]
      %v386 = vld [vmem:[%s2 + $0x40] sm:$0xff]
      %v387 = vld [vmem:[%s2 + $0x48] sm:$0xff]
      %v388 = vld [vmem:[%s2 + $0x50] sm:$0xff]
      %v389 = vld [vmem:[%s2 + $0x58] sm:$0xff]
      %v390 = vld [vmem:[%s2 + $0x60] sm:$0xff]
      %v391 = vld [vmem:[%s2 + $0x68] sm:$0xff]
      %v392 = vld [vmem:[%s2 + $0x70] sm:$0xff]
      %v393 = vld [vmem:[%s2 + $0x78] sm:$0xff]
      %v394 = vld [vmem:[%s3] sm:$0x1]
      %v395 = vpack.c.bf16 %v363, %v362
      %v396 = vpack.c.bf16 %v365, %v364
      %v397 = vpack.c.bf16 %v367, %v366
      %v398 = vpack.c.bf16 %v369, %v368
      %v399 = vpack.c.bf16 %v371, %v370
      %v400 = vpack.c.bf16 %v373, %v372
      %v401 = vpack.c.bf16 %v375, %v374
      %v402 = vpack.c.bf16 %v377, %v376
      %v419 = vunpack.c.l.b16 %v378
      %v420 = vunpack.c.h.b16 %v378
      %v421 = vunpack.c.l.b16 %v379
      %v422 = vunpack.c.h.b16 %v379
      %v423 = vunpack.c.l.b16 %v380
      %v424 = vunpack.c.h.b16 %v380
      %v425 = vunpack.c.l.b16 %v381
      %v426 = vunpack.c.h.b16 %v381
      %v427 = vunpack.c.l.b16 %v382
      %v428 = vunpack.c.h.b16 %v382
      %v429 = vunpack.c.l.b16 %v383
      %v430 = vunpack.c.h.b16 %v383
      %v431 = vunpack.c.l.b16 %v384
      %v432 = vunpack.c.h.b16 %v384
      %v433 = vunpack.c.l.b16 %v385
      %v434 = vunpack.c.h.b16 %v385
      %v435 = vunpack.c.l.b16 %v386
      %v436 = vunpack.c.h.b16 %v386
      %v437 = vunpack.c.l.b16 %v387
      %v438 = vunpack.c.h.b16 %v387
      %v439 = vunpack.c.l.b16 %v388
      %v440 = vunpack.c.h.b16 %v388
      %v441 = vunpack.c.l.b16 %v389
      %v442 = vunpack.c.h.b16 %v389
      %v443 = vunpack.c.l.b16 %v390
      %v444 = vunpack.c.h.b16 %v390
      %v445 = vunpack.c.l.b16 %v391
      %v446 = vunpack.c.h.b16 %v391
      %v447 = vunpack.c.l.b16 %v392
      %v448 = vunpack.c.h.b16 %v392
      %v449 = vunpack.c.l.b16 %v393
      %v450 = vunpack.c.h.b16 %v393
      %v451 = vpack.c.b16 %v421, %v419
      %v452 = vpack.c.b16 %v422, %v420
      %v453 = vpack.c.b16 %v425, %v423
      %v454 = vpack.c.b16 %v426, %v424
      %v455 = vpack.c.b16 %v429, %v427
      %v456 = vpack.c.b16 %v430, %v428
      %v457 = vpack.c.b16 %v433, %v431
      %v458 = vpack.c.b16 %v434, %v432
      %v459 = vpack.c.b16 %v437, %v435
      %v460 = vpack.c.b16 %v438, %v436
      %v461 = vpack.c.b16 %v441, %v439
      %v462 = vpack.c.b16 %v442, %v440
      %v463 = vpack.c.b16 %v445, %v443
      %v464 = vpack.c.b16 %v446, %v444
      %v465 = vpack.c.b16 %v449, %v447
      %v466 = vpack.c.b16 %v450, %v448
      %483 = vmatpush.bf16.msra.mxu0 %v465
      %484 = vmatpush.bf16.msra.mxu0 %v463
      %485 = vmatpush.bf16.msra.mxu0 %v461
      %486 = vmatpush.bf16.msra.mxu0 %v459
      %487 = vmatpush.bf16.msra.mxu0 %v457
      %488 = vmatpush.bf16.msra.mxu0 %v455
      %489 = vmatpush.bf16.msra.mxu0 %v453
      %490 = vmatpush.bf16.msra.mxu0 %v451
      %491 = vmatmul.bf16.gmra.mxu0 %v395
      %v492 = vpop.f32.mrf.mxu0
      %v493 = vadd.f32 0.0, %v492
      %v494 = vpop.f32.mrf.mxu0
      %v495 = vadd.f32 0.0, %v494
      %496 = vmatmul.bf16.gmra.mxu0 %v396
      %v497 = vpop.f32.mrf.mxu0
      %v498 = vadd.f32 0.0, %v497
      %v499 = vpop.f32.mrf.mxu0
      %v500 = vadd.f32 0.0, %v499
      %501 = vmatmul.bf16.gmra.mxu0 %v397
      %v502 = vpop.f32.mrf.mxu0
      %v503 = vadd.f32 0.0, %v502
      %v504 = vpop.f32.mrf.mxu0
      %v505 = vadd.f32 0.0, %v504
      %506 = vmatmul.bf16.gmra.mxu0 %v398
      %v507 = vpop.f32.mrf.mxu0
      %v508 = vadd.f32 0.0, %v507
      %v509 = vpop.f32.mrf.mxu0
      %v510 = vadd.f32 0.0, %v509
      %511 = vmatmul.bf16.gmra.mxu0 %v399
      %v512 = vpop.f32.mrf.mxu0
      %v513 = vadd.f32 0.0, %v512
      %v514 = vpop.f32.mrf.mxu0
      %v515 = vadd.f32 0.0, %v514
      %516 = vmatmul.bf16.gmra.mxu0 %v400
      %v517 = vpop.f32.mrf.mxu0
      %v518 = vadd.f32 0.0, %v517
      %v519 = vpop.f32.mrf.mxu0
      %v520 = vadd.f32 0.0, %v519
      %521 = vmatmul.bf16.gmra.mxu0 %v401
      %v522 = vpop.f32.mrf.mxu0
      %v523 = vadd.f32 0.0, %v522
      %v524 = vpop.f32.mrf.mxu0
      %v525 = vadd.f32 0.0, %v524
      %526 = vmatmul.bf16.gmra.mxu0 %v402
      %v527 = vpop.f32.mrf.mxu0
      %v528 = vadd.f32 0.0, %v527
      %v529 = vpop.f32.mrf.mxu0
      %v530 = vadd.f32 0.0, %v529
      %531 = vdwg.mxu0
      %532 = vmatpush.bf16.msra.mxu0 %v466
      %533 = vmatpush.bf16.msra.mxu0 %v464
      %534 = vmatpush.bf16.msra.mxu0 %v462
      %535 = vmatpush.bf16.msra.mxu0 %v460
      %536 = vmatpush.bf16.msra.mxu0 %v458
      %537 = vmatpush.bf16.msra.mxu0 %v456
      %538 = vmatpush.bf16.msra.mxu0 %v454
      %539 = vmatpush.bf16.msra.mxu0 %v452
      %540 = vmatmul.bf16.gmra.mxu0 %v395
      %v541 = vpop.f32.mrf.mxu0
      %v542 = vadd.f32 0.0, %v541
      %v543 = vpop.f32.mrf.mxu0
      %v544 = vadd.f32 0.0, %v543
      %545 = vmatmul.bf16.gmra.mxu0 %v396
      %v546 = vpop.f32.mrf.mxu0
      %v547 = vadd.f32 0.0, %v546
      %v548 = vpop.f32.mrf.mxu0
      %v549 = vadd.f32 0.0, %v548
      %550 = vmatmul.bf16.gmra.mxu0 %v397
      %v551 = vpop.f32.mrf.mxu0
      %v552 = vadd.f32 0.0, %v551
      %v553 = vpop.f32.mrf.mxu0
      %v554 = vadd.f32 0.0, %v553
      %555 = vmatmul.bf16.gmra.mxu0 %v398
      %v556 = vpop.f32.mrf.mxu0
      %v557 = vadd.f32 0.0, %v556
      %v558 = vpop.f32.mrf.mxu0
      %v559 = vadd.f32 0.0, %v558
      %560 = vmatmul.bf16.gmra.mxu0 %v399
      %v561 = vpop.f32.mrf.mxu0
      %v562 = vadd.f32 0.0, %v561
      %v563 = vpop.f32.mrf.mxu0
      %v564 = vadd.f32 0.0, %v563
      %565 = vmatmul.bf16.gmra.mxu0 %v400
      %v566 = vpop.f32.mrf.mxu0
      %v567 = vadd.f32 0.0, %v566
      %v568 = vpop.f32.mrf.mxu0
      %v569 = vadd.f32 0.0, %v568
      %570 = vmatmul.bf16.gmra.mxu0 %v401
      %v571 = vpop.f32.mrf.mxu0
      %v572 = vadd.f32 0.0, %v571
      %v573 = vpop.f32.mrf.mxu0
      %v574 = vadd.f32 0.0, %v573
      %575 = vmatmul.bf16.gmra.mxu0 %v402
      %v576 = vpop.f32.mrf.mxu0
      %v577 = vadd.f32 0.0, %v576
      %v578 = vpop.f32.mrf.mxu0
      %v579 = vadd.f32 0.0, %v578
      %580 = vdwg.mxu0
      %v581 = vpack.c.bf16 %v495, %v493
      %v582 = vpack.c.bf16 %v500, %v498
      %v583 = vpack.c.bf16 %v505, %v503
      %v584 = vpack.c.bf16 %v510, %v508
      %v585 = vpack.c.bf16 %v515, %v513
      %v586 = vpack.c.bf16 %v520, %v518
      %v587 = vpack.c.bf16 %v525, %v523
      %v588 = vpack.c.bf16 %v530, %v528
      %v605 = vunpack.c.l.b16 %v346
      %v606 = vunpack.c.l.b16 %v347
      %v607 = vunpack.c.l.b16 %v348
      %v608 = vunpack.c.l.b16 %v349
      %v609 = vunpack.c.l.b16 %v350
      %v610 = vunpack.c.l.b16 %v351
      %v611 = vunpack.c.l.b16 %v352
      %v612 = vunpack.c.l.b16 %v353
      %v613 = vunpack.c.l.b16 %v354
      %v614 = vunpack.c.l.b16 %v355
      %v615 = vunpack.c.l.b16 %v356
      %v616 = vunpack.c.l.b16 %v357
      %v617 = vunpack.c.l.b16 %v358
      %v618 = vunpack.c.l.b16 %v359
      %v619 = vunpack.c.l.b16 %v360
      %v620 = vunpack.c.l.b16 %v361
      %v621 = vpack.c.b16 %v606, %v605
      %v622 = vpack.c.b16 %v608, %v607
      %v623 = vpack.c.b16 %v610, %v609
      %v624 = vpack.c.b16 %v612, %v611
      %v625 = vpack.c.b16 %v614, %v613
      %v626 = vpack.c.b16 %v616, %v615
      %v627 = vpack.c.b16 %v618, %v617
      %v628 = vpack.c.b16 %v620, %v619
      %637 = vmatpush.bf16.msra.mxu0 %v588
      %638 = vmatpush.bf16.msra.mxu0 %v587
      %639 = vmatpush.bf16.msra.mxu0 %v586
      %640 = vmatpush.bf16.msra.mxu0 %v585
      %641 = vmatpush.bf16.msra.mxu0 %v584
      %642 = vmatpush.bf16.msra.mxu0 %v583
      %643 = vmatpush.bf16.msra.mxu0 %v582
      %644 = vmatpush.bf16.msra.mxu0 %v581
      %645 = vmatmul.bf16.gmra.mxu0 %v621
      %v646 = vpop.f32.mrf.mxu0
      %v647 = vadd.f32 %v542, %v646
      %v648 = vpop.f32.mrf.mxu0
      %v649 = vadd.f32 %v544, %v648
      %650 = vmatmul.bf16.gmra.mxu0 %v622
      %v651 = vpop.f32.mrf.mxu0
      %v652 = vadd.f32 %v547, %v651
      %v653 = vpop.f32.mrf.mxu0
      %v654 = vadd.f32 %v549, %v653
      %655 = vmatmul.bf16.gmra.mxu0 %v623
      %v656 = vpop.f32.mrf.mxu0
      %v657 = vadd.f32 %v552, %v656
      %v658 = vpop.f32.mrf.mxu0
      %v659 = vadd.f32 %v554, %v658
      %660 = vmatmul.bf16.gmra.mxu0 %v624
      %v661 = vpop.f32.mrf.mxu0
      %v662 = vadd.f32 %v557, %v661
      %v663 = vpop.f32.mrf.mxu0
      %v664 = vadd.f32 %v559, %v663
      %665 = vmatmul.bf16.gmra.mxu0 %v625
      %v666 = vpop.f32.mrf.mxu0
      %v667 = vadd.f32 %v562, %v666
      %v668 = vpop.f32.mrf.mxu0
      %v669 = vadd.f32 %v564, %v668
      %670 = vmatmul.bf16.gmra.mxu0 %v626
      %v671 = vpop.f32.mrf.mxu0
      %v672 = vadd.f32 %v567, %v671
      %v673 = vpop.f32.mrf.mxu0
      %v674 = vadd.f32 %v569, %v673
      %675 = vmatmul.bf16.gmra.mxu0 %v627
      %v676 = vpop.f32.mrf.mxu0
      %v677 = vadd.f32 %v572, %v676
      %v678 = vpop.f32.mrf.mxu0
      %v679 = vadd.f32 %v574, %v678
      %680 = vmatmul.bf16.gmra.mxu0 %v628
      %v681 = vpop.f32.mrf.mxu0
      %v682 = vadd.f32 %v577, %v681
      %v683 = vpop.f32.mrf.mxu0
      %v684 = vadd.f32 %v579, %v683
      %685 = vdwg.mxu0
      %v687 = vperm.slane %v394, 0
      %v689 = vadd.f32 %v647, %v687
      %v690 = vadd.f32 %v649, %v687
      %v691 = vadd.f32 %v652, %v687
      %v692 = vadd.f32 %v654, %v687
      %v693 = vadd.f32 %v657, %v687
      %v694 = vadd.f32 %v659, %v687
      %v695 = vadd.f32 %v662, %v687
      %v696 = vadd.f32 %v664, %v687
      %v697 = vadd.f32 %v667, %v687
      %v698 = vadd.f32 %v669, %v687
      %v699 = vadd.f32 %v672, %v687
      %v700 = vadd.f32 %v674, %v687
      %v701 = vadd.f32 %v677, %v687
      %v702 = vadd.f32 %v679, %v687
      %v703 = vadd.f32 %v682, %v687
      %v704 = vadd.f32 %v684, %v687
      %v705 = vmax.f32 %v689, 0.0
      %v706 = vmax.f32 %v690, 0.0
      %v707 = vmax.f32 %v691, 0.0
      %v708 = vmax.f32 %v692, 0.0
      %v709 = vmax.f32 %v693, 0.0
      %v710 = vmax.f32 %v694, 0.0
      %v711 = vmax.f32 %v695, 0.0
      %v712 = vmax.f32 %v696, 0.0
      %v713 = vmax.f32 %v697, 0.0
      %v714 = vmax.f32 %v698, 0.0
      %v715 = vmax.f32 %v699, 0.0
      %v716 = vmax.f32 %v700, 0.0
      %v717 = vmax.f32 %v701, 0.0
      %v718 = vmax.f32 %v702, 0.0
      %v719 = vmax.f32 %v703, 0.0
      %v720 = vmax.f32 %v704, 0.0
      %v721 = vld [vmem:[%s4] sm:$0xff]
      %v722 = vld [vmem:[%s4 + $0x8] sm:$0xff]
      %v723 = vld [vmem:[%s4 + $0x10] sm:$0xff]
      %v724 = vld [vmem:[%s4 + $0x18] sm:$0xff]
      %v725 = vld [vmem:[%s4 + $0x20] sm:$0xff]
      %v726 = vld [vmem:[%s4 + $0x28] sm:$0xff]
      %v727 = vld [vmem:[%s4 + $0x30] sm:$0xff]
      %v728 = vld [vmem:[%s4 + $0x38] sm:$0xff]
      %v729 = vld [vmem:[%s4 + $0x40] sm:$0xff]
      %v730 = vld [vmem:[%s4 + $0x48] sm:$0xff]
      %v731 = vld [vmem:[%s4 + $0x50] sm:$0xff]
      %v732 = vld [vmem:[%s4 + $0x58] sm:$0xff]
      %v733 = vld [vmem:[%s4 + $0x60] sm:$0xff]
      %v734 = vld [vmem:[%s4 + $0x68] sm:$0xff]
      %v735 = vld [vmem:[%s4 + $0x70] sm:$0xff]
      %v736 = vld [vmem:[%s4 + $0x78] sm:$0xff]
      %v737 = vld [vmem:[%s5] sm:$0x1]
      %v738 = vpack.c.bf16 %v706, %v705
      %v739 = vpack.c.bf16 %v708, %v707
      %v740 = vpack.c.bf16 %v710, %v709
      %v741 = vpack.c.bf16 %v712, %v711
      %v742 = vpack.c.bf16 %v714, %v713
      %v743 = vpack.c.bf16 %v716, %v715
      %v744 = vpack.c.bf16 %v718, %v717
      %v745 = vpack.c.bf16 %v720, %v719
      %v762 = vunpack.c.l.b16 %v721
      %v763 = vunpack.c.h.b16 %v721
      %v764 = vunpack.c.l.b16 %v722
      %v765 = vunpack.c.h.b16 %v722
      %v766 = vunpack.c.l.b16 %v723
      %v767 = vunpack.c.h.b16 %v723
      %v768 = vunpack.c.l.b16 %v724
      %v769 = vunpack.c.h.b16 %v724
      %v770 = vunpack.c.l.b16 %v725
      %v771 = vunpack.c.h.b16 %v725
      %v772 = vunpack.c.l.b16 %v726
      %v773 = vunpack.c.h.b16 %v726
      %v774 = vunpack.c.l.b16 %v727
      %v775 = vunpack.c.h.b16 %v727
      %v776 = vunpack.c.l.b16 %v728
      %v777 = vunpack.c.h.b16 %v728
      %v778 = vunpack.c.l.b16 %v729
      %v779 = vunpack.c.h.b16 %v729
      %v780 = vunpack.c.l.b16 %v730
      %v781 = vunpack.c.h.b16 %v730
      %v782 = vunpack.c.l.b16 %v731
      %v783 = vunpack.c.h.b16 %v731
      %v784 = vunpack.c.l.b16 %v732
      %v785 = vunpack.c.h.b16 %v732
      %v786 = vunpack.c.l.b16 %v733
      %v787 = vunpack.c.h.b16 %v733
      %v788 = vunpack.c.l.b16 %v734
      %v789 = vunpack.c.h.b16 %v734
      %v790 = vunpack.c.l.b16 %v735
      %v791 = vunpack.c.h.b16 %v735
      %v792 = vunpack.c.l.b16 %v736
      %v793 = vunpack.c.h.b16 %v736
      %v794 = vpack.c.b16 %v764, %v762
      %v795 = vpack.c.b16 %v765, %v763
      %v796 = vpack.c.b16 %v768, %v766
      %v797 = vpack.c.b16 %v769, %v767
      %v798 = vpack.c.b16 %v772, %v770
      %v799 = vpack.c.b16 %v773, %v771
      %v800 = vpack.c.b16 %v776, %v774
      %v801 = vpack.c.b16 %v777, %v775
      %v802 = vpack.c.b16 %v780, %v778
      %v803 = vpack.c.b16 %v781, %v779
      %v804 = vpack.c.b16 %v784, %v782
      %v805 = vpack.c.b16 %v785, %v783
      %v806 = vpack.c.b16 %v788, %v786
      %v807 = vpack.c.b16 %v789, %v787
      %v808 = vpack.c.b16 %v792, %v790
      %v809 = vpack.c.b16 %v793, %v791
      %826 = vmatpush.bf16.msra.mxu0 %v808
      %827 = vmatpush.bf16.msra.mxu0 %v806
      %828 = vmatpush.bf16.msra.mxu0 %v804
      %829 = vmatpush.bf16.msra.mxu0 %v802
      %830 = vmatpush.bf16.msra.mxu0 %v800
      %831 = vmatpush.bf16.msra.mxu0 %v798
      %832 = vmatpush.bf16.msra.mxu0 %v796
      %833 = vmatpush.bf16.msra.mxu0 %v794
      %834 = vmatmul.bf16.gmra.mxu0 %v738
      %v835 = vpop.f32.mrf.mxu0
      %v836 = vadd.f32 0.0, %v835
      %v837 = vpop.f32.mrf.mxu0
      %v838 = vadd.f32 0.0, %v837
      %839 = vmatmul.bf16.gmra.mxu0 %v739
      %v840 = vpop.f32.mrf.mxu0
      %v841 = vadd.f32 0.0, %v840
      %v842 = vpop.f32.mrf.mxu0
      %v843 = vadd.f32 0.0, %v842
      %844 = vmatmul.bf16.gmra.mxu0 %v740
      %v845 = vpop.f32.mrf.mxu0
      %v846 = vadd.f32 0.0, %v845
      %v847 = vpop.f32.mrf.mxu0
      %v848 = vadd.f32 0.0, %v847
      %849 = vmatmul.bf16.gmra.mxu0 %v741
      %v850 = vpop.f32.mrf.mxu0
      %v851 = vadd.f32 0.0, %v850
      %v852 = vpop.f32.mrf.mxu0
      %v853 = vadd.f32 0.0, %v852
      %854 = vmatmul.bf16.gmra.mxu0 %v742
      %v855 = vpop.f32.mrf.mxu0
      %v856 = vadd.f32 0.0, %v855
      %v857 = vpop.f32.mrf.mxu0
      %v858 = vadd.f32 0.0, %v857
      %859 = vmatmul.bf16.gmra.mxu0 %v743
      %v860 = vpop.f32.mrf.mxu0
      %v861 = vadd.f32 0.0, %v860
      %v862 = vpop.f32.mrf.mxu0
      %v863 = vadd.f32 0.0, %v862
      %864 = vmatmul.bf16.gmra.mxu0 %v744
      %v865 = vpop.f32.mrf.mxu0
      %v866 = vadd.f32 0.0, %v865
      %v867 = vpop.f32.mrf.mxu0
      %v868 = vadd.f32 0.0, %v867
      %869 = vmatmul.bf16.gmra.mxu0 %v745
      %v870 = vpop.f32.mrf.mxu0
      %v871 = vadd.f32 0.0, %v870
      %v872 = vpop.f32.mrf.mxu0
      %v873 = vadd.f32 0.0, %v872
      %874 = vdwg.mxu0
      %875 = vmatpush.bf16.msra.mxu0 %v809
      %876 = vmatpush.bf16.msra.mxu0 %v807
      %877 = vmatpush.bf16.msra.mxu0 %v805
      %878 = vmatpush.bf16.msra.mxu0 %v803
      %879 = vmatpush.bf16.msra.mxu0 %v801
      %880 = vmatpush.bf16.msra.mxu0 %v799
      %881 = vmatpush.bf16.msra.mxu0 %v797
      %882 = vmatpush.bf16.msra.mxu0 %v795
      %883 = vmatmul.bf16.gmra.mxu0 %v738
      %v884 = vpop.f32.mrf.mxu0
      %v885 = vadd.f32 0.0, %v884
      %v886 = vpop.f32.mrf.mxu0
      %v887 = vadd.f32 0.0, %v886
      %888 = vmatmul.bf16.gmra.mxu0 %v739
      %v889 = vpop.f32.mrf.mxu0
      %v890 = vadd.f32 0.0, %v889
      %v891 = vpop.f32.mrf.mxu0
      %v892 = vadd.f32 0.0, %v891
      %893 = vmatmul.bf16.gmra.mxu0 %v740
      %v894 = vpop.f32.mrf.mxu0
      %v895 = vadd.f32 0.0, %v894
      %v896 = vpop.f32.mrf.mxu0
      %v897 = vadd.f32 0.0, %v896
      %898 = vmatmul.bf16.gmra.mxu0 %v741
      %v899 = vpop.f32.mrf.mxu0
      %v900 = vadd.f32 0.0, %v899
      %v901 = vpop.f32.mrf.mxu0
      %v902 = vadd.f32 0.0, %v901
      %903 = vmatmul.bf16.gmra.mxu0 %v742
      %v904 = vpop.f32.mrf.mxu0
      %v905 = vadd.f32 0.0, %v904
      %v906 = vpop.f32.mrf.mxu0
      %v907 = vadd.f32 0.0, %v906
      %908 = vmatmul.bf16.gmra.mxu0 %v743
      %v909 = vpop.f32.mrf.mxu0
      %v910 = vadd.f32 0.0, %v909
      %v911 = vpop.f32.mrf.mxu0
      %v912 = vadd.f32 0.0, %v911
      %913 = vmatmul.bf16.gmra.mxu0 %v744
      %v914 = vpop.f32.mrf.mxu0
      %v915 = vadd.f32 0.0, %v914
      %v916 = vpop.f32.mrf.mxu0
      %v917 = vadd.f32 0.0, %v916
      %918 = vmatmul.bf16.gmra.mxu0 %v745
      %v919 = vpop.f32.mrf.mxu0
      %v920 = vadd.f32 0.0, %v919
      %v921 = vpop.f32.mrf.mxu0
      %v922 = vadd.f32 0.0, %v921
      %923 = vdwg.mxu0
      %v924 = vpack.c.bf16 %v838, %v836
      %v925 = vpack.c.bf16 %v843, %v841
      %v926 = vpack.c.bf16 %v848, %v846
      %v927 = vpack.c.bf16 %v853, %v851
      %v928 = vpack.c.bf16 %v858, %v856
      %v929 = vpack.c.bf16 %v863, %v861
      %v930 = vpack.c.bf16 %v868, %v866
      %v931 = vpack.c.bf16 %v873, %v871
      %932 = vmatpush.bf16.msra.mxu0 %v931
      %933 = vmatpush.bf16.msra.mxu0 %v930
      %934 = vmatpush.bf16.msra.mxu0 %v929
      %935 = vmatpush.bf16.msra.mxu0 %v928
      %936 = vmatpush.bf16.msra.mxu0 %v927
      %937 = vmatpush.bf16.msra.mxu0 %v926
      %938 = vmatpush.bf16.msra.mxu0 %v925
      %939 = vmatpush.bf16.msra.mxu0 %v924
      %940 = vmatmul.bf16.gmra.mxu0 %v621
      %v941 = vpop.f32.mrf.mxu0
      %v942 = vadd.f32 %v885, %v941
      %v943 = vpop.f32.mrf.mxu0
      %v944 = vadd.f32 %v887, %v943
      %945 = vmatmul.bf16.gmra.mxu0 %v622
      %v946 = vpop.f32.mrf.mxu0
      %v947 = vadd.f32 %v890, %v946
      %v948 = vpop.f32.mrf.mxu0
      %v949 = vadd.f32 %v892, %v948
      %950 = vmatmul.bf16.gmra.mxu0 %v623
      %v951 = vpop.f32.mrf.mxu0
      %v952 = vadd.f32 %v895, %v951
      %v953 = vpop.f32.mrf.mxu0
      %v954 = vadd.f32 %v897, %v953
      %955 = vmatmul.bf16.gmra.mxu0 %v624
      %v956 = vpop.f32.mrf.mxu0
      %v957 = vadd.f32 %v900, %v956
      %v958 = vpop.f32.mrf.mxu0
      %v959 = vadd.f32 %v902, %v958
      %960 = vmatmul.bf16.gmra.mxu0 %v625
      %v961 = vpop.f32.mrf.mxu0
      %v962 = vadd.f32 %v905, %v961
      %v963 = vpop.f32.mrf.mxu0
      %v964 = vadd.f32 %v907, %v963
      %965 = vmatmul.bf16.gmra.mxu0 %v626
      %v966 = vpop.f32.mrf.mxu0
      %v967 = vadd.f32 %v910, %v966
      %v968 = vpop.f32.mrf.mxu0
      %v969 = vadd.f32 %v912, %v968
      %970 = vmatmul.bf16.gmra.mxu0 %v627
      %v971 = vpop.f32.mrf.mxu0
      %v972 = vadd.f32 %v915, %v971
      %v973 = vpop.f32.mrf.mxu0
      %v974 = vadd.f32 %v917, %v973
      %975 = vmatmul.bf16.gmra.mxu0 %v628
      %v976 = vpop.f32.mrf.mxu0
      %v977 = vadd.f32 %v920, %v976
      %v978 = vpop.f32.mrf.mxu0
      %v979 = vadd.f32 %v922, %v978
      %980 = vdwg.mxu0
      %v982 = vperm.slane %v737, 0
      %v984 = vadd.f32 %v942, %v982
      %v985 = vadd.f32 %v944, %v982
      %v986 = vadd.f32 %v947, %v982
      %v987 = vadd.f32 %v949, %v982
      %v988 = vadd.f32 %v952, %v982
      %v989 = vadd.f32 %v954, %v982
      %v990 = vadd.f32 %v957, %v982
      %v991 = vadd.f32 %v959, %v982
      %v992 = vadd.f32 %v962, %v982
      %v993 = vadd.f32 %v964, %v982
      %v994 = vadd.f32 %v967, %v982
      %v995 = vadd.f32 %v969, %v982
      %v996 = vadd.f32 %v972, %v982
      %v997 = vadd.f32 %v974, %v982
      %v998 = vadd.f32 %v977, %v982
      %v999 = vadd.f32 %v979, %v982
      %v1000 = vmax.f32 %v984, 0.0
      %v1001 = vmax.f32 %v985, 0.0
      %v1002 = vmax.f32 %v986, 0.0
      %v1003 = vmax.f32 %v987, 0.0
      %v1004 = vmax.f32 %v988, 0.0
      %v1005 = vmax.f32 %v989, 0.0
      %v1006 = vmax.f32 %v990, 0.0
      %v1007 = vmax.f32 %v991, 0.0
      %v1008 = vmax.f32 %v992, 0.0
      %v1009 = vmax.f32 %v993, 0.0
      %v1010 = vmax.f32 %v994, 0.0
      %v1011 = vmax.f32 %v995, 0.0
      %v1012 = vmax.f32 %v996, 0.0
      %v1013 = vmax.f32 %v997, 0.0
      %v1014 = vmax.f32 %v998, 0.0
      %v1015 = vmax.f32 %v999, 0.0
      %s1016 = scalar_lea.vmem %s4, 128
      %v1017 = vld [vmem:[%s1016] sm:$0xff]
      %v1018 = vld [vmem:[%s1016 + $0x8] sm:$0xff]
      %v1019 = vld [vmem:[%s1016 + $0x10] sm:$0xff]
      %v1020 = vld [vmem:[%s1016 + $0x18] sm:$0xff]
      %v1021 = vld [vmem:[%s1016 + $0x20] sm:$0xff]
      %v1022 = vld [vmem:[%s1016 + $0x28] sm:$0xff]
      %v1023 = vld [vmem:[%s1016 + $0x30] sm:$0xff]
      %v1024 = vld [vmem:[%s1016 + $0x38] sm:$0xff]
      %v1025 = vld [vmem:[%s1016 + $0x40] sm:$0xff]
      %v1026 = vld [vmem:[%s1016 + $0x48] sm:$0xff]
      %v1027 = vld [vmem:[%s1016 + $0x50] sm:$0xff]
      %v1028 = vld [vmem:[%s1016 + $0x58] sm:$0xff]
      %v1029 = vld [vmem:[%s1016 + $0x60] sm:$0xff]
      %v1030 = vld [vmem:[%s1016 + $0x68] sm:$0xff]
      %v1031 = vld [vmem:[%s1016 + $0x70] sm:$0xff]
      %v1032 = vld [vmem:[%s1016 + $0x78] sm:$0xff]
      %s1033 = scalar_lea.vmem %s5, 1
      %v1034 = vld [vmem:[%s1033] sm:$0x1]
      %v1035 = vpack.c.bf16 %v1001, %v1000
      %v1036 = vpack.c.bf16 %v1003, %v1002
      %v1037 = vpack.c.bf16 %v1005, %v1004
      %v1038 = vpack.c.bf16 %v1007, %v1006
      %v1039 = vpack.c.bf16 %v1009, %v1008
      %v1040 = vpack.c.bf16 %v1011, %v1010
      %v1041 = vpack.c.bf16 %v1013, %v1012
      %v1042 = vpack.c.bf16 %v1015, %v1014
      %v1059 = vunpack.c.l.b16 %v1017
      %v1060 = vunpack.c.h.b16 %v1017
      %v1061 = vunpack.c.l.b16 %v1018
      %v1062 = vunpack.c.h.b16 %v1018
      %v1063 = vunpack.c.l.b16 %v1019
      %v1064 = vunpack.c.h.b16 %v1019
      %v1065 = vunpack.c.l.b16 %v1020
      %v1066 = vunpack.c.h.b16 %v1020
      %v1067 = vunpack.c.l.b16 %v1021
      %v1068 = vunpack.c.h.b16 %v1021
      %v1069 = vunpack.c.l.b16 %v1022
      %v1070 = vunpack.c.h.b16 %v1022
      %v1071 = vunpack.c.l.b16 %v1023
      %v1072 = vunpack.c.h.b16 %v1023
      %v1073 = vunpack.c.l.b16 %v1024
      %v1074 = vunpack.c.h.b16 %v1024
      %v1075 = vunpack.c.l.b16 %v1025
      %v1076 = vunpack.c.h.b16 %v1025
      %v1077 = vunpack.c.l.b16 %v1026
      %v1078 = vunpack.c.h.b16 %v1026
      %v1079 = vunpack.c.l.b16 %v1027
      %v1080 = vunpack.c.h.b16 %v1027
      %v1081 = vunpack.c.l.b16 %v1028
      %v1082 = vunpack.c.h.b16 %v1028
      %v1083 = vunpack.c.l.b16 %v1029
      %v1084 = vunpack.c.h.b16 %v1029
      %v1085 = vunpack.c.l.b16 %v1030
      %v1086 = vunpack.c.h.b16 %v1030
      %v1087 = vunpack.c.l.b16 %v1031
      %v1088 = vunpack.c.h.b16 %v1031
      %v1089 = vunpack.c.l.b16 %v1032
      %v1090 = vunpack.c.h.b16 %v1032
      %v1091 = vpack.c.b16 %v1061, %v1059
      %v1092 = vpack.c.b16 %v1062, %v1060
      %v1093 = vpack.c.b16 %v1065, %v1063
      %v1094 = vpack.c.b16 %v1066, %v1064
      %v1095 = vpack.c.b16 %v1069, %v1067
      %v1096 = vpack.c.b16 %v1070, %v1068
      %v1097 = vpack.c.b16 %v1073, %v1071
      %v1098 = vpack.c.b16 %v1074, %v1072
      %v1099 = vpack.c.b16 %v1077, %v1075
      %v1100 = vpack.c.b16 %v1078, %v1076
      %v1101 = vpack.c.b16 %v1081, %v1079
      %v1102 = vpack.c.b16 %v1082, %v1080
      %v1103 = vpack.c.b16 %v1085, %v1083
      %v1104 = vpack.c.b16 %v1086, %v1084
      %v1105 = vpack.c.b16 %v1089, %v1087
      %v1106 = vpack.c.b16 %v1090, %v1088
      %1123 = vmatpush.bf16.msra.mxu0 %v1105
      %1124 = vmatpush.bf16.msra.mxu0 %v1103
      %1125 = vmatpush.bf16.msra.mxu0 %v1101
      %1126 = vmatpush.bf16.msra.mxu0 %v1099
      %1127 = vmatpush.bf16.msra.mxu0 %v1097
      %1128 = vmatpush.bf16.msra.mxu0 %v1095
      %1129 = vmatpush.bf16.msra.mxu0 %v1093
      %1130 = vmatpush.bf16.msra.mxu0 %v1091
      %1131 = vmatmul.bf16.gmra.mxu0 %v1035
      %v1132 = vpop.f32.mrf.mxu0
      %v1133 = vadd.f32 0.0, %v1132
      %v1134 = vpop.f32.mrf.mxu0
      %v1135 = vadd.f32 0.0, %v1134
      %1136 = vmatmul.bf16.gmra.mxu0 %v1036
      %v1137 = vpop.f32.mrf.mxu0
      %v1138 = vadd.f32 0.0, %v1137
      %v1139 = vpop.f32.mrf.mxu0
      %v1140 = vadd.f32 0.0, %v1139
      %1141 = vmatmul.bf16.gmra.mxu0 %v1037
      %v1142 = vpop.f32.mrf.mxu0
      %v1143 = vadd.f32 0.0, %v1142
      %v1144 = vpop.f32.mrf.mxu0
      %v1145 = vadd.f32 0.0, %v1144
      %1146 = vmatmul.bf16.gmra.mxu0 %v1038
      %v1147 = vpop.f32.mrf.mxu0
      %v1148 = vadd.f32 0.0, %v1147
      %v1149 = vpop.f32.mrf.mxu0
      %v1150 = vadd.f32 0.0, %v1149
      %1151 = vmatmul.bf16.gmra.mxu0 %v1039
      %v1152 = vpop.f32.mrf.mxu0
      %v1153 = vadd.f32 0.0, %v1152
      %v1154 = vpop.f32.mrf.mxu0
      %v1155 = vadd.f32 0.0, %v1154
      %1156 = vmatmul.bf16.gmra.mxu0 %v1040
      %v1157 = vpop.f32.mrf.mxu0
      %v1158 = vadd.f32 0.0, %v1157
      %v1159 = vpop.f32.mrf.mxu0
      %v1160 = vadd.f32 0.0, %v1159
      %1161 = vmatmul.bf16.gmra.mxu0 %v1041
      %v1162 = vpop.f32.mrf.mxu0
      %v1163 = vadd.f32 0.0, %v1162
      %v1164 = vpop.f32.mrf.mxu0
      %v1165 = vadd.f32 0.0, %v1164
      %1166 = vmatmul.bf16.gmra.mxu0 %v1042
      %v1167 = vpop.f32.mrf.mxu0
      %v1168 = vadd.f32 0.0, %v1167
      %v1169 = vpop.f32.mrf.mxu0
      %v1170 = vadd.f32 0.0, %v1169
      %1171 = vdwg.mxu0
      %1172 = vmatpush.bf16.msra.mxu0 %v1106
      %1173 = vmatpush.bf16.msra.mxu0 %v1104
      %1174 = vmatpush.bf16.msra.mxu0 %v1102
      %1175 = vmatpush.bf16.msra.mxu0 %v1100
      %1176 = vmatpush.bf16.msra.mxu0 %v1098
      %1177 = vmatpush.bf16.msra.mxu0 %v1096
      %1178 = vmatpush.bf16.msra.mxu0 %v1094
      %1179 = vmatpush.bf16.msra.mxu0 %v1092
      %1180 = vmatmul.bf16.gmra.mxu0 %v1035
      %v1181 = vpop.f32.mrf.mxu0
      %v1182 = vadd.f32 0.0, %v1181
      %v1183 = vpop.f32.mrf.mxu0
      %v1184 = vadd.f32 0.0, %v1183
      %1185 = vmatmul.bf16.gmra.mxu0 %v1036
      %v1186 = vpop.f32.mrf.mxu0
      %v1187 = vadd.f32 0.0, %v1186
      %v1188 = vpop.f32.mrf.mxu0
      %v1189 = vadd.f32 0.0, %v1188
      %1190 = vmatmul.bf16.gmra.mxu0 %v1037
      %v1191 = vpop.f32.mrf.mxu0
      %v1192 = vadd.f32 0.0, %v1191
      %v1193 = vpop.f32.mrf.mxu0
      %v1194 = vadd.f32 0.0, %v1193
      %1195 = vmatmul.bf16.gmra.mxu0 %v1038
      %v1196 = vpop.f32.mrf.mxu0
      %v1197 = vadd.f32 0.0, %v1196
      %v1198 = vpop.f32.mrf.mxu0
      %v1199 = vadd.f32 0.0, %v1198
      %1200 = vmatmul.bf16.gmra.mxu0 %v1039
      %v1201 = vpop.f32.mrf.mxu0
      %v1202 = vadd.f32 0.0, %v1201
      %v1203 = vpop.f32.mrf.mxu0
      %v1204 = vadd.f32 0.0, %v1203
      %1205 = vmatmul.bf16.gmra.mxu0 %v1040
      %v1206 = vpop.f32.mrf.mxu0
      %v1207 = vadd.f32 0.0, %v1206
      %v1208 = vpop.f32.mrf.mxu0
      %v1209 = vadd.f32 0.0, %v1208
      %1210 = vmatmul.bf16.gmra.mxu0 %v1041
      %v1211 = vpop.f32.mrf.mxu0
      %v1212 = vadd.f32 0.0, %v1211
      %v1213 = vpop.f32.mrf.mxu0
      %v1214 = vadd.f32 0.0, %v1213
      %1215 = vmatmul.bf16.gmra.mxu0 %v1042
      %v1216 = vpop.f32.mrf.mxu0
      %v1217 = vadd.f32 0.0, %v1216
      %v1218 = vpop.f32.mrf.mxu0
      %v1219 = vadd.f32 0.0, %v1218
      %1220 = vdwg.mxu0
      %v1221 = vpack.c.bf16 %v1135, %v1133
      %v1222 = vpack.c.bf16 %v1140, %v1138
      %v1223 = vpack.c.bf16 %v1145, %v1143
      %v1224 = vpack.c.bf16 %v1150, %v1148
      %v1225 = vpack.c.bf16 %v1155, %v1153
      %v1226 = vpack.c.bf16 %v1160, %v1158
      %v1227 = vpack.c.bf16 %v1165, %v1163
      %v1228 = vpack.c.bf16 %v1170, %v1168
      %1229 = vmatpush.bf16.msra.mxu0 %v1228
      %1230 = vmatpush.bf16.msra.mxu0 %v1227
      %1231 = vmatpush.bf16.msra.mxu0 %v1226
      %1232 = vmatpush.bf16.msra.mxu0 %v1225
      %1233 = vmatpush.bf16.msra.mxu0 %v1224
      %1234 = vmatpush.bf16.msra.mxu0 %v1223
      %1235 = vmatpush.bf16.msra.mxu0 %v1222
      %1236 = vmatpush.bf16.msra.mxu0 %v1221
      %1237 = vmatmul.bf16.gmra.mxu0 %v621
      %v1238 = vpop.f32.mrf.mxu0
      %v1239 = vadd.f32 %v1182, %v1238
      %v1240 = vpop.f32.mrf.mxu0
      %v1241 = vadd.f32 %v1184, %v1240
      %1242 = vmatmul.bf16.gmra.mxu0 %v622
      %v1243 = vpop.f32.mrf.mxu0
      %v1244 = vadd.f32 %v1187, %v1243
      %v1245 = vpop.f32.mrf.mxu0
      %v1246 = vadd.f32 %v1189, %v1245
      %1247 = vmatmul.bf16.gmra.mxu0 %v623
      %v1248 = vpop.f32.mrf.mxu0
      %v1249 = vadd.f32 %v1192, %v1248
      %v1250 = vpop.f32.mrf.mxu0
      %v1251 = vadd.f32 %v1194, %v1250
      %1252 = vmatmul.bf16.gmra.mxu0 %v624
      %v1253 = vpop.f32.mrf.mxu0
      %v1254 = vadd.f32 %v1197, %v1253
      %v1255 = vpop.f32.mrf.mxu0
      %v1256 = vadd.f32 %v1199, %v1255
      %1257 = vmatmul.bf16.gmra.mxu0 %v625
      %v1258 = vpop.f32.mrf.mxu0
      %v1259 = vadd.f32 %v1202, %v1258
      %v1260 = vpop.f32.mrf.mxu0
      %v1261 = vadd.f32 %v1204, %v1260
      %1262 = vmatmul.bf16.gmra.mxu0 %v626
      %v1263 = vpop.f32.mrf.mxu0
      %v1264 = vadd.f32 %v1207, %v1263
      %v1265 = vpop.f32.mrf.mxu0
      %v1266 = vadd.f32 %v1209, %v1265
      %1267 = vmatmul.bf16.gmra.mxu0 %v627
      %v1268 = vpop.f32.mrf.mxu0
      %v1269 = vadd.f32 %v1212, %v1268
      %v1270 = vpop.f32.mrf.mxu0
      %v1271 = vadd.f32 %v1214, %v1270
      %1272 = vmatmul.bf16.gmra.mxu0 %v628
      %v1273 = vpop.f32.mrf.mxu0
      %v1274 = vadd.f32 %v1217, %v1273
      %v1275 = vpop.f32.mrf.mxu0
      %v1276 = vadd.f32 %v1219, %v1275
      %1277 = vdwg.mxu0
      %v1279 = vperm.slane %v1034, 0
      %v1281 = vadd.f32 %v1239, %v1279
      %v1282 = vadd.f32 %v1241, %v1279
      %v1283 = vadd.f32 %v1244, %v1279
      %v1284 = vadd.f32 %v1246, %v1279
      %v1285 = vadd.f32 %v1249, %v1279
      %v1286 = vadd.f32 %v1251, %v1279
      %v1287 = vadd.f32 %v1254, %v1279
      %v1288 = vadd.f32 %v1256, %v1279
      %v1289 = vadd.f32 %v1259, %v1279
      %v1290 = vadd.f32 %v1261, %v1279
      %v1291 = vadd.f32 %v1264, %v1279
      %v1292 = vadd.f32 %v1266, %v1279
      %v1293 = vadd.f32 %v1269, %v1279
      %v1294 = vadd.f32 %v1271, %v1279
      %v1295 = vadd.f32 %v1274, %v1279
      %v1296 = vadd.f32 %v1276, %v1279
      %v1297 = vmax.f32 %v1281, 0.0
      %v1298 = vmax.f32 %v1282, 0.0
      %v1299 = vmax.f32 %v1283, 0.0
      %v1300 = vmax.f32 %v1284, 0.0
      %v1301 = vmax.f32 %v1285, 0.0
      %v1302 = vmax.f32 %v1286, 0.0
      %v1303 = vmax.f32 %v1287, 0.0
      %v1304 = vmax.f32 %v1288, 0.0
      %v1305 = vmax.f32 %v1289, 0.0
      %v1306 = vmax.f32 %v1290, 0.0
      %v1307 = vmax.f32 %v1291, 0.0
      %v1308 = vmax.f32 %v1292, 0.0
      %v1309 = vmax.f32 %v1293, 0.0
      %v1310 = vmax.f32 %v1294, 0.0
      %v1311 = vmax.f32 %v1295, 0.0
      %v1312 = vmax.f32 %v1296, 0.0
      %v1313 = vadd.f32 %v705, %v1297
      %v1314 = vadd.f32 %v706, %v1298
      %v1315 = vadd.f32 %v707, %v1299
      %v1316 = vadd.f32 %v708, %v1300
      %v1317 = vadd.f32 %v709, %v1301
      %v1318 = vadd.f32 %v710, %v1302
      %v1319 = vadd.f32 %v711, %v1303
      %v1320 = vadd.f32 %v712, %v1304
      %v1321 = vadd.f32 %v713, %v1305
      %v1322 = vadd.f32 %v714, %v1306
      %v1323 = vadd.f32 %v715, %v1307
      %v1324 = vadd.f32 %v716, %v1308
      %v1325 = vadd.f32 %v717, %v1309
      %v1326 = vadd.f32 %v718, %v1310
      %v1327 = vadd.f32 %v719, %v1311
      %v1328 = vadd.f32 %v720, %v1312
      %v1329 = vmul.f32 %v1313, 0.5
      %v1330 = vmul.f32 %v1314, 0.5
      %v1331 = vmul.f32 %v1315, 0.5
      %v1332 = vmul.f32 %v1316, 0.5
      %v1333 = vmul.f32 %v1317, 0.5
      %v1334 = vmul.f32 %v1318, 0.5
      %v1335 = vmul.f32 %v1319, 0.5
      %v1336 = vmul.f32 %v1320, 0.5
      %v1337 = vmul.f32 %v1321, 0.5
      %v1338 = vmul.f32 %v1322, 0.5
      %v1339 = vmul.f32 %v1323, 0.5
      %v1340 = vmul.f32 %v1324, 0.5
      %v1341 = vmul.f32 %v1325, 0.5
      %v1342 = vmul.f32 %v1326, 0.5
      %v1343 = vmul.f32 %v1327, 0.5
      %v1344 = vmul.f32 %v1328, 0.5
      %s1345 = scalar_lea.vmem %s4, 256
      %v1346 = vld [vmem:[%s1345] sm:$0xff]
      %v1347 = vld [vmem:[%s1345 + $0x8] sm:$0xff]
      %v1348 = vld [vmem:[%s1345 + $0x10] sm:$0xff]
      %v1349 = vld [vmem:[%s1345 + $0x18] sm:$0xff]
      %v1350 = vld [vmem:[%s1345 + $0x20] sm:$0xff]
      %v1351 = vld [vmem:[%s1345 + $0x28] sm:$0xff]
      %v1352 = vld [vmem:[%s1345 + $0x30] sm:$0xff]
      %v1353 = vld [vmem:[%s1345 + $0x38] sm:$0xff]
      %v1354 = vld [vmem:[%s1345 + $0x40] sm:$0xff]
      %v1355 = vld [vmem:[%s1345 + $0x48] sm:$0xff]
      %v1356 = vld [vmem:[%s1345 + $0x50] sm:$0xff]
      %v1357 = vld [vmem:[%s1345 + $0x58] sm:$0xff]
      %v1358 = vld [vmem:[%s1345 + $0x60] sm:$0xff]
      %v1359 = vld [vmem:[%s1345 + $0x68] sm:$0xff]
      %v1360 = vld [vmem:[%s1345 + $0x70] sm:$0xff]
      %v1361 = vld [vmem:[%s1345 + $0x78] sm:$0xff]
      %s1362 = scalar_lea.vmem %s5, 2
      %v1363 = vld [vmem:[%s1362] sm:$0x1]
      %v1364 = vpack.c.bf16 %v1330, %v1329
      %v1365 = vpack.c.bf16 %v1332, %v1331
      %v1366 = vpack.c.bf16 %v1334, %v1333
      %v1367 = vpack.c.bf16 %v1336, %v1335
      %v1368 = vpack.c.bf16 %v1338, %v1337
      %v1369 = vpack.c.bf16 %v1340, %v1339
      %v1370 = vpack.c.bf16 %v1342, %v1341
      %v1371 = vpack.c.bf16 %v1344, %v1343
      %v1388 = vunpack.c.l.b16 %v1346
      %v1389 = vunpack.c.h.b16 %v1346
      %v1390 = vunpack.c.l.b16 %v1347
      %v1391 = vunpack.c.h.b16 %v1347
      %v1392 = vunpack.c.l.b16 %v1348
      %v1393 = vunpack.c.h.b16 %v1348
      %v1394 = vunpack.c.l.b16 %v1349
      %v1395 = vunpack.c.h.b16 %v1349
      %v1396 = vunpack.c.l.b16 %v1350
      %v1397 = vunpack.c.h.b16 %v1350
      %v1398 = vunpack.c.l.b16 %v1351
      %v1399 = vunpack.c.h.b16 %v1351
      %v1400 = vunpack.c.l.b16 %v1352
      %v1401 = vunpack.c.h.b16 %v1352
      %v1402 = vunpack.c.l.b16 %v1353
      %v1403 = vunpack.c.h.b16 %v1353
      %v1404 = vunpack.c.l.b16 %v1354
      %v1405 = vunpack.c.h.b16 %v1354
      %v1406 = vunpack.c.l.b16 %v1355
      %v1407 = vunpack.c.h.b16 %v1355
      %v1408 = vunpack.c.l.b16 %v1356
      %v1409 = vunpack.c.h.b16 %v1356
      %v1410 = vunpack.c.l.b16 %v1357
      %v1411 = vunpack.c.h.b16 %v1357
      %v1412 = vunpack.c.l.b16 %v1358
      %v1413 = vunpack.c.h.b16 %v1358
      %v1414 = vunpack.c.l.b16 %v1359
      %v1415 = vunpack.c.h.b16 %v1359
      %v1416 = vunpack.c.l.b16 %v1360
      %v1417 = vunpack.c.h.b16 %v1360
      %v1418 = vunpack.c.l.b16 %v1361
      %v1419 = vunpack.c.h.b16 %v1361
      %v1420 = vpack.c.b16 %v1390, %v1388
      %v1421 = vpack.c.b16 %v1391, %v1389
      %v1422 = vpack.c.b16 %v1394, %v1392
      %v1423 = vpack.c.b16 %v1395, %v1393
      %v1424 = vpack.c.b16 %v1398, %v1396
      %v1425 = vpack.c.b16 %v1399, %v1397
      %v1426 = vpack.c.b16 %v1402, %v1400
      %v1427 = vpack.c.b16 %v1403, %v1401
      %v1428 = vpack.c.b16 %v1406, %v1404
      %v1429 = vpack.c.b16 %v1407, %v1405
      %v1430 = vpack.c.b16 %v1410, %v1408
      %v1431 = vpack.c.b16 %v1411, %v1409
      %v1432 = vpack.c.b16 %v1414, %v1412
      %v1433 = vpack.c.b16 %v1415, %v1413
      %v1434 = vpack.c.b16 %v1418, %v1416
      %v1435 = vpack.c.b16 %v1419, %v1417
      %1452 = vmatpush.bf16.msra.mxu0 %v1434
      %1453 = vmatpush.bf16.msra.mxu0 %v1432
      %1454 = vmatpush.bf16.msra.mxu0 %v1430
      %1455 = vmatpush.bf16.msra.mxu0 %v1428
      %1456 = vmatpush.bf16.msra.mxu0 %v1426
      %1457 = vmatpush.bf16.msra.mxu0 %v1424
      %1458 = vmatpush.bf16.msra.mxu0 %v1422
      %1459 = vmatpush.bf16.msra.mxu0 %v1420
      %1460 = vmatmul.bf16.gmra.mxu0 %v1364
      %v1461 = vpop.f32.mrf.mxu0
      %v1462 = vadd.f32 0.0, %v1461
      %v1463 = vpop.f32.mrf.mxu0
      %v1464 = vadd.f32 0.0, %v1463
      %1465 = vmatmul.bf16.gmra.mxu0 %v1365
      %v1466 = vpop.f32.mrf.mxu0
      %v1467 = vadd.f32 0.0, %v1466
      %v1468 = vpop.f32.mrf.mxu0
      %v1469 = vadd.f32 0.0, %v1468
      %1470 = vmatmul.bf16.gmra.mxu0 %v1366
      %v1471 = vpop.f32.mrf.mxu0
      %v1472 = vadd.f32 0.0, %v1471
      %v1473 = vpop.f32.mrf.mxu0
      %v1474 = vadd.f32 0.0, %v1473
      %1475 = vmatmul.bf16.gmra.mxu0 %v1367
      %v1476 = vpop.f32.mrf.mxu0
      %v1477 = vadd.f32 0.0, %v1476
      %v1478 = vpop.f32.mrf.mxu0
      %v1479 = vadd.f32 0.0, %v1478
      %1480 = vmatmul.bf16.gmra.mxu0 %v1368
      %v1481 = vpop.f32.mrf.mxu0
      %v1482 = vadd.f32 0.0, %v1481
      %v1483 = vpop.f32.mrf.mxu0
      %v1484 = vadd.f32 0.0, %v1483
      %1485 = vmatmul.bf16.gmra.mxu0 %v1369
      %v1486 = vpop.f32.mrf.mxu0
      %v1487 = vadd.f32 0.0, %v1486
      %v1488 = vpop.f32.mrf.mxu0
      %v1489 = vadd.f32 0.0, %v1488
      %1490 = vmatmul.bf16.gmra.mxu0 %v1370
      %v1491 = vpop.f32.mrf.mxu0
      %v1492 = vadd.f32 0.0, %v1491
      %v1493 = vpop.f32.mrf.mxu0
      %v1494 = vadd.f32 0.0, %v1493
      %1495 = vmatmul.bf16.gmra.mxu0 %v1371
      %v1496 = vpop.f32.mrf.mxu0
      %v1497 = vadd.f32 0.0, %v1496
      %v1498 = vpop.f32.mrf.mxu0
      %v1499 = vadd.f32 0.0, %v1498
      %1500 = vdwg.mxu0
      %1501 = vmatpush.bf16.msra.mxu0 %v1435
      %1502 = vmatpush.bf16.msra.mxu0 %v1433
      %1503 = vmatpush.bf16.msra.mxu0 %v1431
      %1504 = vmatpush.bf16.msra.mxu0 %v1429
      %1505 = vmatpush.bf16.msra.mxu0 %v1427
      %1506 = vmatpush.bf16.msra.mxu0 %v1425
      %1507 = vmatpush.bf16.msra.mxu0 %v1423
      %1508 = vmatpush.bf16.msra.mxu0 %v1421
      %1509 = vmatmul.bf16.gmra.mxu0 %v1364
      %v1510 = vpop.f32.mrf.mxu0
      %v1511 = vadd.f32 0.0, %v1510
      %v1512 = vpop.f32.mrf.mxu0
      %v1513 = vadd.f32 0.0, %v1512
      %1514 = vmatmul.bf16.gmra.mxu0 %v1365
      %v1515 = vpop.f32.mrf.mxu0
      %v1516 = vadd.f32 0.0, %v1515
      %v1517 = vpop.f32.mrf.mxu0
      %v1518 = vadd.f32 0.0, %v1517
      %1519 = vmatmul.bf16.gmra.mxu0 %v1366
      %v1520 = vpop.f32.mrf.mxu0
      %v1521 = vadd.f32 0.0, %v1520
      %v1522 = vpop.f32.mrf.mxu0
      %v1523 = vadd.f32 0.0, %v1522
      %1524 = vmatmul.bf16.gmra.mxu0 %v1367
      %v1525 = vpop.f32.mrf.mxu0
      %v1526 = vadd.f32 0.0, %v1525
      %v1527 = vpop.f32.mrf.mxu0
      %v1528 = vadd.f32 0.0, %v1527
      %1529 = vmatmul.bf16.gmra.mxu0 %v1368
      %v1530 = vpop.f32.mrf.mxu0
      %v1531 = vadd.f32 0.0, %v1530
      %v1532 = vpop.f32.mrf.mxu0
      %v1533 = vadd.f32 0.0, %v1532
      %1534 = vmatmul.bf16.gmra.mxu0 %v1369
      %v1535 = vpop.f32.mrf.mxu0
      %v1536 = vadd.f32 0.0, %v1535
      %v1537 = vpop.f32.mrf.mxu0
      %v1538 = vadd.f32 0.0, %v1537
      %1539 = vmatmul.bf16.gmra.mxu0 %v1370
      %v1540 = vpop.f32.mrf.mxu0
      %v1541 = vadd.f32 0.0, %v1540
      %v1542 = vpop.f32.mrf.mxu0
      %v1543 = vadd.f32 0.0, %v1542
      %1544 = vmatmul.bf16.gmra.mxu0 %v1371
      %v1545 = vpop.f32.mrf.mxu0
      %v1546 = vadd.f32 0.0, %v1545
      %v1547 = vpop.f32.mrf.mxu0
      %v1548 = vadd.f32 0.0, %v1547
      %1549 = vdwg.mxu0
      %v1550 = vpack.c.bf16 %v1464, %v1462
      %v1551 = vpack.c.bf16 %v1469, %v1467
      %v1552 = vpack.c.bf16 %v1474, %v1472
      %v1553 = vpack.c.bf16 %v1479, %v1477
      %v1554 = vpack.c.bf16 %v1484, %v1482
      %v1555 = vpack.c.bf16 %v1489, %v1487
      %v1556 = vpack.c.bf16 %v1494, %v1492
      %v1557 = vpack.c.bf16 %v1499, %v1497
      %1558 = vmatpush.bf16.msra.mxu0 %v1557
      %1559 = vmatpush.bf16.msra.mxu0 %v1556
      %1560 = vmatpush.bf16.msra.mxu0 %v1555
      %1561 = vmatpush.bf16.msra.mxu0 %v1554
      %1562 = vmatpush.bf16.msra.mxu0 %v1553
      %1563 = vmatpush.bf16.msra.mxu0 %v1552
      %1564 = vmatpush.bf16.msra.mxu0 %v1551
      %1565 = vmatpush.bf16.msra.mxu0 %v1550
      %1566 = vmatmul.bf16.gmra.mxu0 %v621
      %v1567 = vpop.f32.mrf.mxu0
      %v1568 = vadd.f32 %v1511, %v1567
      %v1569 = vpop.f32.mrf.mxu0
      %v1570 = vadd.f32 %v1513, %v1569
      %1571 = vmatmul.bf16.gmra.mxu0 %v622
      %v1572 = vpop.f32.mrf.mxu0
      %v1573 = vadd.f32 %v1516, %v1572
      %v1574 = vpop.f32.mrf.mxu0
      %v1575 = vadd.f32 %v1518, %v1574
      %1576 = vmatmul.bf16.gmra.mxu0 %v623
      %v1577 = vpop.f32.mrf.mxu0
      %v1578 = vadd.f32 %v1521, %v1577
      %v1579 = vpop.f32.mrf.mxu0
      %v1580 = vadd.f32 %v1523, %v1579
      %1581 = vmatmul.bf16.gmra.mxu0 %v624
      %v1582 = vpop.f32.mrf.mxu0
      %v1583 = vadd.f32 %v1526, %v1582
      %v1584 = vpop.f32.mrf.mxu0
      %v1585 = vadd.f32 %v1528, %v1584
      %1586 = vmatmul.bf16.gmra.mxu0 %v625
      %v1587 = vpop.f32.mrf.mxu0
      %v1588 = vadd.f32 %v1531, %v1587
      %v1589 = vpop.f32.mrf.mxu0
      %v1590 = vadd.f32 %v1533, %v1589
      %1591 = vmatmul.bf16.gmra.mxu0 %v626
      %v1592 = vpop.f32.mrf.mxu0
      %v1593 = vadd.f32 %v1536, %v1592
      %v1594 = vpop.f32.mrf.mxu0
      %v1595 = vadd.f32 %v1538, %v1594
      %1596 = vmatmul.bf16.gmra.mxu0 %v627
      %v1597 = vpop.f32.mrf.mxu0
      %v1598 = vadd.f32 %v1541, %v1597
      %v1599 = vpop.f32.mrf.mxu0
      %v1600 = vadd.f32 %v1543, %v1599
      %1601 = vmatmul.bf16.gmra.mxu0 %v628
      %v1602 = vpop.f32.mrf.mxu0
      %v1603 = vadd.f32 %v1546, %v1602
      %v1604 = vpop.f32.mrf.mxu0
      %v1605 = vadd.f32 %v1548, %v1604
      %1606 = vdwg.mxu0
      %v1608 = vperm.slane %v1363, 0
      %v1610 = vadd.f32 %v1568, %v1608
      %v1611 = vadd.f32 %v1570, %v1608
      %v1612 = vadd.f32 %v1573, %v1608
      %v1613 = vadd.f32 %v1575, %v1608
      %v1614 = vadd.f32 %v1578, %v1608
      %v1615 = vadd.f32 %v1580, %v1608
      %v1616 = vadd.f32 %v1583, %v1608
      %v1617 = vadd.f32 %v1585, %v1608
      %v1618 = vadd.f32 %v1588, %v1608
      %v1619 = vadd.f32 %v1590, %v1608
      %v1620 = vadd.f32 %v1593, %v1608
      %v1621 = vadd.f32 %v1595, %v1608
      %v1622 = vadd.f32 %v1598, %v1608
      %v1623 = vadd.f32 %v1600, %v1608
      %v1624 = vadd.f32 %v1603, %v1608
      %v1625 = vadd.f32 %v1605, %v1608
      %v1626 = vmax.f32 %v1610, 0.0
      %v1627 = vmax.f32 %v1611, 0.0
      %v1628 = vmax.f32 %v1612, 0.0
      %v1629 = vmax.f32 %v1613, 0.0
      %v1630 = vmax.f32 %v1614, 0.0
      %v1631 = vmax.f32 %v1615, 0.0
      %v1632 = vmax.f32 %v1616, 0.0
      %v1633 = vmax.f32 %v1617, 0.0
      %v1634 = vmax.f32 %v1618, 0.0
      %v1635 = vmax.f32 %v1619, 0.0
      %v1636 = vmax.f32 %v1620, 0.0
      %v1637 = vmax.f32 %v1621, 0.0
      %v1638 = vmax.f32 %v1622, 0.0
      %v1639 = vmax.f32 %v1623, 0.0
      %v1640 = vmax.f32 %v1624, 0.0
      %v1641 = vmax.f32 %v1625, 0.0
      %s1642 = scalar_lea.vmem %s4, 384
      %v1643 = vld [vmem:[%s1642] sm:$0xff]
      %v1644 = vld [vmem:[%s1642 + $0x8] sm:$0xff]
      %v1645 = vld [vmem:[%s1642 + $0x10] sm:$0xff]
      %v1646 = vld [vmem:[%s1642 + $0x18] sm:$0xff]
      %v1647 = vld [vmem:[%s1642 + $0x20] sm:$0xff]
      %v1648 = vld [vmem:[%s1642 + $0x28] sm:$0xff]
      %v1649 = vld [vmem:[%s1642 + $0x30] sm:$0xff]
      %v1650 = vld [vmem:[%s1642 + $0x38] sm:$0xff]
      %v1651 = vld [vmem:[%s1642 + $0x40] sm:$0xff]
      %v1652 = vld [vmem:[%s1642 + $0x48] sm:$0xff]
      %v1653 = vld [vmem:[%s1642 + $0x50] sm:$0xff]
      %v1654 = vld [vmem:[%s1642 + $0x58] sm:$0xff]
      %v1655 = vld [vmem:[%s1642 + $0x60] sm:$0xff]
      %v1656 = vld [vmem:[%s1642 + $0x68] sm:$0xff]
      %v1657 = vld [vmem:[%s1642 + $0x70] sm:$0xff]
      %v1658 = vld [vmem:[%s1642 + $0x78] sm:$0xff]
      %s1659 = scalar_lea.vmem %s5, 3
      %v1660 = vld [vmem:[%s1659] sm:$0x1]
      %v1661 = vpack.c.bf16 %v1627, %v1626
      %v1662 = vpack.c.bf16 %v1629, %v1628
      %v1663 = vpack.c.bf16 %v1631, %v1630
      %v1664 = vpack.c.bf16 %v1633, %v1632
      %v1665 = vpack.c.bf16 %v1635, %v1634
      %v1666 = vpack.c.bf16 %v1637, %v1636
      %v1667 = vpack.c.bf16 %v1639, %v1638
      %v1668 = vpack.c.bf16 %v1641, %v1640
      %v1685 = vunpack.c.l.b16 %v1643
      %v1686 = vunpack.c.h.b16 %v1643
      %v1687 = vunpack.c.l.b16 %v1644
      %v1688 = vunpack.c.h.b16 %v1644
      %v1689 = vunpack.c.l.b16 %v1645
      %v1690 = vunpack.c.h.b16 %v1645
      %v1691 = vunpack.c.l.b16 %v1646
      %v1692 = vunpack.c.h.b16 %v1646
      %v1693 = vunpack.c.l.b16 %v1647
      %v1694 = vunpack.c.h.b16 %v1647
      %v1695 = vunpack.c.l.b16 %v1648
      %v1696 = vunpack.c.h.b16 %v1648
      %v1697 = vunpack.c.l.b16 %v1649
      %v1698 = vunpack.c.h.b16 %v1649
      %v1699 = vunpack.c.l.b16 %v1650
      %v1700 = vunpack.c.h.b16 %v1650
      %v1701 = vunpack.c.l.b16 %v1651
      %v1702 = vunpack.c.h.b16 %v1651
      %v1703 = vunpack.c.l.b16 %v1652
      %v1704 = vunpack.c.h.b16 %v1652
      %v1705 = vunpack.c.l.b16 %v1653
      %v1706 = vunpack.c.h.b16 %v1653
      %v1707 = vunpack.c.l.b16 %v1654
      %v1708 = vunpack.c.h.b16 %v1654
      %v1709 = vunpack.c.l.b16 %v1655
      %v1710 = vunpack.c.h.b16 %v1655
      %v1711 = vunpack.c.l.b16 %v1656
      %v1712 = vunpack.c.h.b16 %v1656
      %v1713 = vunpack.c.l.b16 %v1657
      %v1714 = vunpack.c.h.b16 %v1657
      %v1715 = vunpack.c.l.b16 %v1658
      %v1716 = vunpack.c.h.b16 %v1658
      %v1717 = vpack.c.b16 %v1687, %v1685
      %v1718 = vpack.c.b16 %v1688, %v1686
      %v1719 = vpack.c.b16 %v1691, %v1689
      %v1720 = vpack.c.b16 %v1692, %v1690
      %v1721 = vpack.c.b16 %v1695, %v1693
      %v1722 = vpack.c.b16 %v1696, %v1694
      %v1723 = vpack.c.b16 %v1699, %v1697
      %v1724 = vpack.c.b16 %v1700, %v1698
      %v1725 = vpack.c.b16 %v1703, %v1701
      %v1726 = vpack.c.b16 %v1704, %v1702
      %v1727 = vpack.c.b16 %v1707, %v1705
      %v1728 = vpack.c.b16 %v1708, %v1706
      %v1729 = vpack.c.b16 %v1711, %v1709
      %v1730 = vpack.c.b16 %v1712, %v1710
      %v1731 = vpack.c.b16 %v1715, %v1713
      %v1732 = vpack.c.b16 %v1716, %v1714
      %1749 = vmatpush.bf16.msra.mxu0 %v1731
      %1750 = vmatpush.bf16.msra.mxu0 %v1729
      %1751 = vmatpush.bf16.msra.mxu0 %v1727
      %1752 = vmatpush.bf16.msra.mxu0 %v1725
      %1753 = vmatpush.bf16.msra.mxu0 %v1723
      %1754 = vmatpush.bf16.msra.mxu0 %v1721
      %1755 = vmatpush.bf16.msra.mxu0 %v1719
      %1756 = vmatpush.bf16.msra.mxu0 %v1717
      %1757 = vmatmul.bf16.gmra.mxu0 %v1661
      %v1758 = vpop.f32.mrf.mxu0
      %v1759 = vadd.f32 0.0, %v1758
      %v1760 = vpop.f32.mrf.mxu0
      %v1761 = vadd.f32 0.0, %v1760
      %1762 = vmatmul.bf16.gmra.mxu0 %v1662
      %v1763 = vpop.f32.mrf.mxu0
      %v1764 = vadd.f32 0.0, %v1763
      %v1765 = vpop.f32.mrf.mxu0
      %v1766 = vadd.f32 0.0, %v1765
      %1767 = vmatmul.bf16.gmra.mxu0 %v1663
      %v1768 = vpop.f32.mrf.mxu0
      %v1769 = vadd.f32 0.0, %v1768
      %v1770 = vpop.f32.mrf.mxu0
      %v1771 = vadd.f32 0.0, %v1770
      %1772 = vmatmul.bf16.gmra.mxu0 %v1664
      %v1773 = vpop.f32.mrf.mxu0
      %v1774 = vadd.f32 0.0, %v1773
      %v1775 = vpop.f32.mrf.mxu0
      %v1776 = vadd.f32 0.0, %v1775
      %1777 = vmatmul.bf16.gmra.mxu0 %v1665
      %v1778 = vpop.f32.mrf.mxu0
      %v1779 = vadd.f32 0.0, %v1778
      %v1780 = vpop.f32.mrf.mxu0
      %v1781 = vadd.f32 0.0, %v1780
      %1782 = vmatmul.bf16.gmra.mxu0 %v1666
      %v1783 = vpop.f32.mrf.mxu0
      %v1784 = vadd.f32 0.0, %v1783
      %v1785 = vpop.f32.mrf.mxu0
      %v1786 = vadd.f32 0.0, %v1785
      %1787 = vmatmul.bf16.gmra.mxu0 %v1667
      %v1788 = vpop.f32.mrf.mxu0
      %v1789 = vadd.f32 0.0, %v1788
      %v1790 = vpop.f32.mrf.mxu0
      %v1791 = vadd.f32 0.0, %v1790
      %1792 = vmatmul.bf16.gmra.mxu0 %v1668
      %v1793 = vpop.f32.mrf.mxu0
      %v1794 = vadd.f32 0.0, %v1793
      %v1795 = vpop.f32.mrf.mxu0
      %v1796 = vadd.f32 0.0, %v1795
      %1797 = vdwg.mxu0
      %1798 = vmatpush.bf16.msra.mxu0 %v1732
      %1799 = vmatpush.bf16.msra.mxu0 %v1730
      %1800 = vmatpush.bf16.msra.mxu0 %v1728
      %1801 = vmatpush.bf16.msra.mxu0 %v1726
      %1802 = vmatpush.bf16.msra.mxu0 %v1724
      %1803 = vmatpush.bf16.msra.mxu0 %v1722
      %1804 = vmatpush.bf16.msra.mxu0 %v1720
      %1805 = vmatpush.bf16.msra.mxu0 %v1718
      %1806 = vmatmul.bf16.gmra.mxu0 %v1661
      %v1807 = vpop.f32.mrf.mxu0
      %v1808 = vadd.f32 0.0, %v1807
      %v1809 = vpop.f32.mrf.mxu0
      %v1810 = vadd.f32 0.0, %v1809
      %1811 = vmatmul.bf16.gmra.mxu0 %v1662
      %v1812 = vpop.f32.mrf.mxu0
      %v1813 = vadd.f32 0.0, %v1812
      %v1814 = vpop.f32.mrf.mxu0
      %v1815 = vadd.f32 0.0, %v1814
      %1816 = vmatmul.bf16.gmra.mxu0 %v1663
      %v1817 = vpop.f32.mrf.mxu0
      %v1818 = vadd.f32 0.0, %v1817
      %v1819 = vpop.f32.mrf.mxu0
      %v1820 = vadd.f32 0.0, %v1819
      %1821 = vmatmul.bf16.gmra.mxu0 %v1664
      %v1822 = vpop.f32.mrf.mxu0
      %v1823 = vadd.f32 0.0, %v1822
      %v1824 = vpop.f32.mrf.mxu0
      %v1825 = vadd.f32 0.0, %v1824
      %1826 = vmatmul.bf16.gmra.mxu0 %v1665
      %v1827 = vpop.f32.mrf.mxu0
      %v1828 = vadd.f32 0.0, %v1827
      %v1829 = vpop.f32.mrf.mxu0
      %v1830 = vadd.f32 0.0, %v1829
      %1831 = vmatmul.bf16.gmra.mxu0 %v1666
      %v1832 = vpop.f32.mrf.mxu0
      %v1833 = vadd.f32 0.0, %v1832
      %v1834 = vpop.f32.mrf.mxu0
      %v1835 = vadd.f32 0.0, %v1834
      %1836 = vmatmul.bf16.gmra.mxu0 %v1667
      %v1837 = vpop.f32.mrf.mxu0
      %v1838 = vadd.f32 0.0, %v1837
      %v1839 = vpop.f32.mrf.mxu0
      %v1840 = vadd.f32 0.0, %v1839
      %1841 = vmatmul.bf16.gmra.mxu0 %v1668
      %v1842 = vpop.f32.mrf.mxu0
      %v1843 = vadd.f32 0.0, %v1842
      %v1844 = vpop.f32.mrf.mxu0
      %v1845 = vadd.f32 0.0, %v1844
      %1846 = vdwg.mxu0
      %v1847 = vpack.c.bf16 %v1761, %v1759
      %v1848 = vpack.c.bf16 %v1766, %v1764
      %v1849 = vpack.c.bf16 %v1771, %v1769
      %v1850 = vpack.c.bf16 %v1776, %v1774
      %v1851 = vpack.c.bf16 %v1781, %v1779
      %v1852 = vpack.c.bf16 %v1786, %v1784
      %v1853 = vpack.c.bf16 %v1791, %v1789
      %v1854 = vpack.c.bf16 %v1796, %v1794
      %1855 = vmatpush.bf16.msra.mxu0 %v1854
      %1856 = vmatpush.bf16.msra.mxu0 %v1853
      %1857 = vmatpush.bf16.msra.mxu0 %v1852
      %1858 = vmatpush.bf16.msra.mxu0 %v1851
      %1859 = vmatpush.bf16.msra.mxu0 %v1850
      %1860 = vmatpush.bf16.msra.mxu0 %v1849
      %1861 = vmatpush.bf16.msra.mxu0 %v1848
      %1862 = vmatpush.bf16.msra.mxu0 %v1847
      %1863 = vmatmul.bf16.gmra.mxu0 %v621
      %v1864 = vpop.f32.mrf.mxu0
      %v1865 = vadd.f32 %v1808, %v1864
      %v1866 = vpop.f32.mrf.mxu0
      %v1867 = vadd.f32 %v1810, %v1866
      %1868 = vmatmul.bf16.gmra.mxu0 %v622
      %v1869 = vpop.f32.mrf.mxu0
      %v1870 = vadd.f32 %v1813, %v1869
      %v1871 = vpop.f32.mrf.mxu0
      %v1872 = vadd.f32 %v1815, %v1871
      %1873 = vmatmul.bf16.gmra.mxu0 %v623
      %v1874 = vpop.f32.mrf.mxu0
      %v1875 = vadd.f32 %v1818, %v1874
      %v1876 = vpop.f32.mrf.mxu0
      %v1877 = vadd.f32 %v1820, %v1876
      %1878 = vmatmul.bf16.gmra.mxu0 %v624
      %v1879 = vpop.f32.mrf.mxu0
      %v1880 = vadd.f32 %v1823, %v1879
      %v1881 = vpop.f32.mrf.mxu0
      %v1882 = vadd.f32 %v1825, %v1881
      %1883 = vmatmul.bf16.gmra.mxu0 %v625
      %v1884 = vpop.f32.mrf.mxu0
      %v1885 = vadd.f32 %v1828, %v1884
      %v1886 = vpop.f32.mrf.mxu0
      %v1887 = vadd.f32 %v1830, %v1886
      %1888 = vmatmul.bf16.gmra.mxu0 %v626
      %v1889 = vpop.f32.mrf.mxu0
      %v1890 = vadd.f32 %v1833, %v1889
      %v1891 = vpop.f32.mrf.mxu0
      %v1892 = vadd.f32 %v1835, %v1891
      %1893 = vmatmul.bf16.gmra.mxu0 %v627
      %v1894 = vpop.f32.mrf.mxu0
      %v1895 = vadd.f32 %v1838, %v1894
      %v1896 = vpop.f32.mrf.mxu0
      %v1897 = vadd.f32 %v1840, %v1896
      %1898 = vmatmul.bf16.gmra.mxu0 %v628
      %v1899 = vpop.f32.mrf.mxu0
      %v1900 = vadd.f32 %v1843, %v1899
      %v1901 = vpop.f32.mrf.mxu0
      %v1902 = vadd.f32 %v1845, %v1901
      %1903 = vdwg.mxu0
      %v1905 = vperm.slane %v1660, 0
      %v1907 = vadd.f32 %v1865, %v1905
      %v1908 = vadd.f32 %v1867, %v1905
      %v1909 = vadd.f32 %v1870, %v1905
      %v1910 = vadd.f32 %v1872, %v1905
      %v1911 = vadd.f32 %v1875, %v1905
      %v1912 = vadd.f32 %v1877, %v1905
      %v1913 = vadd.f32 %v1880, %v1905
      %v1914 = vadd.f32 %v1882, %v1905
      %v1915 = vadd.f32 %v1885, %v1905
      %v1916 = vadd.f32 %v1887, %v1905
      %v1917 = vadd.f32 %v1890, %v1905
      %v1918 = vadd.f32 %v1892, %v1905
      %v1919 = vadd.f32 %v1895, %v1905
      %v1920 = vadd.f32 %v1897, %v1905
      %v1921 = vadd.f32 %v1900, %v1905
      %v1922 = vadd.f32 %v1902, %v1905
      %v1923 = vmax.f32 %v1907, 0.0
      %v1924 = vmax.f32 %v1908, 0.0
      %v1925 = vmax.f32 %v1909, 0.0
      %v1926 = vmax.f32 %v1910, 0.0
      %v1927 = vmax.f32 %v1911, 0.0
      %v1928 = vmax.f32 %v1912, 0.0
      %v1929 = vmax.f32 %v1913, 0.0
      %v1930 = vmax.f32 %v1914, 0.0
      %v1931 = vmax.f32 %v1915, 0.0
      %v1932 = vmax.f32 %v1916, 0.0
      %v1933 = vmax.f32 %v1917, 0.0
      %v1934 = vmax.f32 %v1918, 0.0
      %v1935 = vmax.f32 %v1919, 0.0
      %v1936 = vmax.f32 %v1920, 0.0
      %v1937 = vmax.f32 %v1921, 0.0
      %v1938 = vmax.f32 %v1922, 0.0
      %v1939 = vadd.f32 %v1329, %v1923
      %v1940 = vadd.f32 %v1330, %v1924
      %v1941 = vadd.f32 %v1331, %v1925
      %v1942 = vadd.f32 %v1332, %v1926
      %v1943 = vadd.f32 %v1333, %v1927
      %v1944 = vadd.f32 %v1334, %v1928
      %v1945 = vadd.f32 %v1335, %v1929
      %v1946 = vadd.f32 %v1336, %v1930
      %v1947 = vadd.f32 %v1337, %v1931
      %v1948 = vadd.f32 %v1338, %v1932
      %v1949 = vadd.f32 %v1339, %v1933
      %v1950 = vadd.f32 %v1340, %v1934
      %v1951 = vadd.f32 %v1341, %v1935
      %v1952 = vadd.f32 %v1342, %v1936
      %v1953 = vadd.f32 %v1343, %v1937
      %v1954 = vadd.f32 %v1344, %v1938
      %v1955 = vmul.f32 %v1939, 0.5
      %v1956 = vmul.f32 %v1940, 0.5
      %v1957 = vmul.f32 %v1941, 0.5
      %v1958 = vmul.f32 %v1942, 0.5
      %v1959 = vmul.f32 %v1943, 0.5
      %v1960 = vmul.f32 %v1944, 0.5
      %v1961 = vmul.f32 %v1945, 0.5
      %v1962 = vmul.f32 %v1946, 0.5
      %v1963 = vmul.f32 %v1947, 0.5
      %v1964 = vmul.f32 %v1948, 0.5
      %v1965 = vmul.f32 %v1949, 0.5
      %v1966 = vmul.f32 %v1950, 0.5
      %v1967 = vmul.f32 %v1951, 0.5
      %v1968 = vmul.f32 %v1952, 0.5
      %v1969 = vmul.f32 %v1953, 0.5
      %v1970 = vmul.f32 %v1954, 0.5
      %1971 = vst [vmem:[%s345] sm:$0xff] %v1955
      %1972 = vst [vmem:[%s345 + $0x8] sm:$0xff] %v1956
      %1973 = vst [vmem:[%s345 + $0x10] sm:$0xff] %v1957
      %1974 = vst [vmem:[%s345 + $0x18] sm:$0xff] %v1958
      %1975 = vst [vmem:[%s345 + $0x20] sm:$0xff] %v1959
      %1976 = vst [vmem:[%s345 + $0x28] sm:$0xff] %v1960
      %1977 = vst [vmem:[%s345 + $0x30] sm:$0xff] %v1961
      %1978 = vst [vmem:[%s345 + $0x38] sm:$0xff] %v1962
      %1979 = vst [vmem:[%s345 + $0x40] sm:$0xff] %v1963
      %1980 = vst [vmem:[%s345 + $0x48] sm:$0xff] %v1964
      %1981 = vst [vmem:[%s345 + $0x50] sm:$0xff] %v1965
      %1982 = vst [vmem:[%s345 + $0x58] sm:$0xff] %v1966
      %1983 = vst [vmem:[%s345 + $0x60] sm:$0xff] %v1967
      %1984 = vst [vmem:[%s345 + $0x68] sm:$0xff] %v1968
      %1985 = vst [vmem:[%s345 + $0x70] sm:$0xff] %v1969
      %1986 = vst [vmem:[%s345 + $0x78] sm:$0xff] %v1970
      %v1987 = vld [vmem:[%s6] sm:$0xff]
      %v1988 = vld [vmem:[%s6 + $0x8] sm:$0xff]
      %v1989 = vld [vmem:[%s6 + $0x10] sm:$0xff]
      %v1990 = vld [vmem:[%s6 + $0x18] sm:$0xff]
      %v1991 = vld [vmem:[%s6 + $0x20] sm:$0xff]
      %v1992 = vld [vmem:[%s6 + $0x28] sm:$0xff]
      %v1993 = vld [vmem:[%s6 + $0x30] sm:$0xff]
      %v1994 = vld [vmem:[%s6 + $0x38] sm:$0xff]
      %v1995 = vld [vmem:[%s6 + $0x40] sm:$0xff]
      %v1996 = vld [vmem:[%s6 + $0x48] sm:$0xff]
      %v1997 = vld [vmem:[%s6 + $0x50] sm:$0xff]
      %v1998 = vld [vmem:[%s6 + $0x58] sm:$0xff]
      %v1999 = vld [vmem:[%s6 + $0x60] sm:$0xff]
      %v2000 = vld [vmem:[%s6 + $0x68] sm:$0xff]
      %v2001 = vld [vmem:[%s6 + $0x70] sm:$0xff]
      %v2002 = vld [vmem:[%s6 + $0x78] sm:$0xff]
      %v2003 = vld [vmem:[%s7] sm:$0x1]
      %v2004 = vpack.c.bf16 %v1956, %v1955
      %v2005 = vpack.c.bf16 %v1958, %v1957
      %v2006 = vpack.c.bf16 %v1960, %v1959
      %v2007 = vpack.c.bf16 %v1962, %v1961
      %v2008 = vpack.c.bf16 %v1964, %v1963
      %v2009 = vpack.c.bf16 %v1966, %v1965
      %v2010 = vpack.c.bf16 %v1968, %v1967
      %v2011 = vpack.c.bf16 %v1970, %v1969
      %v2028 = vunpack.c.l.b16 %v1987
      %v2029 = vunpack.c.h.b16 %v1987
      %v2030 = vunpack.c.l.b16 %v1988
      %v2031 = vunpack.c.h.b16 %v1988
      %v2032 = vunpack.c.l.b16 %v1989
      %v2033 = vunpack.c.h.b16 %v1989
      %v2034 = vunpack.c.l.b16 %v1990
      %v2035 = vunpack.c.h.b16 %v1990
      %v2036 = vunpack.c.l.b16 %v1991
      %v2037 = vunpack.c.h.b16 %v1991
      %v2038 = vunpack.c.l.b16 %v1992
      %v2039 = vunpack.c.h.b16 %v1992
      %v2040 = vunpack.c.l.b16 %v1993
      %v2041 = vunpack.c.h.b16 %v1993
      %v2042 = vunpack.c.l.b16 %v1994
      %v2043 = vunpack.c.h.b16 %v1994
      %v2044 = vunpack.c.l.b16 %v1995
      %v2045 = vunpack.c.h.b16 %v1995
      %v2046 = vunpack.c.l.b16 %v1996
      %v2047 = vunpack.c.h.b16 %v1996
      %v2048 = vunpack.c.l.b16 %v1997
      %v2049 = vunpack.c.h.b16 %v1997
      %v2050 = vunpack.c.l.b16 %v1998
      %v2051 = vunpack.c.h.b16 %v1998
      %v2052 = vunpack.c.l.b16 %v1999
      %v2053 = vunpack.c.h.b16 %v1999
      %v2054 = vunpack.c.l.b16 %v2000
      %v2055 = vunpack.c.h.b16 %v2000
      %v2056 = vunpack.c.l.b16 %v2001
      %v2057 = vunpack.c.h.b16 %v2001
      %v2058 = vunpack.c.l.b16 %v2002
      %v2059 = vunpack.c.h.b16 %v2002
      %v2060 = vpack.c.b16 %v2030, %v2028
      %v2061 = vpack.c.b16 %v2031, %v2029
      %v2062 = vpack.c.b16 %v2034, %v2032
      %v2063 = vpack.c.b16 %v2035, %v2033
      %v2064 = vpack.c.b16 %v2038, %v2036
      %v2065 = vpack.c.b16 %v2039, %v2037
      %v2066 = vpack.c.b16 %v2042, %v2040
      %v2067 = vpack.c.b16 %v2043, %v2041
      %v2068 = vpack.c.b16 %v2046, %v2044
      %v2069 = vpack.c.b16 %v2047, %v2045
      %v2070 = vpack.c.b16 %v2050, %v2048
      %v2071 = vpack.c.b16 %v2051, %v2049
      %v2072 = vpack.c.b16 %v2054, %v2052
      %v2073 = vpack.c.b16 %v2055, %v2053
      %v2074 = vpack.c.b16 %v2058, %v2056
      %v2075 = vpack.c.b16 %v2059, %v2057
      %2092 = vmatpush.bf16.msra.mxu0 %v2074
      %2093 = vmatpush.bf16.msra.mxu0 %v2072
      %2094 = vmatpush.bf16.msra.mxu0 %v2070
      %2095 = vmatpush.bf16.msra.mxu0 %v2068
      %2096 = vmatpush.bf16.msra.mxu0 %v2066
      %2097 = vmatpush.bf16.msra.mxu0 %v2064
      %2098 = vmatpush.bf16.msra.mxu0 %v2062
      %2099 = vmatpush.bf16.msra.mxu0 %v2060
      %2100 = vmatmul.bf16.gmra.mxu0 %v2004
      %v2101 = vpop.f32.mrf.mxu0
      %v2102 = vadd.f32 0.0, %v2101
      %v2103 = vpop.f32.mrf.mxu0
      %v2104 = vadd.f32 0.0, %v2103
      %2105 = vmatmul.bf16.gmra.mxu0 %v2005
      %v2106 = vpop.f32.mrf.mxu0
      %v2107 = vadd.f32 0.0, %v2106
      %v2108 = vpop.f32.mrf.mxu0
      %v2109 = vadd.f32 0.0, %v2108
      %2110 = vmatmul.bf16.gmra.mxu0 %v2006
      %v2111 = vpop.f32.mrf.mxu0
      %v2112 = vadd.f32 0.0, %v2111
      %v2113 = vpop.f32.mrf.mxu0
      %v2114 = vadd.f32 0.0, %v2113
      %2115 = vmatmul.bf16.gmra.mxu0 %v2007
      %v2116 = vpop.f32.mrf.mxu0
      %v2117 = vadd.f32 0.0, %v2116
      %v2118 = vpop.f32.mrf.mxu0
      %v2119 = vadd.f32 0.0, %v2118
      %2120 = vmatmul.bf16.gmra.mxu0 %v2008
      %v2121 = vpop.f32.mrf.mxu0
      %v2122 = vadd.f32 0.0, %v2121
      %v2123 = vpop.f32.mrf.mxu0
      %v2124 = vadd.f32 0.0, %v2123
      %2125 = vmatmul.bf16.gmra.mxu0 %v2009
      %v2126 = vpop.f32.mrf.mxu0
      %v2127 = vadd.f32 0.0, %v2126
      %v2128 = vpop.f32.mrf.mxu0
      %v2129 = vadd.f32 0.0, %v2128
      %2130 = vmatmul.bf16.gmra.mxu0 %v2010
      %v2131 = vpop.f32.mrf.mxu0
      %v2132 = vadd.f32 0.0, %v2131
      %v2133 = vpop.f32.mrf.mxu0
      %v2134 = vadd.f32 0.0, %v2133
      %2135 = vmatmul.bf16.gmra.mxu0 %v2011
      %v2136 = vpop.f32.mrf.mxu0
      %v2137 = vadd.f32 0.0, %v2136
      %v2138 = vpop.f32.mrf.mxu0
      %v2139 = vadd.f32 0.0, %v2138
      %2140 = vdwg.mxu0
      %2141 = vmatpush.bf16.msra.mxu0 %v2075
      %2142 = vmatpush.bf16.msra.mxu0 %v2073
      %2143 = vmatpush.bf16.msra.mxu0 %v2071
      %2144 = vmatpush.bf16.msra.mxu0 %v2069
      %2145 = vmatpush.bf16.msra.mxu0 %v2067
      %2146 = vmatpush.bf16.msra.mxu0 %v2065
      %2147 = vmatpush.bf16.msra.mxu0 %v2063
      %2148 = vmatpush.bf16.msra.mxu0 %v2061
      %2149 = vmatmul.bf16.gmra.mxu0 %v2004
      %v2150 = vpop.f32.mrf.mxu0
      %v2151 = vadd.f32 0.0, %v2150
      %v2152 = vpop.f32.mrf.mxu0
      %v2153 = vadd.f32 0.0, %v2152
      %2154 = vmatmul.bf16.gmra.mxu0 %v2005
      %v2155 = vpop.f32.mrf.mxu0
      %v2156 = vadd.f32 0.0, %v2155
      %v2157 = vpop.f32.mrf.mxu0
      %v2158 = vadd.f32 0.0, %v2157
      %2159 = vmatmul.bf16.gmra.mxu0 %v2006
      %v2160 = vpop.f32.mrf.mxu0
      %v2161 = vadd.f32 0.0, %v2160
      %v2162 = vpop.f32.mrf.mxu0
      %v2163 = vadd.f32 0.0, %v2162
      %2164 = vmatmul.bf16.gmra.mxu0 %v2007
      %v2165 = vpop.f32.mrf.mxu0
      %v2166 = vadd.f32 0.0, %v2165
      %v2167 = vpop.f32.mrf.mxu0
      %v2168 = vadd.f32 0.0, %v2167
      %2169 = vmatmul.bf16.gmra.mxu0 %v2008
      %v2170 = vpop.f32.mrf.mxu0
      %v2171 = vadd.f32 0.0, %v2170
      %v2172 = vpop.f32.mrf.mxu0
      %v2173 = vadd.f32 0.0, %v2172
      %2174 = vmatmul.bf16.gmra.mxu0 %v2009
      %v2175 = vpop.f32.mrf.mxu0
      %v2176 = vadd.f32 0.0, %v2175
      %v2177 = vpop.f32.mrf.mxu0
      %v2178 = vadd.f32 0.0, %v2177
      %2179 = vmatmul.bf16.gmra.mxu0 %v2010
      %v2180 = vpop.f32.mrf.mxu0
      %v2181 = vadd.f32 0.0, %v2180
      %v2182 = vpop.f32.mrf.mxu0
      %v2183 = vadd.f32 0.0, %v2182
      %2184 = vmatmul.bf16.gmra.mxu0 %v2011
      %v2185 = vpop.f32.mrf.mxu0
      %v2186 = vadd.f32 0.0, %v2185
      %v2187 = vpop.f32.mrf.mxu0
      %v2188 = vadd.f32 0.0, %v2187
      %2189 = vdwg.mxu0
      %v2190 = vpack.c.bf16 %v2104, %v2102
      %v2191 = vpack.c.bf16 %v2109, %v2107
      %v2192 = vpack.c.bf16 %v2114, %v2112
      %v2193 = vpack.c.bf16 %v2119, %v2117
      %v2194 = vpack.c.bf16 %v2124, %v2122
      %v2195 = vpack.c.bf16 %v2129, %v2127
      %v2196 = vpack.c.bf16 %v2134, %v2132
      %v2197 = vpack.c.bf16 %v2139, %v2137
      %2198 = vmatpush.bf16.msra.mxu0 %v2197
      %2199 = vmatpush.bf16.msra.mxu0 %v2196
      %2200 = vmatpush.bf16.msra.mxu0 %v2195
      %2201 = vmatpush.bf16.msra.mxu0 %v2194
      %2202 = vmatpush.bf16.msra.mxu0 %v2193
      %2203 = vmatpush.bf16.msra.mxu0 %v2192
      %2204 = vmatpush.bf16.msra.mxu0 %v2191
      %2205 = vmatpush.bf16.msra.mxu0 %v2190
      %2206 = vmatmul.bf16.gmra.mxu0 %v621
      %v2207 = vpop.f32.mrf.mxu0
      %v2208 = vadd.f32 %v2151, %v2207
      %v2209 = vpop.f32.mrf.mxu0
      %v2210 = vadd.f32 %v2153, %v2209
      %2211 = vmatmul.bf16.gmra.mxu0 %v622
      %v2212 = vpop.f32.mrf.mxu0
      %v2213 = vadd.f32 %v2156, %v2212
      %v2214 = vpop.f32.mrf.mxu0
      %v2215 = vadd.f32 %v2158, %v2214
      %2216 = vmatmul.bf16.gmra.mxu0 %v623
      %v2217 = vpop.f32.mrf.mxu0
      %v2218 = vadd.f32 %v2161, %v2217
      %v2219 = vpop.f32.mrf.mxu0
      %v2220 = vadd.f32 %v2163, %v2219
      %2221 = vmatmul.bf16.gmra.mxu0 %v624
      %v2222 = vpop.f32.mrf.mxu0
      %v2223 = vadd.f32 %v2166, %v2222
      %v2224 = vpop.f32.mrf.mxu0
      %v2225 = vadd.f32 %v2168, %v2224
      %2226 = vmatmul.bf16.gmra.mxu0 %v625
      %v2227 = vpop.f32.mrf.mxu0
      %v2228 = vadd.f32 %v2171, %v2227
      %v2229 = vpop.f32.mrf.mxu0
      %v2230 = vadd.f32 %v2173, %v2229
      %2231 = vmatmul.bf16.gmra.mxu0 %v626
      %v2232 = vpop.f32.mrf.mxu0
      %v2233 = vadd.f32 %v2176, %v2232
      %v2234 = vpop.f32.mrf.mxu0
      %v2235 = vadd.f32 %v2178, %v2234
      %2236 = vmatmul.bf16.gmra.mxu0 %v627
      %v2237 = vpop.f32.mrf.mxu0
      %v2238 = vadd.f32 %v2181, %v2237
      %v2239 = vpop.f32.mrf.mxu0
      %v2240 = vadd.f32 %v2183, %v2239
      %2241 = vmatmul.bf16.gmra.mxu0 %v628
      %v2242 = vpop.f32.mrf.mxu0
      %v2243 = vadd.f32 %v2186, %v2242
      %v2244 = vpop.f32.mrf.mxu0
      %v2245 = vadd.f32 %v2188, %v2244
      %2246 = vdwg.mxu0
      %v2248 = vperm.slane %v2003, 0
      %v2250 = vadd.f32 %v2208, %v2248
      %v2251 = vadd.f32 %v2210, %v2248
      %v2252 = vadd.f32 %v2213, %v2248
      %v2253 = vadd.f32 %v2215, %v2248
      %v2254 = vadd.f32 %v2218, %v2248
      %v2255 = vadd.f32 %v2220, %v2248
      %v2256 = vadd.f32 %v2223, %v2248
      %v2257 = vadd.f32 %v2225, %v2248
      %v2258 = vadd.f32 %v2228, %v2248
      %v2259 = vadd.f32 %v2230, %v2248
      %v2260 = vadd.f32 %v2233, %v2248
      %v2261 = vadd.f32 %v2235, %v2248
      %v2262 = vadd.f32 %v2238, %v2248
      %v2263 = vadd.f32 %v2240, %v2248
      %v2264 = vadd.f32 %v2243, %v2248
      %v2265 = vadd.f32 %v2245, %v2248
      %2266 = vst [vmem:[%s340] sm:$0xff] %v2250
      %2267 = vst [vmem:[%s340 + $0x8] sm:$0xff] %v2251
      %2268 = vst [vmem:[%s340 + $0x10] sm:$0xff] %v2252
      %2269 = vst [vmem:[%s340 + $0x18] sm:$0xff] %v2253
      %2270 = vst [vmem:[%s340 + $0x20] sm:$0xff] %v2254
      %2271 = vst [vmem:[%s340 + $0x28] sm:$0xff] %v2255
      %2272 = vst [vmem:[%s340 + $0x30] sm:$0xff] %v2256
      %2273 = vst [vmem:[%s340 + $0x38] sm:$0xff] %v2257
      %2274 = vst [vmem:[%s340 + $0x40] sm:$0xff] %v2258
      %2275 = vst [vmem:[%s340 + $0x48] sm:$0xff] %v2259
      %2276 = vst [vmem:[%s340 + $0x50] sm:$0xff] %v2260
      %2277 = vst [vmem:[%s340 + $0x58] sm:$0xff] %v2261
      %2278 = vst [vmem:[%s340 + $0x60] sm:$0xff] %v2262
      %2279 = vst [vmem:[%s340 + $0x68] sm:$0xff] %v2263
      %2280 = vst [vmem:[%s340 + $0x70] sm:$0xff] %v2264
      %2281 = vst [vmem:[%s340 + $0x78] sm:$0xff] %v2265
      %p2282 = scmp.lt.s32.totalorder %s21, 1
      %s2283 = scalar_select %p2282, %s21, 1
      %s2284 = smul.addr %s2283, 16
      %s2285 = smul.addr %s2284, 8
      %s2286 = scalar_lea.vmem %s8, %s2285
      %p2287 = scmp.lt.s32.totalorder %s21, 1
      %s2288 = scalar_select %p2287, %s21, 1
      %s2289 = smul.addr %s2288, 16
      %s2290 = smul.addr %s2289, 8
      %s2291 = scalar_lea.vmem %s9, %s2290
      // Predicated region
      $region53: #{gbottleneck_forward.1} parent=51 // pred_check
        %p2292 = pneg %p212
      $region54: #{gbottleneck_forward.1} parent=51 // pred_check_branch
        %2294 = sbr.rel (%p2292) target = $region56
      $region55: #{gbottleneck_forward.1} parent=51 // pred_region
        _
      $region56: #{gbottleneck_forward.1} parent=51 // pred_fallthru
        _
      // Predicated region
      $region57: #{gbottleneck_forward.1} parent=51 // pred_check
        %p2295 = pneg %p238
      $region58: #{gbottleneck_forward.1} parent=51 // pred_check_branch
        %2297 = sbr.rel (%p2295) target = $region60
      $region59: #{gbottleneck_forward.1} parent=51 // pred_region
        _
      $region60: #{gbottleneck_forward.1} parent=51 // pred_fallthru
        _
    $region52: #{gbottleneck_forward.1} parent=5 // pred_fallthru
      _
    %p2298 = scmp.le.s32.totalorder 2, %s16
    // Predicated region
    $region61: #{gbottleneck_forward.1} parent=5 // pred_check
      %p2299 = pneg %p2298
    $region62: #{gbottleneck_forward.1} parent=5 // pred_check_branch
      %2301 = sbr.rel (%p2299) target = $region64
    $region63: #{gbottleneck_forward.1} parent=5 // pred_region
      %s2302 = ssub.s32 %s16, 2
      // Predicated region
      $region65: #{gbottleneck_forward.1} parent=63 // pred_check
        %p2303 = pneg %p218
      $region66: #{gbottleneck_forward.1} parent=63 // pred_check_branch
        %2305 = sbr.rel (%p2303) target = $region68
      $region67: #{gbottleneck_forward.1} parent=63 // pred_region
        %p2306 = scmp.lt.s32.totalorder %s22, 1
        %s2307 = scalar_select %p2306, %s22, 1
        %s2308 = smul.addr %s2307, 16
        %s2309 = smul.addr %s2308, 8
        %s2310 = scalar_lea.vmem %s8, %s2309
      $region68: #{gbottleneck_forward.1} parent=63 // pred_fallthru
        _
      // Predicated region
      $region69: #{gbottleneck_forward.1} parent=63 // pred_check
        %p2311 = pneg %p244
      $region70: #{gbottleneck_forward.1} parent=63 // pred_check_branch
        %2313 = sbr.rel (%p2311) target = $region72
      $region71: #{gbottleneck_forward.1} parent=63 // pred_region
        %p2314 = scmp.lt.s32.totalorder %s22, 1
        %s2315 = scalar_select %p2314, %s22, 1
        %s2316 = smul.addr %s2315, 16
        %s2317 = smul.addr %s2316, 8
        %s2318 = scalar_lea.vmem %s9, %s2317
      $region72: #{gbottleneck_forward.1} parent=63 // pred_fallthru
        _
    $region64: #{gbottleneck_forward.1} parent=5 // pred_fallthru
      _
  $region6: #{gbottleneck_forward.1} parent=0 // loop_footer
    %s20 = sadd.s32 1, %s16
  $region7: #{gbottleneck_forward.1} parent=0 // loop_footer_branch
    %15 = sbr.rel target = $region3
  $region8: #{gbottleneck_forward.1} parent=0 // loop_exit
    _

</llo_original>
